<compile_context>
chip_gen: v7x
topology: tpu7x:2x2x1
jax: 0.10.0
libtpu: 0.0.40
codegen_flags: <defaults>
</compile_context>

<pallas_src>
import math

import jax
import jax.numpy as jnp
from jax import lax
from jax.experimental import pallas as pl
from jax.experimental.pallas import tpu as pltpu

# ---- model hyper-parameters (module defaults) ----
D = 32            # model dim
H = 4             # attention heads
D_H = D // H      # per-head dim (=8)
L = 4             # number of layers
TOKENS = 48       # vocabulary size
T_PAD = 128       # lane-dense padded logits width (sliced back to TOKENS outside)
EPS = 1e-5        # nn.LayerNorm default eps

_SQRT_2_OVER_PI = 0.7978845608028654
_GELU_C = 0.044715
_INV_SQRT_DH = 1.0 / math.sqrt(D_H)


def _gelu_tanh(x):
    # tanh-form GELU: lands on the EUP slot instead of a long VALU erf poly.
    return 0.5 * x * (1.0 + jnp.tanh(_SQRT_2_OVER_PI * (x + _GELU_C * x * x * x)))


# ---------------------------------------------------------------------------
# fused Pallas kernel: all layers + logits, NB batch elements per grid step
# ---------------------------------------------------------------------------
def _make_kernel(nb, q):
    def kernel(x_ref, gamma_ref, beta_ref, wqk_ref, vo_ref,
               w1t_ref, w2t_ref, logit_ref, out_ref):
        # Gather the NB batch rows into one [R, D] activation slab (R = nb*q).
        if nb == 1:
            x = x_ref[0]
        else:
            x = jnp.concatenate([x_ref[b] for b in range(nb)], axis=0)

        for l in range(L):                                        # static, weights resident
            # --- LayerNorm(D), eps=1e-5, batched over all R rows ---
            mean = jnp.mean(x, axis=-1, keepdims=True)
            var = jnp.mean(jnp.square(x - mean), axis=-1, keepdims=True)
            xn = ((x - mean) * lax.rsqrt(var + EPS)
                  * gamma_ref[l:l + 1, :] + beta_ref[l:l + 1, :])

            # --- Multi-head attention (diag projections folded into masked
            #     per-head full-D vectors; heads batched into 2 MXU calls) ---
            attn_parts = []
            for b in range(nb):                                   # static loop
                xb = xn[b * q:(b + 1) * q, :]                     # [q, D] sublane-aligned
                # Xq_all[h*q+i, :] = xb[i, :] * (masked wq*wk for head h)
                xq_all = jnp.concatenate(
                    [xb * wqk_ref[l * H + h:l * H + h + 1, :] for h in range(H)],
                    axis=0)                                       # [H*q, D]
                # one contraction over the full D per layer (masked cols give 0);
                # single implicit transpose of xb instead of one per head.
                s = lax.dot_general(
                    xq_all, xb, (((1,), (1,)), ((), ())),
                    preferred_element_type=jnp.float32) * _INV_SQRT_DH   # [H*q, q]
                # TODO(synk): attention-mask path (self.mask) not implemented;
                #             Transformer default is mask=None.
                s = s - jnp.max(s, axis=-1, keepdims=True)
                e = jnp.exp(s)
                p = e * pl.reciprocal(jnp.sum(e, axis=-1, keepdims=True), approx=True)
                # Z_all[h*q+i, :] = P_h[i, :] @ xb  (one batched MXU call)
                z = jnp.dot(p, xb, preferred_element_type=jnp.float32)   # [H*q, D]
                # per-head (masked) wv*o scale, then sum heads — stays in vregs
                acc = None
                for h in range(H):
                    t = z[h * q:(h + 1) * q, :] * vo_ref[l * H + h:l * H + h + 1, :]
                    acc = t if acc is None else acc + t
                attn_parts.append(acc)
            attn = attn_parts[0] if nb == 1 else jnp.concatenate(attn_parts, axis=0)

            # --- Feed-forward: Linear(D,D) -> GELU(tanh) -> Linear(D,D), no bias,
            #     batched over all R rows ---
            hdn = _gelu_tanh(jnp.dot(xn, w1t_ref[l], preferred_element_type=jnp.float32))
            ffn = jnp.dot(hdn, w2t_ref[l], preferred_element_type=jnp.float32)

            x = x + attn + ffn                                    # pre-norm residual

        # --- logits: einsum('qd,dt->qt'), lane-dense (T padded to 128) ---
        logits = jnp.dot(x, logit_ref[...], preferred_element_type=jnp.float32)  # [R, T_PAD]
        for b in range(nb):
            out_ref[b] = logits[b * q:(b + 1) * q, :]
    return kernel


# ---------------------------------------------------------------------------
# wrapper
# ---------------------------------------------------------------------------
def _tensorcores_per_chip():
    try:
        kind = jax.devices()[0].device_kind.lower()
    except Exception:
        return 1
    # dual-TensorCore chips (v7x); single-TC v5e/v6e default to 1
    return 2 if ("v7" in kind or "tpu7" in kind) else 1


def transformer_forward(ids, params):
    """ids: int32 [B, Q] token indices -> logits float32 [B, Q, TOKENS]."""
    B, Q = ids.shape
    # glue: embedding + positional-embedding gathers stay in plain JAX
    x = params["embed"][ids] + params["pos"][:Q]

    # Per-generation grid: collapse the batch into one grid step on single-TC
    # chips (v5e/v6e); keep a batch-parallel grid on dual-TC v7x.
    tc = _tensorcores_per_chip()
    G = tc if (tc > 1 and B % tc == 0) else 1
    NB = B // G

    full2 = lambda g: (0, 0)
    full3 = lambda g: (0, 0, 0)
    out_pad = pl.pallas_call(
        _make_kernel(NB, Q),
        out_shape=jax.ShapeDtypeStruct((B, Q, T_PAD), jnp.float32),
        grid=(G,),
        in_specs=[
            pl.BlockSpec((NB, Q, D), lambda g: (g, 0, 0)),   # x (per-group tile)
            pl.BlockSpec((L, D), full2),                     # gamma  [L, D]
            pl.BlockSpec((L, D), full2),                     # beta   [L, D]
            pl.BlockSpec((L * H, D), full2),                 # masked diag(WQ)*diag(WK) per (l,h)
            pl.BlockSpec((L * H, D), full2),                 # masked diag(WV)*diag(O)  per (l,h)
            pl.BlockSpec((L, D, D), full3),                  # W1^T stacked
            pl.BlockSpec((L, D, D), full3),                  # W2^T stacked
            pl.BlockSpec((D, T_PAD), full2),                 # logit weights (padded)
        ],
        out_specs=pl.BlockSpec((NB, Q, T_PAD), lambda g: (g, 0, 0)),
        compiler_params=pltpu.CompilerParams(dimension_semantics=("parallel",)),
    )(x, params["gamma"], params["beta"], params["wqk_head"], params["vo_head"],
      params["w1t"], params["w2t"], params["logit_w_pad"])
    # NOTE: consumers that accept a 128-wide padded vocab axis can take
    # out_pad directly and skip this XLA slice.
    return out_pad[..., :TOKENS]


# ---------------------------------------------------------------------------
# deterministic parameter init (shapes from the module __init__)
# ---------------------------------------------------------------------------
def init_params(key):
    ks = list(jax.random.split(key, 3 + 6 * L))
    nxt = iter(ks).__next__
    embed = jax.random.normal(nxt(), (TOKENS, D), jnp.float32)          # nn.Embedding(tokens, D)
    pos = jax.random.normal(nxt(), (1000, D), jnp.float32)              # nn.Embedding(1000, D)
    logit_w = jax.random.normal(nxt(), (D, TOKENS), jnp.float32) * math.sqrt(2.0 / D)

    gamma, beta, wqk_rows, vo_rows, w1t, w2t, raw_layers = [], [], [], [], [], [], []
    for _ in range(L):
        WQ = jax.random.normal(nxt(), (H, D_H, D_H), jnp.float32) * math.sqrt(2.0 / D_H)
        WK = jax.random.normal(nxt(), (H, D_H, D_H), jnp.float32) * math.sqrt(2.0 / D_H)
        WV = jax.random.normal(nxt(), (H, D_H, D_H), jnp.float32) * math.sqrt(2.0 / D_H)
        O = jax.random.normal(nxt(), (D, D), jnp.float32) * math.sqrt(2.0 / D)
        W1 = jax.random.normal(nxt(), (D, D), jnp.float32) * math.sqrt(1.0 / D)
        W2 = jax.random.normal(nxt(), (D, D), jnp.float32) * math.sqrt(1.0 / D)
        # torch einsum 'hdd'/'hff'/'ff' -> only the diagonals are used:
        wq_d = jnp.einsum('hdd->hd', WQ)            # [H, D_H]
        wk_d = jnp.einsum('hdd->hd', WK)
        wv_d = jnp.einsum('hdd->hd', WV)
        o_d = jnp.diag(O)                           # [D]
        gamma.append(jnp.ones((D,), jnp.float32))   # nn.LayerNorm default weight
        beta.append(jnp.zeros((D,), jnp.float32))   # nn.LayerNorm default bias
        # per-head MASKED full-D vectors (zeros outside the head's 8 columns)
        for h in range(H):
            sl = slice(h * D_H, (h + 1) * D_H)
            qk_row = jnp.zeros((D,), jnp.float32).at[sl].set(wq_d[h] * wk_d[h])
            vo_row = jnp.zeros((D,), jnp.float32).at[sl].set(wv_d[h] * o_d[sl])
            wqk_rows.append(qk_row)
            vo_rows.append(vo_row)
        w1t.append(W1.T)                            # pre-transposed once
        w2t.append(W2.T)
        raw_layers.append(dict(wq_d=wq_d, wk_d=wk_d, wv_d=wv_d, o_d=o_d, w1=W1, w2=W2))

    logit_w_pad = jnp.zeros((D, T_PAD), jnp.float32).at[:, :TOKENS].set(logit_w)
    return dict(
        embed=embed, pos=pos, logit_w=logit_w, logit_w_pad=logit_w_pad,
        gamma=jnp.stack(gamma), beta=jnp.stack(beta),
        wqk_head=jnp.stack(wqk_rows),               # [L*H, D]
        vo_head=jnp.stack(vo_rows),                 # [L*H, D]
        w1t=jnp.stack(w1t), w2t=jnp.stack(w2t),
        layers=raw_layers)


# ---------------------------------------------------------------------------
# pure-JAX reference (mirrors the PyTorch forward semantics exactly,
# including the exact erf-based nn.GELU())
# ---------------------------------------------------------------------------
def _gelu_exact(x):
    return 0.5 * x * (1.0 + lax.erf(x / math.sqrt(2.0)))


def _reference(ids, p):
    B, Q = ids.shape
    X = p["embed"][ids] + p["pos"][:Q]
    for i, lyr in enumerate(p["layers"]):
        mean = X.mean(-1, keepdims=True)
        var = ((X - mean) ** 2).mean(-1, keepdims=True)
        Xn = (X - mean) / jnp.sqrt(var + EPS) * p["gamma"][i] + p["beta"][i]
        Xh = Xn.reshape(B, Q, H, D_H)
        s = jnp.einsum('bqhd,hd,bkhd,hd->bhqk', Xh, lyr["wq_d"], Xh, lyr["wk_d"]) / math.sqrt(D_H)
        P = jax.nn.softmax(s, axis=3)
        Y = jnp.einsum('bhqk,bkhf,hf->bqhf', P, Xh, lyr["wv_d"])
        Y = Y.reshape(B, Q, D) * lyr["o_d"]
        ffn = _gelu_exact(Xn @ lyr["w1"].T) @ lyr["w2"].T
        X = X + Y + ffn
    return jnp.einsum('bqd,dt->bqt', X, p["logit_w"])


# ---------------------------------------------------------------------------
if __name__ == "__main__":
    key = jax.random.PRNGKey(0)
    kp, kx = jax.random.split(key)
    params = init_params(kp)

    B, Q = 2, 8
    ids = jax.random.randint(kx, (B, Q), 0, TOKENS, dtype=jnp.int32)

    out = transformer_forward(ids, params)
    out = jax.block_until_ready(out)

    assert out.shape == (B, Q, TOKENS), out.shape
    ref = _reference(ids, params)
    # Tolerance covers the two intentional approximations vs the exact PyTorch
    # math: tanh-form GELU (<=~4e-4 per activation vs exact erf GELU) and the
    # EUP approx-reciprocal softmax denominator; everything else is exact f32.
    if not jnp.allclose(out, ref, rtol=5e-3, atol=5e-3):
        raise AssertionError(
            f"mismatch vs reference, max abs diff = {float(jnp.max(jnp.abs(out - ref)))}")
    print("KERNEL_OK")
</pallas_src>

<mosaic_0001>
module attributes {stable_mosaic.version = 11 : i64} {
  func.func @kernel(%arg0: i32, %arg1: memref<2x8x32xf32, #tpu.memory_space<vmem>>, %arg2: memref<4x32xf32, #tpu.memory_space<vmem>>, %arg3: memref<4x32xf32, #tpu.memory_space<vmem>>, %arg4: memref<16x32xf32, #tpu.memory_space<vmem>>, %arg5: memref<16x32xf32, #tpu.memory_space<vmem>>, %arg6: memref<4x32x32xf32, #tpu.memory_space<vmem>>, %arg7: memref<4x32x32xf32, #tpu.memory_space<vmem>>, %arg8: memref<32x128xf32, #tpu.memory_space<vmem>>, %arg9: memref<2x8x128xf32, #tpu.memory_space<vmem>>) attributes {dimension_semantics = [#tpu.dimension_semantics<parallel>], iteration_bounds = array<i64: 1>, scalar_prefetch = 0 : i64, scratch_operands = 0 : i64, tpu.core_type = #tpu.core_type<tc>, window_params = [{transform_indices = @transform_0, window_bounds = array<i64: 2, 8, 32>}, {pipeline_mode = #tpu.pipeline_mode<synchronous>, transform_indices = @transform_1, window_bounds = array<i64: 4, 32>}, {pipeline_mode = #tpu.pipeline_mode<synchronous>, transform_indices = @transform_2, window_bounds = array<i64: 4, 32>}, {pipeline_mode = #tpu.pipeline_mode<synchronous>, transform_indices = @transform_3, window_bounds = array<i64: 16, 32>}, {pipeline_mode = #tpu.pipeline_mode<synchronous>, transform_indices = @transform_4, window_bounds = array<i64: 16, 32>}, {pipeline_mode = #tpu.pipeline_mode<synchronous>, transform_indices = @transform_5, window_bounds = array<i64: 4, 32, 32>}, {pipeline_mode = #tpu.pipeline_mode<synchronous>, transform_indices = @transform_6, window_bounds = array<i64: 4, 32, 32>}, {pipeline_mode = #tpu.pipeline_mode<synchronous>, transform_indices = @transform_7, window_bounds = array<i64: 32, 128>}, {transform_indices = @transform_8, window_bounds = array<i64: 2, 8, 128>}]} {
    %c0 = arith.constant 0 : index
    %c0_0 = arith.constant 0 : index
    %c0_1 = arith.constant 0 : index
    %0 = vector.load %arg1[%c0, %c0_0, %c0_1] : memref<2x8x32xf32, #tpu.memory_space<vmem>>, vector<1x8x32xf32>
    %1 = vector.shape_cast %0 : vector<1x8x32xf32> to vector<8x32xf32>
    %c1 = arith.constant 1 : index
    %c0_2 = arith.constant 0 : index
    %c0_3 = arith.constant 0 : index
    %2 = vector.load %arg1[%c1, %c0_2, %c0_3] : memref<2x8x32xf32, #tpu.memory_space<vmem>>, vector<1x8x32xf32>
    %3 = vector.shape_cast %2 : vector<1x8x32xf32> to vector<8x32xf32>
    %4 = tpu.concatenate %1, %3 in 0 : vector<8x32xf32>, vector<8x32xf32> -> vector<16x32xf32>
    %cst = arith.constant dense<0.000000e+00> : vector<16xf32>
    %5 = vector.multi_reduction <add>, %4, %cst [1] : vector<16x32xf32> to vector<16xf32>
    %6 = vector.shape_cast %5 : vector<16xf32> to vector<16x1xf32>
    %cst_4 = arith.constant 3.200000e+01 : f32
    %7 = vector.broadcast %cst_4 : f32 to vector<16x1xf32>
    %8 = arith.divf %6, %7 : vector<16x1xf32>
    %9 = vector.broadcast %8 : vector<16x1xf32> to vector<16x32xf32>
    %10 = arith.subf %4, %9 : vector<16x32xf32>
    %11 = arith.mulf %10, %10 : vector<16x32xf32>
    %cst_5 = arith.constant dense<0.000000e+00> : vector<16xf32>
    %12 = vector.multi_reduction <add>, %11, %cst_5 [1] : vector<16x32xf32> to vector<16xf32>
    %13 = vector.shape_cast %12 : vector<16xf32> to vector<16x1xf32>
    %cst_6 = arith.constant 3.200000e+01 : f32
    %14 = vector.broadcast %cst_6 : f32 to vector<16x1xf32>
    %15 = arith.divf %13, %14 : vector<16x1xf32>
    %16 = vector.broadcast %8 : vector<16x1xf32> to vector<16x32xf32>
    %17 = arith.subf %4, %16 : vector<16x32xf32>
    %cst_7 = arith.constant 9.99999974E-6 : f32
    %18 = vector.broadcast %cst_7 : f32 to vector<16x1xf32>
    %19 = arith.addf %15, %18 : vector<16x1xf32>
    %20 = math.rsqrt %19 : vector<16x1xf32>
    %21 = vector.broadcast %20 : vector<16x1xf32> to vector<16x32xf32>
    %22 = arith.mulf %17, %21 : vector<16x32xf32>
    %c0_8 = arith.constant 0 : index
    %c0_9 = arith.constant 0 : index
    %23 = vector.load %arg2[%c0_8, %c0_9] : memref<4x32xf32, #tpu.memory_space<vmem>>, vector<1x32xf32>
    %24 = vector.broadcast %23 : vector<1x32xf32> to vector<16x32xf32>
    %25 = arith.mulf %22, %24 : vector<16x32xf32>
    %c0_10 = arith.constant 0 : index
    %c0_11 = arith.constant 0 : index
    %26 = vector.load %arg3[%c0_10, %c0_11] : memref<4x32xf32, #tpu.memory_space<vmem>>, vector<1x32xf32>
    %27 = vector.broadcast %26 : vector<1x32xf32> to vector<16x32xf32>
    %28 = arith.addf %25, %27 : vector<16x32xf32>
    %29 = vector.extract_strided_slice %28 {offsets = [0, 0], sizes = [8, 32], strides = [1, 1]} : vector<16x32xf32> to vector<8x32xf32>
    %c0_12 = arith.constant 0 : index
    %c0_13 = arith.constant 0 : index
    %30 = vector.load %arg4[%c0_12, %c0_13] : memref<16x32xf32, #tpu.memory_space<vmem>>, vector<1x32xf32>
    %31 = vector.broadcast %30 : vector<1x32xf32> to vector<8x32xf32>
    %32 = arith.mulf %29, %31 : vector<8x32xf32>
    %c1_14 = arith.constant 1 : index
    %c0_15 = arith.constant 0 : index
    %33 = vector.load %arg4[%c1_14, %c0_15] : memref<16x32xf32, #tpu.memory_space<vmem>>, vector<1x32xf32>
    %34 = vector.broadcast %33 : vector<1x32xf32> to vector<8x32xf32>
    %35 = arith.mulf %29, %34 : vector<8x32xf32>
    %c2 = arith.constant 2 : index
    %c0_16 = arith.constant 0 : index
    %36 = vector.load %arg4[%c2, %c0_16] : memref<16x32xf32, #tpu.memory_space<vmem>>, vector<1x32xf32>
    %37 = vector.broadcast %36 : vector<1x32xf32> to vector<8x32xf32>
    %38 = arith.mulf %29, %37 : vector<8x32xf32>
    %c3 = arith.constant 3 : index
    %c0_17 = arith.constant 0 : index
    %39 = vector.load %arg4[%c3, %c0_17] : memref<16x32xf32, #tpu.memory_space<vmem>>, vector<1x32xf32>
    %40 = vector.broadcast %39 : vector<1x32xf32> to vector<8x32xf32>
    %41 = arith.mulf %29, %40 : vector<8x32xf32>
    %42 = tpu.concatenate %32, %35, %38, %41 in 0 : vector<8x32xf32>, vector<8x32xf32>, vector<8x32xf32>, vector<8x32xf32> -> vector<32x32xf32>
    %cst_18 = arith.constant dense<0.000000e+00> : vector<32x8xf32>
    %43 = tpu.matmul %42, %29, %cst_18 {dimension_numbers = #tpu.dot_dimension_numbers<[1], [1], [0], [0], [0, 0, 1, 0], [], []>} : vector<32x32xf32>, vector<8x32xf32>, vector<32x8xf32> -> vector<32x8xf32>
    %cst_19 = arith.constant 0.353553385 : f32
    %44 = vector.broadcast %cst_19 : f32 to vector<32x8xf32>
    %45 = arith.mulf %43, %44 : vector<32x8xf32>
    %cst_20 = arith.constant dense<0xFF800000> : vector<32xf32>
    %46 = vector.multi_reduction <maximumf>, %45, %cst_20 [1] : vector<32x8xf32> to vector<32xf32>
    %47 = vector.shape_cast %46 : vector<32xf32> to vector<32x1xf32>
    %48 = vector.broadcast %47 : vector<32x1xf32> to vector<32x8xf32>
    %49 = arith.subf %45, %48 : vector<32x8xf32>
    %50 = math.exp %49 : vector<32x8xf32>
    %cst_21 = arith.constant dense<0.000000e+00> : vector<32xf32>
    %51 = vector.multi_reduction <add>, %50, %cst_21 [1] : vector<32x8xf32> to vector<32xf32>
    %52 = vector.shape_cast %51 : vector<32xf32> to vector<32x1xf32>
    %53 = tpu.reciprocal %52 {approx = true} : vector<32x1xf32> -> vector<32x1xf32>
    %54 = vector.broadcast %53 : vector<32x1xf32> to vector<32x8xf32>
    %55 = arith.mulf %50, %54 : vector<32x8xf32>
    %cst_22 = arith.constant dense<0.000000e+00> : vector<32x32xf32>
    %56 = tpu.matmul %55, %29, %cst_22 {dimension_numbers = #tpu.dot_dimension_numbers<[1], [0], [0], [1], [0, 0, 1, 1], [], []>} : vector<32x8xf32>, vector<8x32xf32>, vector<32x32xf32> -> vector<32x32xf32>
    %57 = vector.extract_strided_slice %56 {offsets = [0, 0], sizes = [8, 32], strides = [1, 1]} : vector<32x32xf32> to vector<8x32xf32>
    %c0_23 = arith.constant 0 : index
    %c0_24 = arith.constant 0 : index
    %58 = vector.load %arg5[%c0_23, %c0_24] : memref<16x32xf32, #tpu.memory_space<vmem>>, vector<1x32xf32>
    %59 = vector.broadcast %58 : vector<1x32xf32> to vector<8x32xf32>
    %60 = arith.mulf %57, %59 : vector<8x32xf32>
    %61 = vector.extract_strided_slice %56 {offsets = [8, 0], sizes = [8, 32], strides = [1, 1]} : vector<32x32xf32> to vector<8x32xf32>
    %c1_25 = arith.constant 1 : index
    %c0_26 = arith.constant 0 : index
    %62 = vector.load %arg5[%c1_25, %c0_26] : memref<16x32xf32, #tpu.memory_space<vmem>>, vector<1x32xf32>
    %63 = vector.broadcast %62 : vector<1x32xf32> to vector<8x32xf32>
    %64 = arith.mulf %61, %63 : vector<8x32xf32>
    %65 = arith.addf %60, %64 : vector<8x32xf32>
    %66 = vector.extract_strided_slice %56 {offsets = [16, 0], sizes = [8, 32], strides = [1, 1]} : vector<32x32xf32> to vector<8x32xf32>
    %c2_27 = arith.constant 2 : index
    %c0_28 = arith.constant 0 : index
    %67 = vector.load %arg5[%c2_27, %c0_28] : memref<16x32xf32, #tpu.memory_space<vmem>>, vector<1x32xf32>
    %68 = vector.broadcast %67 : vector<1x32xf32> to vector<8x32xf32>
    %69 = arith.mulf %66, %68 : vector<8x32xf32>
    %70 = arith.addf %65, %69 : vector<8x32xf32>
    %71 = vector.extract_strided_slice %56 {offsets = [24, 0], sizes = [8, 32], strides = [1, 1]} : vector<32x32xf32> to vector<8x32xf32>
    %c3_29 = arith.constant 3 : index
    %c0_30 = arith.constant 0 : index
    %72 = vector.load %arg5[%c3_29, %c0_30] : memref<16x32xf32, #tpu.memory_space<vmem>>, vector<1x32xf32>
    %73 = vector.broadcast %72 : vector<1x32xf32> to vector<8x32xf32>
    %74 = arith.mulf %71, %73 : vector<8x32xf32>
    %75 = arith.addf %70, %74 : vector<8x32xf32>
    %76 = vector.extract_strided_slice %28 {offsets = [8, 0], sizes = [8, 32], strides = [1, 1]} : vector<16x32xf32> to vector<8x32xf32>
    %c0_31 = arith.constant 0 : index
    %c0_32 = arith.constant 0 : index
    %77 = vector.load %arg4[%c0_31, %c0_32] : memref<16x32xf32, #tpu.memory_space<vmem>>, vector<1x32xf32>
    %78 = vector.broadcast %77 : vector<1x32xf32> to vector<8x32xf32>
    %79 = arith.mulf %76, %78 : vector<8x32xf32>
    %c1_33 = arith.constant 1 : index
    %c0_34 = arith.constant 0 : index
    %80 = vector.load %arg4[%c1_33, %c0_34] : memref<16x32xf32, #tpu.memory_space<vmem>>, vector<1x32xf32>
    %81 = vector.broadcast %80 : vector<1x32xf32> to vector<8x32xf32>
    %82 = arith.mulf %76, %81 : vector<8x32xf32>
    %c2_35 = arith.constant 2 : index
    %c0_36 = arith.constant 0 : index
    %83 = vector.load %arg4[%c2_35, %c0_36] : memref<16x32xf32, #tpu.memory_space<vmem>>, vector<1x32xf32>
    %84 = vector.broadcast %83 : vector<1x32xf32> to vector<8x32xf32>
    %85 = arith.mulf %76, %84 : vector<8x32xf32>
    %c3_37 = arith.constant 3 : index
    %c0_38 = arith.constant 0 : index
    %86 = vector.load %arg4[%c3_37, %c0_38] : memref<16x32xf32, #tpu.memory_space<vmem>>, vector<1x32xf32>
    %87 = vector.broadcast %86 : vector<1x32xf32> to vector<8x32xf32>
    %88 = arith.mulf %76, %87 : vector<8x32xf32>
    %89 = tpu.concatenate %79, %82, %85, %88 in 0 : vector<8x32xf32>, vector<8x32xf32>, vector<8x32xf32>, vector<8x32xf32> -> vector<32x32xf32>
    %cst_39 = arith.constant dense<0.000000e+00> : vector<32x8xf32>
    %90 = tpu.matmul %89, %76, %cst_39 {dimension_numbers = #tpu.dot_dimension_numbers<[1], [1], [0], [0], [0, 0, 1, 0], [], []>} : vector<32x32xf32>, vector<8x32xf32>, vector<32x8xf32> -> vector<32x8xf32>
    %cst_40 = arith.constant 0.353553385 : f32
    %91 = vector.broadcast %cst_40 : f32 to vector<32x8xf32>
    %92 = arith.mulf %90, %91 : vector<32x8xf32>
    %cst_41 = arith.constant dense<0xFF800000> : vector<32xf32>
    %93 = vector.multi_reduction <maximumf>, %92, %cst_41 [1] : vector<32x8xf32> to vector<32xf32>
    %94 = vector.shape_cast %93 : vector<32xf32> to vector<32x1xf32>
    %95 = vector.broadcast %94 : vector<32x1xf32> to vector<32x8xf32>
    %96 = arith.subf %92, %95 : vector<32x8xf32>
    %97 = math.exp %96 : vector<32x8xf32>
    %cst_42 = arith.constant dense<0.000000e+00> : vector<32xf32>
    %98 = vector.multi_reduction <add>, %97, %cst_42 [1] : vector<32x8xf32> to vector<32xf32>
    %99 = vector.shape_cast %98 : vector<32xf32> to vector<32x1xf32>
    %100 = tpu.reciprocal %99 {approx = true} : vector<32x1xf32> -> vector<32x1xf32>
    %101 = vector.broadcast %100 : vector<32x1xf32> to vector<32x8xf32>
    %102 = arith.mulf %97, %101 : vector<32x8xf32>
    %cst_43 = arith.constant dense<0.000000e+00> : vector<32x32xf32>
    %103 = tpu.matmul %102, %76, %cst_43 {dimension_numbers = #tpu.dot_dimension_numbers<[1], [0], [0], [1], [0, 0, 1, 1], [], []>} : vector<32x8xf32>, vector<8x32xf32>, vector<32x32xf32> -> vector<32x32xf32>
    %104 = vector.extract_strided_slice %103 {offsets = [0, 0], sizes = [8, 32], strides = [1, 1]} : vector<32x32xf32> to vector<8x32xf32>
    %c0_44 = arith.constant 0 : index
    %c0_45 = arith.constant 0 : index
    %105 = vector.load %arg5[%c0_44, %c0_45] : memref<16x32xf32, #tpu.memory_space<vmem>>, vector<1x32xf32>
    %106 = vector.broadcast %105 : vector<1x32xf32> to vector<8x32xf32>
    %107 = arith.mulf %104, %106 : vector<8x32xf32>
    %108 = vector.extract_strided_slice %103 {offsets = [8, 0], sizes = [8, 32], strides = [1, 1]} : vector<32x32xf32> to vector<8x32xf32>
    %c1_46 = arith.constant 1 : index
    %c0_47 = arith.constant 0 : index
    %109 = vector.load %arg5[%c1_46, %c0_47] : memref<16x32xf32, #tpu.memory_space<vmem>>, vector<1x32xf32>
    %110 = vector.broadcast %109 : vector<1x32xf32> to vector<8x32xf32>
    %111 = arith.mulf %108, %110 : vector<8x32xf32>
    %112 = arith.addf %107, %111 : vector<8x32xf32>
    %113 = vector.extract_strided_slice %103 {offsets = [16, 0], sizes = [8, 32], strides = [1, 1]} : vector<32x32xf32> to vector<8x32xf32>
    %c2_48 = arith.constant 2 : index
    %c0_49 = arith.constant 0 : index
    %114 = vector.load %arg5[%c2_48, %c0_49] : memref<16x32xf32, #tpu.memory_space<vmem>>, vector<1x32xf32>
    %115 = vector.broadcast %114 : vector<1x32xf32> to vector<8x32xf32>
    %116 = arith.mulf %113, %115 : vector<8x32xf32>
    %117 = arith.addf %112, %116 : vector<8x32xf32>
    %118 = vector.extract_strided_slice %103 {offsets = [24, 0], sizes = [8, 32], strides = [1, 1]} : vector<32x32xf32> to vector<8x32xf32>
    %c3_50 = arith.constant 3 : index
    %c0_51 = arith.constant 0 : index
    %119 = vector.load %arg5[%c3_50, %c0_51] : memref<16x32xf32, #tpu.memory_space<vmem>>, vector<1x32xf32>
    %120 = vector.broadcast %119 : vector<1x32xf32> to vector<8x32xf32>
    %121 = arith.mulf %118, %120 : vector<8x32xf32>
    %122 = arith.addf %117, %121 : vector<8x32xf32>
    %123 = tpu.concatenate %75, %122 in 0 : vector<8x32xf32>, vector<8x32xf32> -> vector<16x32xf32>
    %c0_52 = arith.constant 0 : index
    %c0_53 = arith.constant 0 : index
    %c0_54 = arith.constant 0 : index
    %124 = vector.load %arg6[%c0_52, %c0_53, %c0_54] : memref<4x32x32xf32, #tpu.memory_space<vmem>>, vector<1x32x32xf32>
    %125 = vector.shape_cast %124 : vector<1x32x32xf32> to vector<32x32xf32>
    %cst_55 = arith.constant dense<0.000000e+00> : vector<16x32xf32>
    %126 = tpu.matmul %28, %125, %cst_55 {dimension_numbers = #tpu.dot_dimension_numbers<[1], [0], [0], [1], [0, 0, 1, 1], [], []>} : vector<16x32xf32>, vector<32x32xf32>, vector<16x32xf32> -> vector<16x32xf32>
    %cst_56 = arith.constant 5.000000e-01 : f32
    %127 = vector.broadcast %cst_56 : f32 to vector<16x32xf32>
    %128 = arith.mulf %127, %126 : vector<16x32xf32>
    %cst_57 = arith.constant 4.471500e-02 : f32
    %129 = vector.broadcast %cst_57 : f32 to vector<16x32xf32>
    %130 = arith.mulf %129, %126 : vector<16x32xf32>
    %131 = arith.mulf %130, %126 : vector<16x32xf32>
    %132 = arith.mulf %131, %126 : vector<16x32xf32>
    %133 = arith.addf %126, %132 : vector<16x32xf32>
    %cst_58 = arith.constant 0.797884583 : f32
    %134 = vector.broadcast %cst_58 : f32 to vector<16x32xf32>
    %135 = arith.mulf %134, %133 : vector<16x32xf32>
    %136 = math.tanh %135 : vector<16x32xf32>
    %cst_59 = arith.constant 1.000000e+00 : f32
    %137 = vector.broadcast %cst_59 : f32 to vector<16x32xf32>
    %138 = arith.addf %137, %136 : vector<16x32xf32>
    %139 = arith.mulf %128, %138 : vector<16x32xf32>
    %c0_60 = arith.constant 0 : index
    %c0_61 = arith.constant 0 : index
    %c0_62 = arith.constant 0 : index
    %140 = vector.load %arg7[%c0_60, %c0_61, %c0_62] : memref<4x32x32xf32, #tpu.memory_space<vmem>>, vector<1x32x32xf32>
    %141 = vector.shape_cast %140 : vector<1x32x32xf32> to vector<32x32xf32>
    %cst_63 = arith.constant dense<0.000000e+00> : vector<16x32xf32>
    %142 = tpu.matmul %139, %141, %cst_63 {dimension_numbers = #tpu.dot_dimension_numbers<[1], [0], [0], [1], [0, 0, 1, 1], [], []>} : vector<16x32xf32>, vector<32x32xf32>, vector<16x32xf32> -> vector<16x32xf32>
    %143 = arith.addf %4, %123 : vector<16x32xf32>
    %144 = arith.addf %143, %142 : vector<16x32xf32>
    %cst_64 = arith.constant dense<0.000000e+00> : vector<16xf32>
    %145 = vector.multi_reduction <add>, %144, %cst_64 [1] : vector<16x32xf32> to vector<16xf32>
    %146 = vector.shape_cast %145 : vector<16xf32> to vector<16x1xf32>
    %cst_65 = arith.constant 3.200000e+01 : f32
    %147 = vector.broadcast %cst_65 : f32 to vector<16x1xf32>
    %148 = arith.divf %146, %147 : vector<16x1xf32>
    %149 = vector.broadcast %148 : vector<16x1xf32> to vector<16x32xf32>
    %150 = arith.subf %144, %149 : vector<16x32xf32>
    %151 = arith.mulf %150, %150 : vector<16x32xf32>
    %cst_66 = arith.constant dense<0.000000e+00> : vector<16xf32>
    %152 = vector.multi_reduction <add>, %151, %cst_66 [1] : vector<16x32xf32> to vector<16xf32>
    %153 = vector.shape_cast %152 : vector<16xf32> to vector<16x1xf32>
    %cst_67 = arith.constant 3.200000e+01 : f32
    %154 = vector.broadcast %cst_67 : f32 to vector<16x1xf32>
    %155 = arith.divf %153, %154 : vector<16x1xf32>
    %156 = vector.broadcast %148 : vector<16x1xf32> to vector<16x32xf32>
    %157 = arith.subf %144, %156 : vector<16x32xf32>
    %cst_68 = arith.constant 9.99999974E-6 : f32
    %158 = vector.broadcast %cst_68 : f32 to vector<16x1xf32>
    %159 = arith.addf %155, %158 : vector<16x1xf32>
    %160 = math.rsqrt %159 : vector<16x1xf32>
    %161 = vector.broadcast %160 : vector<16x1xf32> to vector<16x32xf32>
    %162 = arith.mulf %157, %161 : vector<16x32xf32>
    %c1_69 = arith.constant 1 : index
    %c0_70 = arith.constant 0 : index
    %163 = vector.load %arg2[%c1_69, %c0_70] : memref<4x32xf32, #tpu.memory_space<vmem>>, vector<1x32xf32>
    %164 = vector.broadcast %163 : vector<1x32xf32> to vector<16x32xf32>
    %165 = arith.mulf %162, %164 : vector<16x32xf32>
    %c1_71 = arith.constant 1 : index
    %c0_72 = arith.constant 0 : index
    %166 = vector.load %arg3[%c1_71, %c0_72] : memref<4x32xf32, #tpu.memory_space<vmem>>, vector<1x32xf32>
    %167 = vector.broadcast %166 : vector<1x32xf32> to vector<16x32xf32>
    %168 = arith.addf %165, %167 : vector<16x32xf32>
    %169 = vector.extract_strided_slice %168 {offsets = [0, 0], sizes = [8, 32], strides = [1, 1]} : vector<16x32xf32> to vector<8x32xf32>
    %c4 = arith.constant 4 : index
    %c0_73 = arith.constant 0 : index
    %170 = vector.load %arg4[%c4, %c0_73] : memref<16x32xf32, #tpu.memory_space<vmem>>, vector<1x32xf32>
    %171 = vector.broadcast %170 : vector<1x32xf32> to vector<8x32xf32>
    %172 = arith.mulf %169, %171 : vector<8x32xf32>
    %c5 = arith.constant 5 : index
    %c0_74 = arith.constant 0 : index
    %173 = vector.load %arg4[%c5, %c0_74] : memref<16x32xf32, #tpu.memory_space<vmem>>, vector<1x32xf32>
    %174 = vector.broadcast %173 : vector<1x32xf32> to vector<8x32xf32>
    %175 = arith.mulf %169, %174 : vector<8x32xf32>
    %c6 = arith.constant 6 : index
    %c0_75 = arith.constant 0 : index
    %176 = vector.load %arg4[%c6, %c0_75] : memref<16x32xf32, #tpu.memory_space<vmem>>, vector<1x32xf32>
    %177 = vector.broadcast %176 : vector<1x32xf32> to vector<8x32xf32>
    %178 = arith.mulf %169, %177 : vector<8x32xf32>
    %c7 = arith.constant 7 : index
    %c0_76 = arith.constant 0 : index
    %179 = vector.load %arg4[%c7, %c0_76] : memref<16x32xf32, #tpu.memory_space<vmem>>, vector<1x32xf32>
    %180 = vector.broadcast %179 : vector<1x32xf32> to vector<8x32xf32>
    %181 = arith.mulf %169, %180 : vector<8x32xf32>
    %182 = tpu.concatenate %172, %175, %178, %181 in 0 : vector<8x32xf32>, vector<8x32xf32>, vector<8x32xf32>, vector<8x32xf32> -> vector<32x32xf32>
    %cst_77 = arith.constant dense<0.000000e+00> : vector<32x8xf32>
    %183 = tpu.matmul %182, %169, %cst_77 {dimension_numbers = #tpu.dot_dimension_numbers<[1], [1], [0], [0], [0, 0, 1, 0], [], []>} : vector<32x32xf32>, vector<8x32xf32>, vector<32x8xf32> -> vector<32x8xf32>
    %cst_78 = arith.constant 0.353553385 : f32
    %184 = vector.broadcast %cst_78 : f32 to vector<32x8xf32>
    %185 = arith.mulf %183, %184 : vector<32x8xf32>
    %cst_79 = arith.constant dense<0xFF800000> : vector<32xf32>
    %186 = vector.multi_reduction <maximumf>, %185, %cst_79 [1] : vector<32x8xf32> to vector<32xf32>
    %187 = vector.shape_cast %186 : vector<32xf32> to vector<32x1xf32>
    %188 = vector.broadcast %187 : vector<32x1xf32> to vector<32x8xf32>
    %189 = arith.subf %185, %188 : vector<32x8xf32>
    %190 = math.exp %189 : vector<32x8xf32>
    %cst_80 = arith.constant dense<0.000000e+00> : vector<32xf32>
    %191 = vector.multi_reduction <add>, %190, %cst_80 [1] : vector<32x8xf32> to vector<32xf32>
    %192 = vector.shape_cast %191 : vector<32xf32> to vector<32x1xf32>
    %193 = tpu.reciprocal %192 {approx = true} : vector<32x1xf32> -> vector<32x1xf32>
    %194 = vector.broadcast %193 : vector<32x1xf32> to vector<32x8xf32>
    %195 = arith.mulf %190, %194 : vector<32x8xf32>
    %cst_81 = arith.constant dense<0.000000e+00> : vector<32x32xf32>
    %196 = tpu.matmul %195, %169, %cst_81 {dimension_numbers = #tpu.dot_dimension_numbers<[1], [0], [0], [1], [0, 0, 1, 1], [], []>} : vector<32x8xf32>, vector<8x32xf32>, vector<32x32xf32> -> vector<32x32xf32>
    %197 = vector.extract_strided_slice %196 {offsets = [0, 0], sizes = [8, 32], strides = [1, 1]} : vector<32x32xf32> to vector<8x32xf32>
    %c4_82 = arith.constant 4 : index
    %c0_83 = arith.constant 0 : index
    %198 = vector.load %arg5[%c4_82, %c0_83] : memref<16x32xf32, #tpu.memory_space<vmem>>, vector<1x32xf32>
    %199 = vector.broadcast %198 : vector<1x32xf32> to vector<8x32xf32>
    %200 = arith.mulf %197, %199 : vector<8x32xf32>
    %201 = vector.extract_strided_slice %196 {offsets = [8, 0], sizes = [8, 32], strides = [1, 1]} : vector<32x32xf32> to vector<8x32xf32>
    %c5_84 = arith.constant 5 : index
    %c0_85 = arith.constant 0 : index
    %202 = vector.load %arg5[%c5_84, %c0_85] : memref<16x32xf32, #tpu.memory_space<vmem>>, vector<1x32xf32>
    %203 = vector.broadcast %202 : vector<1x32xf32> to vector<8x32xf32>
    %204 = arith.mulf %201, %203 : vector<8x32xf32>
    %205 = arith.addf %200, %204 : vector<8x32xf32>
    %206 = vector.extract_strided_slice %196 {offsets = [16, 0], sizes = [8, 32], strides = [1, 1]} : vector<32x32xf32> to vector<8x32xf32>
    %c6_86 = arith.constant 6 : index
    %c0_87 = arith.constant 0 : index
    %207 = vector.load %arg5[%c6_86, %c0_87] : memref<16x32xf32, #tpu.memory_space<vmem>>, vector<1x32xf32>
    %208 = vector.broadcast %207 : vector<1x32xf32> to vector<8x32xf32>
    %209 = arith.mulf %206, %208 : vector<8x32xf32>
    %210 = arith.addf %205, %209 : vector<8x32xf32>
    %211 = vector.extract_strided_slice %196 {offsets = [24, 0], sizes = [8, 32], strides = [1, 1]} : vector<32x32xf32> to vector<8x32xf32>
    %c7_88 = arith.constant 7 : index
    %c0_89 = arith.constant 0 : index
    %212 = vector.load %arg5[%c7_88, %c0_89] : memref<16x32xf32, #tpu.memory_space<vmem>>, vector<1x32xf32>
    %213 = vector.broadcast %212 : vector<1x32xf32> to vector<8x32xf32>
    %214 = arith.mulf %211, %213 : vector<8x32xf32>
    %215 = arith.addf %210, %214 : vector<8x32xf32>
    %216 = vector.extract_strided_slice %168 {offsets = [8, 0], sizes = [8, 32], strides = [1, 1]} : vector<16x32xf32> to vector<8x32xf32>
    %c4_90 = arith.constant 4 : index
    %c0_91 = arith.constant 0 : index
    %217 = vector.load %arg4[%c4_90, %c0_91] : memref<16x32xf32, #tpu.memory_space<vmem>>, vector<1x32xf32>
    %218 = vector.broadcast %217 : vector<1x32xf32> to vector<8x32xf32>
    %219 = arith.mulf %216, %218 : vector<8x32xf32>
    %c5_92 = arith.constant 5 : index
    %c0_93 = arith.constant 0 : index
    %220 = vector.load %arg4[%c5_92, %c0_93] : memref<16x32xf32, #tpu.memory_space<vmem>>, vector<1x32xf32>
    %221 = vector.broadcast %220 : vector<1x32xf32> to vector<8x32xf32>
    %222 = arith.mulf %216, %221 : vector<8x32xf32>
    %c6_94 = arith.constant 6 : index
    %c0_95 = arith.constant 0 : index
    %223 = vector.load %arg4[%c6_94, %c0_95] : memref<16x32xf32, #tpu.memory_space<vmem>>, vector<1x32xf32>
    %224 = vector.broadcast %223 : vector<1x32xf32> to vector<8x32xf32>
    %225 = arith.mulf %216, %224 : vector<8x32xf32>
    %c7_96 = arith.constant 7 : index
    %c0_97 = arith.constant 0 : index
    %226 = vector.load %arg4[%c7_96, %c0_97] : memref<16x32xf32, #tpu.memory_space<vmem>>, vector<1x32xf32>
    %227 = vector.broadcast %226 : vector<1x32xf32> to vector<8x32xf32>
    %228 = arith.mulf %216, %227 : vector<8x32xf32>
    %229 = tpu.concatenate %219, %222, %225, %228 in 0 : vector<8x32xf32>, vector<8x32xf32>, vector<8x32xf32>, vector<8x32xf32> -> vector<32x32xf32>
    %cst_98 = arith.constant dense<0.000000e+00> : vector<32x8xf32>
    %230 = tpu.matmul %229, %216, %cst_98 {dimension_numbers = #tpu.dot_dimension_numbers<[1], [1], [0], [0], [0, 0, 1, 0], [], []>} : vector<32x32xf32>, vector<8x32xf32>, vector<32x8xf32> -> vector<32x8xf32>
    %cst_99 = arith.constant 0.353553385 : f32
    %231 = vector.broadcast %cst_99 : f32 to vector<32x8xf32>
    %232 = arith.mulf %230, %231 : vector<32x8xf32>
    %cst_100 = arith.constant dense<0xFF800000> : vector<32xf32>
    %233 = vector.multi_reduction <maximumf>, %232, %cst_100 [1] : vector<32x8xf32> to vector<32xf32>
    %234 = vector.shape_cast %233 : vector<32xf32> to vector<32x1xf32>
    %235 = vector.broadcast %234 : vector<32x1xf32> to vector<32x8xf32>
    %236 = arith.subf %232, %235 : vector<32x8xf32>
    %237 = math.exp %236 : vector<32x8xf32>
    %cst_101 = arith.constant dense<0.000000e+00> : vector<32xf32>
    %238 = vector.multi_reduction <add>, %237, %cst_101 [1] : vector<32x8xf32> to vector<32xf32>
    %239 = vector.shape_cast %238 : vector<32xf32> to vector<32x1xf32>
    %240 = tpu.reciprocal %239 {approx = true} : vector<32x1xf32> -> vector<32x1xf32>
    %241 = vector.broadcast %240 : vector<32x1xf32> to vector<32x8xf32>
    %242 = arith.mulf %237, %241 : vector<32x8xf32>
    %cst_102 = arith.constant dense<0.000000e+00> : vector<32x32xf32>
    %243 = tpu.matmul %242, %216, %cst_102 {dimension_numbers = #tpu.dot_dimension_numbers<[1], [0], [0], [1], [0, 0, 1, 1], [], []>} : vector<32x8xf32>, vector<8x32xf32>, vector<32x32xf32> -> vector<32x32xf32>
    %244 = vector.extract_strided_slice %243 {offsets = [0, 0], sizes = [8, 32], strides = [1, 1]} : vector<32x32xf32> to vector<8x32xf32>
    %c4_103 = arith.constant 4 : index
    %c0_104 = arith.constant 0 : index
    %245 = vector.load %arg5[%c4_103, %c0_104] : memref<16x32xf32, #tpu.memory_space<vmem>>, vector<1x32xf32>
    %246 = vector.broadcast %245 : vector<1x32xf32> to vector<8x32xf32>
    %247 = arith.mulf %244, %246 : vector<8x32xf32>
    %248 = vector.extract_strided_slice %243 {offsets = [8, 0], sizes = [8, 32], strides = [1, 1]} : vector<32x32xf32> to vector<8x32xf32>
    %c5_105 = arith.constant 5 : index
    %c0_106 = arith.constant 0 : index
    %249 = vector.load %arg5[%c5_105, %c0_106] : memref<16x32xf32, #tpu.memory_space<vmem>>, vector<1x32xf32>
    %250 = vector.broadcast %249 : vector<1x32xf32> to vector<8x32xf32>
    %251 = arith.mulf %248, %250 : vector<8x32xf32>
    %252 = arith.addf %247, %251 : vector<8x32xf32>
    %253 = vector.extract_strided_slice %243 {offsets = [16, 0], sizes = [8, 32], strides = [1, 1]} : vector<32x32xf32> to vector<8x32xf32>
    %c6_107 = arith.constant 6 : index
    %c0_108 = arith.constant 0 : index
    %254 = vector.load %arg5[%c6_107, %c0_108] : memref<16x32xf32, #tpu.memory_space<vmem>>, vector<1x32xf32>
    %255 = vector.broadcast %254 : vector<1x32xf32> to vector<8x32xf32>
    %256 = arith.mulf %253, %255 : vector<8x32xf32>
    %257 = arith.addf %252, %256 : vector<8x32xf32>
    %258 = vector.extract_strided_slice %243 {offsets = [24, 0], sizes = [8, 32], strides = [1, 1]} : vector<32x32xf32> to vector<8x32xf32>
    %c7_109 = arith.constant 7 : index
    %c0_110 = arith.constant 0 : index
    %259 = vector.load %arg5[%c7_109, %c0_110] : memref<16x32xf32, #tpu.memory_space<vmem>>, vector<1x32xf32>
    %260 = vector.broadcast %259 : vector<1x32xf32> to vector<8x32xf32>
    %261 = arith.mulf %258, %260 : vector<8x32xf32>
    %262 = arith.addf %257, %261 : vector<8x32xf32>
    %263 = tpu.concatenate %215, %262 in 0 : vector<8x32xf32>, vector<8x32xf32> -> vector<16x32xf32>
    %c1_111 = arith.constant 1 : index
    %c0_112 = arith.constant 0 : index
    %c0_113 = arith.constant 0 : index
    %264 = vector.load %arg6[%c1_111, %c0_112, %c0_113] : memref<4x32x32xf32, #tpu.memory_space<vmem>>, vector<1x32x32xf32>
    %265 = vector.shape_cast %264 : vector<1x32x32xf32> to vector<32x32xf32>
    %cst_114 = arith.constant dense<0.000000e+00> : vector<16x32xf32>
    %266 = tpu.matmul %168, %265, %cst_114 {dimension_numbers = #tpu.dot_dimension_numbers<[1], [0], [0], [1], [0, 0, 1, 1], [], []>} : vector<16x32xf32>, vector<32x32xf32>, vector<16x32xf32> -> vector<16x32xf32>
    %cst_115 = arith.constant 5.000000e-01 : f32
    %267 = vector.broadcast %cst_115 : f32 to vector<16x32xf32>
    %268 = arith.mulf %267, %266 : vector<16x32xf32>
    %cst_116 = arith.constant 4.471500e-02 : f32
    %269 = vector.broadcast %cst_116 : f32 to vector<16x32xf32>
    %270 = arith.mulf %269, %266 : vector<16x32xf32>
    %271 = arith.mulf %270, %266 : vector<16x32xf32>
    %272 = arith.mulf %271, %266 : vector<16x32xf32>
    %273 = arith.addf %266, %272 : vector<16x32xf32>
    %cst_117 = arith.constant 0.797884583 : f32
    %274 = vector.broadcast %cst_117 : f32 to vector<16x32xf32>
    %275 = arith.mulf %274, %273 : vector<16x32xf32>
    %276 = math.tanh %275 : vector<16x32xf32>
    %cst_118 = arith.constant 1.000000e+00 : f32
    %277 = vector.broadcast %cst_118 : f32 to vector<16x32xf32>
    %278 = arith.addf %277, %276 : vector<16x32xf32>
    %279 = arith.mulf %268, %278 : vector<16x32xf32>
    %c1_119 = arith.constant 1 : index
    %c0_120 = arith.constant 0 : index
    %c0_121 = arith.constant 0 : index
    %280 = vector.load %arg7[%c1_119, %c0_120, %c0_121] : memref<4x32x32xf32, #tpu.memory_space<vmem>>, vector<1x32x32xf32>
    %281 = vector.shape_cast %280 : vector<1x32x32xf32> to vector<32x32xf32>
    %cst_122 = arith.constant dense<0.000000e+00> : vector<16x32xf32>
    %282 = tpu.matmul %279, %281, %cst_122 {dimension_numbers = #tpu.dot_dimension_numbers<[1], [0], [0], [1], [0, 0, 1, 1], [], []>} : vector<16x32xf32>, vector<32x32xf32>, vector<16x32xf32> -> vector<16x32xf32>
    %283 = arith.addf %144, %263 : vector<16x32xf32>
    %284 = arith.addf %283, %282 : vector<16x32xf32>
    %cst_123 = arith.constant dense<0.000000e+00> : vector<16xf32>
    %285 = vector.multi_reduction <add>, %284, %cst_123 [1] : vector<16x32xf32> to vector<16xf32>
    %286 = vector.shape_cast %285 : vector<16xf32> to vector<16x1xf32>
    %cst_124 = arith.constant 3.200000e+01 : f32
    %287 = vector.broadcast %cst_124 : f32 to vector<16x1xf32>
    %288 = arith.divf %286, %287 : vector<16x1xf32>
    %289 = vector.broadcast %288 : vector<16x1xf32> to vector<16x32xf32>
    %290 = arith.subf %284, %289 : vector<16x32xf32>
    %291 = arith.mulf %290, %290 : vector<16x32xf32>
    %cst_125 = arith.constant dense<0.000000e+00> : vector<16xf32>
    %292 = vector.multi_reduction <add>, %291, %cst_125 [1] : vector<16x32xf32> to vector<16xf32>
    %293 = vector.shape_cast %292 : vector<16xf32> to vector<16x1xf32>
    %cst_126 = arith.constant 3.200000e+01 : f32
    %294 = vector.broadcast %cst_126 : f32 to vector<16x1xf32>
    %295 = arith.divf %293, %294 : vector<16x1xf32>
    %296 = vector.broadcast %288 : vector<16x1xf32> to vector<16x32xf32>
    %297 = arith.subf %284, %296 : vector<16x32xf32>
    %cst_127 = arith.constant 9.99999974E-6 : f32
    %298 = vector.broadcast %cst_127 : f32 to vector<16x1xf32>
    %299 = arith.addf %295, %298 : vector<16x1xf32>
    %300 = math.rsqrt %299 : vector<16x1xf32>
    %301 = vector.broadcast %300 : vector<16x1xf32> to vector<16x32xf32>
    %302 = arith.mulf %297, %301 : vector<16x32xf32>
    %c2_128 = arith.constant 2 : index
    %c0_129 = arith.constant 0 : index
    %303 = vector.load %arg2[%c2_128, %c0_129] : memref<4x32xf32, #tpu.memory_space<vmem>>, vector<1x32xf32>
    %304 = vector.broadcast %303 : vector<1x32xf32> to vector<16x32xf32>
    %305 = arith.mulf %302, %304 : vector<16x32xf32>
    %c2_130 = arith.constant 2 : index
    %c0_131 = arith.constant 0 : index
    %306 = vector.load %arg3[%c2_130, %c0_131] : memref<4x32xf32, #tpu.memory_space<vmem>>, vector<1x32xf32>
    %307 = vector.broadcast %306 : vector<1x32xf32> to vector<16x32xf32>
    %308 = arith.addf %305, %307 : vector<16x32xf32>
    %309 = vector.extract_strided_slice %308 {offsets = [0, 0], sizes = [8, 32], strides = [1, 1]} : vector<16x32xf32> to vector<8x32xf32>
    %c8 = arith.constant 8 : index
    %c0_132 = arith.constant 0 : index
    %310 = vector.load %arg4[%c8, %c0_132] : memref<16x32xf32, #tpu.memory_space<vmem>>, vector<1x32xf32>
    %311 = vector.broadcast %310 : vector<1x32xf32> to vector<8x32xf32>
    %312 = arith.mulf %309, %311 : vector<8x32xf32>
    %c9 = arith.constant 9 : index
    %c0_133 = arith.constant 0 : index
    %313 = vector.load %arg4[%c9, %c0_133] : memref<16x32xf32, #tpu.memory_space<vmem>>, vector<1x32xf32>
    %314 = vector.broadcast %313 : vector<1x32xf32> to vector<8x32xf32>
    %315 = arith.mulf %309, %314 : vector<8x32xf32>
    %c10 = arith.constant 10 : index
    %c0_134 = arith.constant 0 : index
    %316 = vector.load %arg4[%c10, %c0_134] : memref<16x32xf32, #tpu.memory_space<vmem>>, vector<1x32xf32>
    %317 = vector.broadcast %316 : vector<1x32xf32> to vector<8x32xf32>
    %318 = arith.mulf %309, %317 : vector<8x32xf32>
    %c11 = arith.constant 11 : index
    %c0_135 = arith.constant 0 : index
    %319 = vector.load %arg4[%c11, %c0_135] : memref<16x32xf32, #tpu.memory_space<vmem>>, vector<1x32xf32>
    %320 = vector.broadcast %319 : vector<1x32xf32> to vector<8x32xf32>
    %321 = arith.mulf %309, %320 : vector<8x32xf32>
    %322 = tpu.concatenate %312, %315, %318, %321 in 0 : vector<8x32xf32>, vector<8x32xf32>, vector<8x32xf32>, vector<8x32xf32> -> vector<32x32xf32>
    %cst_136 = arith.constant dense<0.000000e+00> : vector<32x8xf32>
    %323 = tpu.matmul %322, %309, %cst_136 {dimension_numbers = #tpu.dot_dimension_numbers<[1], [1], [0], [0], [0, 0, 1, 0], [], []>} : vector<32x32xf32>, vector<8x32xf32>, vector<32x8xf32> -> vector<32x8xf32>
    %cst_137 = arith.constant 0.353553385 : f32
    %324 = vector.broadcast %cst_137 : f32 to vector<32x8xf32>
    %325 = arith.mulf %323, %324 : vector<32x8xf32>
    %cst_138 = arith.constant dense<0xFF800000> : vector<32xf32>
    %326 = vector.multi_reduction <maximumf>, %325, %cst_138 [1] : vector<32x8xf32> to vector<32xf32>
    %327 = vector.shape_cast %326 : vector<32xf32> to vector<32x1xf32>
    %328 = vector.broadcast %327 : vector<32x1xf32> to vector<32x8xf32>
    %329 = arith.subf %325, %328 : vector<32x8xf32>
    %330 = math.exp %329 : vector<32x8xf32>
    %cst_139 = arith.constant dense<0.000000e+00> : vector<32xf32>
    %331 = vector.multi_reduction <add>, %330, %cst_139 [1] : vector<32x8xf32> to vector<32xf32>
    %332 = vector.shape_cast %331 : vector<32xf32> to vector<32x1xf32>
    %333 = tpu.reciprocal %332 {approx = true} : vector<32x1xf32> -> vector<32x1xf32>
    %334 = vector.broadcast %333 : vector<32x1xf32> to vector<32x8xf32>
    %335 = arith.mulf %330, %334 : vector<32x8xf32>
    %cst_140 = arith.constant dense<0.000000e+00> : vector<32x32xf32>
    %336 = tpu.matmul %335, %309, %cst_140 {dimension_numbers = #tpu.dot_dimension_numbers<[1], [0], [0], [1], [0, 0, 1, 1], [], []>} : vector<32x8xf32>, vector<8x32xf32>, vector<32x32xf32> -> vector<32x32xf32>
    %337 = vector.extract_strided_slice %336 {offsets = [0, 0], sizes = [8, 32], strides = [1, 1]} : vector<32x32xf32> to vector<8x32xf32>
    %c8_141 = arith.constant 8 : index
    %c0_142 = arith.constant 0 : index
    %338 = vector.load %arg5[%c8_141, %c0_142] : memref<16x32xf32, #tpu.memory_space<vmem>>, vector<1x32xf32>
    %339 = vector.broadcast %338 : vector<1x32xf32> to vector<8x32xf32>
    %340 = arith.mulf %337, %339 : vector<8x32xf32>
    %341 = vector.extract_strided_slice %336 {offsets = [8, 0], sizes = [8, 32], strides = [1, 1]} : vector<32x32xf32> to vector<8x32xf32>
    %c9_143 = arith.constant 9 : index
    %c0_144 = arith.constant 0 : index
    %342 = vector.load %arg5[%c9_143, %c0_144] : memref<16x32xf32, #tpu.memory_space<vmem>>, vector<1x32xf32>
    %343 = vector.broadcast %342 : vector<1x32xf32> to vector<8x32xf32>
    %344 = arith.mulf %341, %343 : vector<8x32xf32>
    %345 = arith.addf %340, %344 : vector<8x32xf32>
    %346 = vector.extract_strided_slice %336 {offsets = [16, 0], sizes = [8, 32], strides = [1, 1]} : vector<32x32xf32> to vector<8x32xf32>
    %c10_145 = arith.constant 10 : index
    %c0_146 = arith.constant 0 : index
    %347 = vector.load %arg5[%c10_145, %c0_146] : memref<16x32xf32, #tpu.memory_space<vmem>>, vector<1x32xf32>
    %348 = vector.broadcast %347 : vector<1x32xf32> to vector<8x32xf32>
    %349 = arith.mulf %346, %348 : vector<8x32xf32>
    %350 = arith.addf %345, %349 : vector<8x32xf32>
    %351 = vector.extract_strided_slice %336 {offsets = [24, 0], sizes = [8, 32], strides = [1, 1]} : vector<32x32xf32> to vector<8x32xf32>
    %c11_147 = arith.constant 11 : index
    %c0_148 = arith.constant 0 : index
    %352 = vector.load %arg5[%c11_147, %c0_148] : memref<16x32xf32, #tpu.memory_space<vmem>>, vector<1x32xf32>
    %353 = vector.broadcast %352 : vector<1x32xf32> to vector<8x32xf32>
    %354 = arith.mulf %351, %353 : vector<8x32xf32>
    %355 = arith.addf %350, %354 : vector<8x32xf32>
    %356 = vector.extract_strided_slice %308 {offsets = [8, 0], sizes = [8, 32], strides = [1, 1]} : vector<16x32xf32> to vector<8x32xf32>
    %c8_149 = arith.constant 8 : index
    %c0_150 = arith.constant 0 : index
    %357 = vector.load %arg4[%c8_149, %c0_150] : memref<16x32xf32, #tpu.memory_space<vmem>>, vector<1x32xf32>
    %358 = vector.broadcast %357 : vector<1x32xf32> to vector<8x32xf32>
    %359 = arith.mulf %356, %358 : vector<8x32xf32>
    %c9_151 = arith.constant 9 : index
    %c0_152 = arith.constant 0 : index
    %360 = vector.load %arg4[%c9_151, %c0_152] : memref<16x32xf32, #tpu.memory_space<vmem>>, vector<1x32xf32>
    %361 = vector.broadcast %360 : vector<1x32xf32> to vector<8x32xf32>
    %362 = arith.mulf %356, %361 : vector<8x32xf32>
    %c10_153 = arith.constant 10 : index
    %c0_154 = arith.constant 0 : index
    %363 = vector.load %arg4[%c10_153, %c0_154] : memref<16x32xf32, #tpu.memory_space<vmem>>, vector<1x32xf32>
    %364 = vector.broadcast %363 : vector<1x32xf32> to vector<8x32xf32>
    %365 = arith.mulf %356, %364 : vector<8x32xf32>
    %c11_155 = arith.constant 11 : index
    %c0_156 = arith.constant 0 : index
    %366 = vector.load %arg4[%c11_155, %c0_156] : memref<16x32xf32, #tpu.memory_space<vmem>>, vector<1x32xf32>
    %367 = vector.broadcast %366 : vector<1x32xf32> to vector<8x32xf32>
    %368 = arith.mulf %356, %367 : vector<8x32xf32>
    %369 = tpu.concatenate %359, %362, %365, %368 in 0 : vector<8x32xf32>, vector<8x32xf32>, vector<8x32xf32>, vector<8x32xf32> -> vector<32x32xf32>
    %cst_157 = arith.constant dense<0.000000e+00> : vector<32x8xf32>
    %370 = tpu.matmul %369, %356, %cst_157 {dimension_numbers = #tpu.dot_dimension_numbers<[1], [1], [0], [0], [0, 0, 1, 0], [], []>} : vector<32x32xf32>, vector<8x32xf32>, vector<32x8xf32> -> vector<32x8xf32>
    %cst_158 = arith.constant 0.353553385 : f32
    %371 = vector.broadcast %cst_158 : f32 to vector<32x8xf32>
    %372 = arith.mulf %370, %371 : vector<32x8xf32>
    %cst_159 = arith.constant dense<0xFF800000> : vector<32xf32>
    %373 = vector.multi_reduction <maximumf>, %372, %cst_159 [1] : vector<32x8xf32> to vector<32xf32>
    %374 = vector.shape_cast %373 : vector<32xf32> to vector<32x1xf32>
    %375 = vector.broadcast %374 : vector<32x1xf32> to vector<32x8xf32>
    %376 = arith.subf %372, %375 : vector<32x8xf32>
    %377 = math.exp %376 : vector<32x8xf32>
    %cst_160 = arith.constant dense<0.000000e+00> : vector<32xf32>
    %378 = vector.multi_reduction <add>, %377, %cst_160 [1] : vector<32x8xf32> to vector<32xf32>
    %379 = vector.shape_cast %378 : vector<32xf32> to vector<32x1xf32>
    %380 = tpu.reciprocal %379 {approx = true} : vector<32x1xf32> -> vector<32x1xf32>
    %381 = vector.broadcast %380 : vector<32x1xf32> to vector<32x8xf32>
    %382 = arith.mulf %377, %381 : vector<32x8xf32>
    %cst_161 = arith.constant dense<0.000000e+00> : vector<32x32xf32>
    %383 = tpu.matmul %382, %356, %cst_161 {dimension_numbers = #tpu.dot_dimension_numbers<[1], [0], [0], [1], [0, 0, 1, 1], [], []>} : vector<32x8xf32>, vector<8x32xf32>, vector<32x32xf32> -> vector<32x32xf32>
    %384 = vector.extract_strided_slice %383 {offsets = [0, 0], sizes = [8, 32], strides = [1, 1]} : vector<32x32xf32> to vector<8x32xf32>
    %c8_162 = arith.constant 8 : index
    %c0_163 = arith.constant 0 : index
    %385 = vector.load %arg5[%c8_162, %c0_163] : memref<16x32xf32, #tpu.memory_space<vmem>>, vector<1x32xf32>
    %386 = vector.broadcast %385 : vector<1x32xf32> to vector<8x32xf32>
    %387 = arith.mulf %384, %386 : vector<8x32xf32>
    %388 = vector.extract_strided_slice %383 {offsets = [8, 0], sizes = [8, 32], strides = [1, 1]} : vector<32x32xf32> to vector<8x32xf32>
    %c9_164 = arith.constant 9 : index
    %c0_165 = arith.constant 0 : index
    %389 = vector.load %arg5[%c9_164, %c0_165] : memref<16x32xf32, #tpu.memory_space<vmem>>, vector<1x32xf32>
    %390 = vector.broadcast %389 : vector<1x32xf32> to vector<8x32xf32>
    %391 = arith.mulf %388, %390 : vector<8x32xf32>
    %392 = arith.addf %387, %391 : vector<8x32xf32>
    %393 = vector.extract_strided_slice %383 {offsets = [16, 0], sizes = [8, 32], strides = [1, 1]} : vector<32x32xf32> to vector<8x32xf32>
    %c10_166 = arith.constant 10 : index
    %c0_167 = arith.constant 0 : index
    %394 = vector.load %arg5[%c10_166, %c0_167] : memref<16x32xf32, #tpu.memory_space<vmem>>, vector<1x32xf32>
    %395 = vector.broadcast %394 : vector<1x32xf32> to vector<8x32xf32>
    %396 = arith.mulf %393, %395 : vector<8x32xf32>
    %397 = arith.addf %392, %396 : vector<8x32xf32>
    %398 = vector.extract_strided_slice %383 {offsets = [24, 0], sizes = [8, 32], strides = [1, 1]} : vector<32x32xf32> to vector<8x32xf32>
    %c11_168 = arith.constant 11 : index
    %c0_169 = arith.constant 0 : index
    %399 = vector.load %arg5[%c11_168, %c0_169] : memref<16x32xf32, #tpu.memory_space<vmem>>, vector<1x32xf32>
    %400 = vector.broadcast %399 : vector<1x32xf32> to vector<8x32xf32>
    %401 = arith.mulf %398, %400 : vector<8x32xf32>
    %402 = arith.addf %397, %401 : vector<8x32xf32>
    %403 = tpu.concatenate %355, %402 in 0 : vector<8x32xf32>, vector<8x32xf32> -> vector<16x32xf32>
    %c2_170 = arith.constant 2 : index
    %c0_171 = arith.constant 0 : index
    %c0_172 = arith.constant 0 : index
    %404 = vector.load %arg6[%c2_170, %c0_171, %c0_172] : memref<4x32x32xf32, #tpu.memory_space<vmem>>, vector<1x32x32xf32>
    %405 = vector.shape_cast %404 : vector<1x32x32xf32> to vector<32x32xf32>
    %cst_173 = arith.constant dense<0.000000e+00> : vector<16x32xf32>
    %406 = tpu.matmul %308, %405, %cst_173 {dimension_numbers = #tpu.dot_dimension_numbers<[1], [0], [0], [1], [0, 0, 1, 1], [], []>} : vector<16x32xf32>, vector<32x32xf32>, vector<16x32xf32> -> vector<16x32xf32>
    %cst_174 = arith.constant 5.000000e-01 : f32
    %407 = vector.broadcast %cst_174 : f32 to vector<16x32xf32>
    %408 = arith.mulf %407, %406 : vector<16x32xf32>
    %cst_175 = arith.constant 4.471500e-02 : f32
    %409 = vector.broadcast %cst_175 : f32 to vector<16x32xf32>
    %410 = arith.mulf %409, %406 : vector<16x32xf32>
    %411 = arith.mulf %410, %406 : vector<16x32xf32>
    %412 = arith.mulf %411, %406 : vector<16x32xf32>
    %413 = arith.addf %406, %412 : vector<16x32xf32>
    %cst_176 = arith.constant 0.797884583 : f32
    %414 = vector.broadcast %cst_176 : f32 to vector<16x32xf32>
    %415 = arith.mulf %414, %413 : vector<16x32xf32>
    %416 = math.tanh %415 : vector<16x32xf32>
    %cst_177 = arith.constant 1.000000e+00 : f32
    %417 = vector.broadcast %cst_177 : f32 to vector<16x32xf32>
    %418 = arith.addf %417, %416 : vector<16x32xf32>
    %419 = arith.mulf %408, %418 : vector<16x32xf32>
    %c2_178 = arith.constant 2 : index
    %c0_179 = arith.constant 0 : index
    %c0_180 = arith.constant 0 : index
    %420 = vector.load %arg7[%c2_178, %c0_179, %c0_180] : memref<4x32x32xf32, #tpu.memory_space<vmem>>, vector<1x32x32xf32>
    %421 = vector.shape_cast %420 : vector<1x32x32xf32> to vector<32x32xf32>
    %cst_181 = arith.constant dense<0.000000e+00> : vector<16x32xf32>
    %422 = tpu.matmul %419, %421, %cst_181 {dimension_numbers = #tpu.dot_dimension_numbers<[1], [0], [0], [1], [0, 0, 1, 1], [], []>} : vector<16x32xf32>, vector<32x32xf32>, vector<16x32xf32> -> vector<16x32xf32>
    %423 = arith.addf %284, %403 : vector<16x32xf32>
    %424 = arith.addf %423, %422 : vector<16x32xf32>
    %cst_182 = arith.constant dense<0.000000e+00> : vector<16xf32>
    %425 = vector.multi_reduction <add>, %424, %cst_182 [1] : vector<16x32xf32> to vector<16xf32>
    %426 = vector.shape_cast %425 : vector<16xf32> to vector<16x1xf32>
    %cst_183 = arith.constant 3.200000e+01 : f32
    %427 = vector.broadcast %cst_183 : f32 to vector<16x1xf32>
    %428 = arith.divf %426, %427 : vector<16x1xf32>
    %429 = vector.broadcast %428 : vector<16x1xf32> to vector<16x32xf32>
    %430 = arith.subf %424, %429 : vector<16x32xf32>
    %431 = arith.mulf %430, %430 : vector<16x32xf32>
    %cst_184 = arith.constant dense<0.000000e+00> : vector<16xf32>
    %432 = vector.multi_reduction <add>, %431, %cst_184 [1] : vector<16x32xf32> to vector<16xf32>
    %433 = vector.shape_cast %432 : vector<16xf32> to vector<16x1xf32>
    %cst_185 = arith.constant 3.200000e+01 : f32
    %434 = vector.broadcast %cst_185 : f32 to vector<16x1xf32>
    %435 = arith.divf %433, %434 : vector<16x1xf32>
    %436 = vector.broadcast %428 : vector<16x1xf32> to vector<16x32xf32>
    %437 = arith.subf %424, %436 : vector<16x32xf32>
    %cst_186 = arith.constant 9.99999974E-6 : f32
    %438 = vector.broadcast %cst_186 : f32 to vector<16x1xf32>
    %439 = arith.addf %435, %438 : vector<16x1xf32>
    %440 = math.rsqrt %439 : vector<16x1xf32>
    %441 = vector.broadcast %440 : vector<16x1xf32> to vector<16x32xf32>
    %442 = arith.mulf %437, %441 : vector<16x32xf32>
    %c3_187 = arith.constant 3 : index
    %c0_188 = arith.constant 0 : index
    %443 = vector.load %arg2[%c3_187, %c0_188] : memref<4x32xf32, #tpu.memory_space<vmem>>, vector<1x32xf32>
    %444 = vector.broadcast %443 : vector<1x32xf32> to vector<16x32xf32>
    %445 = arith.mulf %442, %444 : vector<16x32xf32>
    %c3_189 = arith.constant 3 : index
    %c0_190 = arith.constant 0 : index
    %446 = vector.load %arg3[%c3_189, %c0_190] : memref<4x32xf32, #tpu.memory_space<vmem>>, vector<1x32xf32>
    %447 = vector.broadcast %446 : vector<1x32xf32> to vector<16x32xf32>
    %448 = arith.addf %445, %447 : vector<16x32xf32>
    %449 = vector.extract_strided_slice %448 {offsets = [0, 0], sizes = [8, 32], strides = [1, 1]} : vector<16x32xf32> to vector<8x32xf32>
    %c12 = arith.constant 12 : index
    %c0_191 = arith.constant 0 : index
    %450 = vector.load %arg4[%c12, %c0_191] : memref<16x32xf32, #tpu.memory_space<vmem>>, vector<1x32xf32>
    %451 = vector.broadcast %450 : vector<1x32xf32> to vector<8x32xf32>
    %452 = arith.mulf %449, %451 : vector<8x32xf32>
    %c13 = arith.constant 13 : index
    %c0_192 = arith.constant 0 : index
    %453 = vector.load %arg4[%c13, %c0_192] : memref<16x32xf32, #tpu.memory_space<vmem>>, vector<1x32xf32>
    %454 = vector.broadcast %453 : vector<1x32xf32> to vector<8x32xf32>
    %455 = arith.mulf %449, %454 : vector<8x32xf32>
    %c14 = arith.constant 14 : index
    %c0_193 = arith.constant 0 : index
    %456 = vector.load %arg4[%c14, %c0_193] : memref<16x32xf32, #tpu.memory_space<vmem>>, vector<1x32xf32>
    %457 = vector.broadcast %456 : vector<1x32xf32> to vector<8x32xf32>
    %458 = arith.mulf %449, %457 : vector<8x32xf32>
    %c15 = arith.constant 15 : index
    %c0_194 = arith.constant 0 : index
    %459 = vector.load %arg4[%c15, %c0_194] : memref<16x32xf32, #tpu.memory_space<vmem>>, vector<1x32xf32>
    %460 = vector.broadcast %459 : vector<1x32xf32> to vector<8x32xf32>
    %461 = arith.mulf %449, %460 : vector<8x32xf32>
    %462 = tpu.concatenate %452, %455, %458, %461 in 0 : vector<8x32xf32>, vector<8x32xf32>, vector<8x32xf32>, vector<8x32xf32> -> vector<32x32xf32>
    %cst_195 = arith.constant dense<0.000000e+00> : vector<32x8xf32>
    %463 = tpu.matmul %462, %449, %cst_195 {dimension_numbers = #tpu.dot_dimension_numbers<[1], [1], [0], [0], [0, 0, 1, 0], [], []>} : vector<32x32xf32>, vector<8x32xf32>, vector<32x8xf32> -> vector<32x8xf32>
    %cst_196 = arith.constant 0.353553385 : f32
    %464 = vector.broadcast %cst_196 : f32 to vector<32x8xf32>
    %465 = arith.mulf %463, %464 : vector<32x8xf32>
    %cst_197 = arith.constant dense<0xFF800000> : vector<32xf32>
    %466 = vector.multi_reduction <maximumf>, %465, %cst_197 [1] : vector<32x8xf32> to vector<32xf32>
    %467 = vector.shape_cast %466 : vector<32xf32> to vector<32x1xf32>
    %468 = vector.broadcast %467 : vector<32x1xf32> to vector<32x8xf32>
    %469 = arith.subf %465, %468 : vector<32x8xf32>
    %470 = math.exp %469 : vector<32x8xf32>
    %cst_198 = arith.constant dense<0.000000e+00> : vector<32xf32>
    %471 = vector.multi_reduction <add>, %470, %cst_198 [1] : vector<32x8xf32> to vector<32xf32>
    %472 = vector.shape_cast %471 : vector<32xf32> to vector<32x1xf32>
    %473 = tpu.reciprocal %472 {approx = true} : vector<32x1xf32> -> vector<32x1xf32>
    %474 = vector.broadcast %473 : vector<32x1xf32> to vector<32x8xf32>
    %475 = arith.mulf %470, %474 : vector<32x8xf32>
    %cst_199 = arith.constant dense<0.000000e+00> : vector<32x32xf32>
    %476 = tpu.matmul %475, %449, %cst_199 {dimension_numbers = #tpu.dot_dimension_numbers<[1], [0], [0], [1], [0, 0, 1, 1], [], []>} : vector<32x8xf32>, vector<8x32xf32>, vector<32x32xf32> -> vector<32x32xf32>
    %477 = vector.extract_strided_slice %476 {offsets = [0, 0], sizes = [8, 32], strides = [1, 1]} : vector<32x32xf32> to vector<8x32xf32>
    %c12_200 = arith.constant 12 : index
    %c0_201 = arith.constant 0 : index
    %478 = vector.load %arg5[%c12_200, %c0_201] : memref<16x32xf32, #tpu.memory_space<vmem>>, vector<1x32xf32>
    %479 = vector.broadcast %478 : vector<1x32xf32> to vector<8x32xf32>
    %480 = arith.mulf %477, %479 : vector<8x32xf32>
    %481 = vector.extract_strided_slice %476 {offsets = [8, 0], sizes = [8, 32], strides = [1, 1]} : vector<32x32xf32> to vector<8x32xf32>
    %c13_202 = arith.constant 13 : index
    %c0_203 = arith.constant 0 : index
    %482 = vector.load %arg5[%c13_202, %c0_203] : memref<16x32xf32, #tpu.memory_space<vmem>>, vector<1x32xf32>
    %483 = vector.broadcast %482 : vector<1x32xf32> to vector<8x32xf32>
    %484 = arith.mulf %481, %483 : vector<8x32xf32>
    %485 = arith.addf %480, %484 : vector<8x32xf32>
    %486 = vector.extract_strided_slice %476 {offsets = [16, 0], sizes = [8, 32], strides = [1, 1]} : vector<32x32xf32> to vector<8x32xf32>
    %c14_204 = arith.constant 14 : index
    %c0_205 = arith.constant 0 : index
    %487 = vector.load %arg5[%c14_204, %c0_205] : memref<16x32xf32, #tpu.memory_space<vmem>>, vector<1x32xf32>
    %488 = vector.broadcast %487 : vector<1x32xf32> to vector<8x32xf32>
    %489 = arith.mulf %486, %488 : vector<8x32xf32>
    %490 = arith.addf %485, %489 : vector<8x32xf32>
    %491 = vector.extract_strided_slice %476 {offsets = [24, 0], sizes = [8, 32], strides = [1, 1]} : vector<32x32xf32> to vector<8x32xf32>
    %c15_206 = arith.constant 15 : index
    %c0_207 = arith.constant 0 : index
    %492 = vector.load %arg5[%c15_206, %c0_207] : memref<16x32xf32, #tpu.memory_space<vmem>>, vector<1x32xf32>
    %493 = vector.broadcast %492 : vector<1x32xf32> to vector<8x32xf32>
    %494 = arith.mulf %491, %493 : vector<8x32xf32>
    %495 = arith.addf %490, %494 : vector<8x32xf32>
    %496 = vector.extract_strided_slice %448 {offsets = [8, 0], sizes = [8, 32], strides = [1, 1]} : vector<16x32xf32> to vector<8x32xf32>
    %c12_208 = arith.constant 12 : index
    %c0_209 = arith.constant 0 : index
    %497 = vector.load %arg4[%c12_208, %c0_209] : memref<16x32xf32, #tpu.memory_space<vmem>>, vector<1x32xf32>
    %498 = vector.broadcast %497 : vector<1x32xf32> to vector<8x32xf32>
    %499 = arith.mulf %496, %498 : vector<8x32xf32>
    %c13_210 = arith.constant 13 : index
    %c0_211 = arith.constant 0 : index
    %500 = vector.load %arg4[%c13_210, %c0_211] : memref<16x32xf32, #tpu.memory_space<vmem>>, vector<1x32xf32>
    %501 = vector.broadcast %500 : vector<1x32xf32> to vector<8x32xf32>
    %502 = arith.mulf %496, %501 : vector<8x32xf32>
    %c14_212 = arith.constant 14 : index
    %c0_213 = arith.constant 0 : index
    %503 = vector.load %arg4[%c14_212, %c0_213] : memref<16x32xf32, #tpu.memory_space<vmem>>, vector<1x32xf32>
    %504 = vector.broadcast %503 : vector<1x32xf32> to vector<8x32xf32>
    %505 = arith.mulf %496, %504 : vector<8x32xf32>
    %c15_214 = arith.constant 15 : index
    %c0_215 = arith.constant 0 : index
    %506 = vector.load %arg4[%c15_214, %c0_215] : memref<16x32xf32, #tpu.memory_space<vmem>>, vector<1x32xf32>
    %507 = vector.broadcast %506 : vector<1x32xf32> to vector<8x32xf32>
    %508 = arith.mulf %496, %507 : vector<8x32xf32>
    %509 = tpu.concatenate %499, %502, %505, %508 in 0 : vector<8x32xf32>, vector<8x32xf32>, vector<8x32xf32>, vector<8x32xf32> -> vector<32x32xf32>
    %cst_216 = arith.constant dense<0.000000e+00> : vector<32x8xf32>
    %510 = tpu.matmul %509, %496, %cst_216 {dimension_numbers = #tpu.dot_dimension_numbers<[1], [1], [0], [0], [0, 0, 1, 0], [], []>} : vector<32x32xf32>, vector<8x32xf32>, vector<32x8xf32> -> vector<32x8xf32>
    %cst_217 = arith.constant 0.353553385 : f32
    %511 = vector.broadcast %cst_217 : f32 to vector<32x8xf32>
    %512 = arith.mulf %510, %511 : vector<32x8xf32>
    %cst_218 = arith.constant dense<0xFF800000> : vector<32xf32>
    %513 = vector.multi_reduction <maximumf>, %512, %cst_218 [1] : vector<32x8xf32> to vector<32xf32>
    %514 = vector.shape_cast %513 : vector<32xf32> to vector<32x1xf32>
    %515 = vector.broadcast %514 : vector<32x1xf32> to vector<32x8xf32>
    %516 = arith.subf %512, %515 : vector<32x8xf32>
    %517 = math.exp %516 : vector<32x8xf32>
    %cst_219 = arith.constant dense<0.000000e+00> : vector<32xf32>
    %518 = vector.multi_reduction <add>, %517, %cst_219 [1] : vector<32x8xf32> to vector<32xf32>
    %519 = vector.shape_cast %518 : vector<32xf32> to vector<32x1xf32>
    %520 = tpu.reciprocal %519 {approx = true} : vector<32x1xf32> -> vector<32x1xf32>
    %521 = vector.broadcast %520 : vector<32x1xf32> to vector<32x8xf32>
    %522 = arith.mulf %517, %521 : vector<32x8xf32>
    %cst_220 = arith.constant dense<0.000000e+00> : vector<32x32xf32>
    %523 = tpu.matmul %522, %496, %cst_220 {dimension_numbers = #tpu.dot_dimension_numbers<[1], [0], [0], [1], [0, 0, 1, 1], [], []>} : vector<32x8xf32>, vector<8x32xf32>, vector<32x32xf32> -> vector<32x32xf32>
    %524 = vector.extract_strided_slice %523 {offsets = [0, 0], sizes = [8, 32], strides = [1, 1]} : vector<32x32xf32> to vector<8x32xf32>
    %c12_221 = arith.constant 12 : index
    %c0_222 = arith.constant 0 : index
    %525 = vector.load %arg5[%c12_221, %c0_222] : memref<16x32xf32, #tpu.memory_space<vmem>>, vector<1x32xf32>
    %526 = vector.broadcast %525 : vector<1x32xf32> to vector<8x32xf32>
    %527 = arith.mulf %524, %526 : vector<8x32xf32>
    %528 = vector.extract_strided_slice %523 {offsets = [8, 0], sizes = [8, 32], strides = [1, 1]} : vector<32x32xf32> to vector<8x32xf32>
    %c13_223 = arith.constant 13 : index
    %c0_224 = arith.constant 0 : index
    %529 = vector.load %arg5[%c13_223, %c0_224] : memref<16x32xf32, #tpu.memory_space<vmem>>, vector<1x32xf32>
    %530 = vector.broadcast %529 : vector<1x32xf32> to vector<8x32xf32>
    %531 = arith.mulf %528, %530 : vector<8x32xf32>
    %532 = arith.addf %527, %531 : vector<8x32xf32>
    %533 = vector.extract_strided_slice %523 {offsets = [16, 0], sizes = [8, 32], strides = [1, 1]} : vector<32x32xf32> to vector<8x32xf32>
    %c14_225 = arith.constant 14 : index
    %c0_226 = arith.constant 0 : index
    %534 = vector.load %arg5[%c14_225, %c0_226] : memref<16x32xf32, #tpu.memory_space<vmem>>, vector<1x32xf32>
    %535 = vector.broadcast %534 : vector<1x32xf32> to vector<8x32xf32>
    %536 = arith.mulf %533, %535 : vector<8x32xf32>
    %537 = arith.addf %532, %536 : vector<8x32xf32>
    %538 = vector.extract_strided_slice %523 {offsets = [24, 0], sizes = [8, 32], strides = [1, 1]} : vector<32x32xf32> to vector<8x32xf32>
    %c15_227 = arith.constant 15 : index
    %c0_228 = arith.constant 0 : index
    %539 = vector.load %arg5[%c15_227, %c0_228] : memref<16x32xf32, #tpu.memory_space<vmem>>, vector<1x32xf32>
    %540 = vector.broadcast %539 : vector<1x32xf32> to vector<8x32xf32>
    %541 = arith.mulf %538, %540 : vector<8x32xf32>
    %542 = arith.addf %537, %541 : vector<8x32xf32>
    %543 = tpu.concatenate %495, %542 in 0 : vector<8x32xf32>, vector<8x32xf32> -> vector<16x32xf32>
    %c3_229 = arith.constant 3 : index
    %c0_230 = arith.constant 0 : index
    %c0_231 = arith.constant 0 : index
    %544 = vector.load %arg6[%c3_229, %c0_230, %c0_231] : memref<4x32x32xf32, #tpu.memory_space<vmem>>, vector<1x32x32xf32>
    %545 = vector.shape_cast %544 : vector<1x32x32xf32> to vector<32x32xf32>
    %cst_232 = arith.constant dense<0.000000e+00> : vector<16x32xf32>
    %546 = tpu.matmul %448, %545, %cst_232 {dimension_numbers = #tpu.dot_dimension_numbers<[1], [0], [0], [1], [0, 0, 1, 1], [], []>} : vector<16x32xf32>, vector<32x32xf32>, vector<16x32xf32> -> vector<16x32xf32>
    %cst_233 = arith.constant 5.000000e-01 : f32
    %547 = vector.broadcast %cst_233 : f32 to vector<16x32xf32>
    %548 = arith.mulf %547, %546 : vector<16x32xf32>
    %cst_234 = arith.constant 4.471500e-02 : f32
    %549 = vector.broadcast %cst_234 : f32 to vector<16x32xf32>
    %550 = arith.mulf %549, %546 : vector<16x32xf32>
    %551 = arith.mulf %550, %546 : vector<16x32xf32>
    %552 = arith.mulf %551, %546 : vector<16x32xf32>
    %553 = arith.addf %546, %552 : vector<16x32xf32>
    %cst_235 = arith.constant 0.797884583 : f32
    %554 = vector.broadcast %cst_235 : f32 to vector<16x32xf32>
    %555 = arith.mulf %554, %553 : vector<16x32xf32>
    %556 = math.tanh %555 : vector<16x32xf32>
    %cst_236 = arith.constant 1.000000e+00 : f32
    %557 = vector.broadcast %cst_236 : f32 to vector<16x32xf32>
    %558 = arith.addf %557, %556 : vector<16x32xf32>
    %559 = arith.mulf %548, %558 : vector<16x32xf32>
    %c3_237 = arith.constant 3 : index
    %c0_238 = arith.constant 0 : index
    %c0_239 = arith.constant 0 : index
    %560 = vector.load %arg7[%c3_237, %c0_238, %c0_239] : memref<4x32x32xf32, #tpu.memory_space<vmem>>, vector<1x32x32xf32>
    %561 = vector.shape_cast %560 : vector<1x32x32xf32> to vector<32x32xf32>
    %cst_240 = arith.constant dense<0.000000e+00> : vector<16x32xf32>
    %562 = tpu.matmul %559, %561, %cst_240 {dimension_numbers = #tpu.dot_dimension_numbers<[1], [0], [0], [1], [0, 0, 1, 1], [], []>} : vector<16x32xf32>, vector<32x32xf32>, vector<16x32xf32> -> vector<16x32xf32>
    %563 = arith.addf %424, %543 : vector<16x32xf32>
    %564 = arith.addf %563, %562 : vector<16x32xf32>
    %c0_241 = arith.constant 0 : index
    %c0_242 = arith.constant 0 : index
    %565 = vector.load %arg8[%c0_241, %c0_242] : memref<32x128xf32, #tpu.memory_space<vmem>>, vector<32x128xf32>
    %cst_243 = arith.constant dense<0.000000e+00> : vector<16x128xf32>
    %566 = tpu.matmul %564, %565, %cst_243 {dimension_numbers = #tpu.dot_dimension_numbers<[1], [0], [0], [1], [0, 0, 1, 1], [], []>} : vector<16x32xf32>, vector<32x128xf32>, vector<16x128xf32> -> vector<16x128xf32>
    %567 = vector.extract_strided_slice %566 {offsets = [0, 0], sizes = [8, 128], strides = [1, 1]} : vector<16x128xf32> to vector<8x128xf32>
    %c0_244 = arith.constant 0 : index
    %c0_245 = arith.constant 0 : index
    %c0_246 = arith.constant 0 : index
    %568 = vector.load %arg9[%c0_244, %c0_245, %c0_246] : memref<2x8x128xf32, #tpu.memory_space<vmem>>, vector<1x8x128xf32>
    %569 = vector.shape_cast %568 : vector<1x8x128xf32> to vector<8x128xf32>
    %570 = vector.shape_cast %567 : vector<8x128xf32> to vector<1x8x128xf32>
    tpu.vector_store %arg9[%c0_244, %c0_245, %c0_246], %570 {strides = array<i32>} : memref<2x8x128xf32, #tpu.memory_space<vmem>>, vector<1x8x128xf32>,
    %571 = vector.extract_strided_slice %566 {offsets = [8, 0], sizes = [8, 128], strides = [1, 1]} : vector<16x128xf32> to vector<8x128xf32>
    %c1_247 = arith.constant 1 : index
    %c0_248 = arith.constant 0 : index
    %c0_249 = arith.constant 0 : index
    %572 = vector.load %arg9[%c1_247, %c0_248, %c0_249] : memref<2x8x128xf32, #tpu.memory_space<vmem>>, vector<1x8x128xf32>
    %573 = vector.shape_cast %572 : vector<1x8x128xf32> to vector<8x128xf32>
    %574 = vector.shape_cast %571 : vector<8x128xf32> to vector<1x8x128xf32>
    tpu.vector_store %arg9[%c1_247, %c0_248, %c0_249], %574 {strides = array<i32>} : memref<2x8x128xf32, #tpu.memory_space<vmem>>, vector<1x8x128xf32>,
    return
  }
  func.func @transform_0(%arg0: i32) -> (i32, i32, i32) {
    %c0_i32 = arith.constant 0 : i32
    %c0_i32_0 = arith.constant 0 : i32
    %c0_i32_1 = arith.constant 0 : i32
    return %arg0, %c0_i32, %c0_i32_0 : i32, i32, i32
  }
  func.func @transform_1(%arg0: i32) -> (i32, i32) {
    %c0_i32 = arith.constant 0 : i32
    %c0_i32_0 = arith.constant 0 : i32
    %c0_i32_1 = arith.constant 0 : i32
    return %c0_i32, %c0_i32_0 : i32, i32
  }
  func.func @transform_2(%arg0: i32) -> (i32, i32) {
    %c0_i32 = arith.constant 0 : i32
    %c0_i32_0 = arith.constant 0 : i32
    %c0_i32_1 = arith.constant 0 : i32
    return %c0_i32, %c0_i32_0 : i32, i32
  }
  func.func @transform_3(%arg0: i32) -> (i32, i32) {
    %c0_i32 = arith.constant 0 : i32
    %c0_i32_0 = arith.constant 0 : i32
    %c0_i32_1 = arith.constant 0 : i32
    return %c0_i32, %c0_i32_0 : i32, i32
  }
  func.func @transform_4(%arg0: i32) -> (i32, i32) {
    %c0_i32 = arith.constant 0 : i32
    %c0_i32_0 = arith.constant 0 : i32
    %c0_i32_1 = arith.constant 0 : i32
    return %c0_i32, %c0_i32_0 : i32, i32
  }
  func.func @transform_5(%arg0: i32) -> (i32, i32, i32) {
    %c0_i32 = arith.constant 0 : i32
    %c0_i32_0 = arith.constant 0 : i32
    %c0_i32_1 = arith.constant 0 : i32
    %c0_i32_2 = arith.constant 0 : i32
    return %c0_i32, %c0_i32_0, %c0_i32_1 : i32, i32, i32
  }
  func.func @transform_6(%arg0: i32) -> (i32, i32, i32) {
    %c0_i32 = arith.constant 0 : i32
    %c0_i32_0 = arith.constant 0 : i32
    %c0_i32_1 = arith.constant 0 : i32
    %c0_i32_2 = arith.constant 0 : i32
    return %c0_i32, %c0_i32_0, %c0_i32_1 : i32, i32, i32
  }
  func.func @transform_7(%arg0: i32) -> (i32, i32) {
    %c0_i32 = arith.constant 0 : i32
    %c0_i32_0 = arith.constant 0 : i32
    %c0_i32_1 = arith.constant 0 : i32
    return %c0_i32, %c0_i32_0 : i32, i32
  }
  func.func @transform_8(%arg0: i32) -> (i32, i32, i32) {
    %c0_i32 = arith.constant 0 : i32
    %c0_i32_0 = arith.constant 0 : i32
    %c0_i32_1 = arith.constant 0 : i32
    return %arg0, %c0_i32, %c0_i32_0 : i32, i32, i32
  }
}

</mosaic_0001>

<llo_original>
// kernel: tpu_custom_call.1
$region0: #{tpu_custom_call.1}
  #allocation0 [shape = 'u32[]', space=smem, size = 0x4, offset = 0x4, fixed_abs, tag = 'smem constant byte address 0x4 - core index']
  #allocation1 [shape = 'u32[144,128]{1,0:T(1,128)}', space=vmem, size = 0x12000, scoped, tag = 'internal scratch']
  %s0 = inlined_call_operand.hbm [shape: f32[2,8,32], index: 0, kind: input, shape index: {}]
  %s1 = inlined_call_operand.hbm [shape: f32[4,32], index: 1, kind: input, shape index: {}]
  %s2 = inlined_call_operand.vmem [shape: f32[4,32], index: 2, kind: input, shape index: {}]
  %s3 = inlined_call_operand.hbm [shape: f32[16,32], index: 3, kind: input, shape index: {}]
  %s4 = inlined_call_operand.hbm [shape: f32[16,32], index: 4, kind: input, shape index: {}]
  %s5 = inlined_call_operand.hbm [shape: f32[4,32,32], index: 5, kind: input, shape index: {}]
  %s6 = inlined_call_operand.hbm [shape: f32[4,32,32], index: 6, kind: input, shape index: {}]
  %s7 = inlined_call_operand.hbm [shape: f32[32,128], index: 7, kind: input, shape index: {}]
  %s8 = inlined_call_operand.hbm [shape: f32[2,8,128], index: 8, kind: output, shape index: {}]
  %s9 = sld [smem:[#allocation0]]
  $region70: #{tpu_custom_call.1} parent=0
    _
  %s11 = ssub.s32 1, %s9
  %s12 = scalar_select 0, %s11, %s9
  $region1: #{tpu_custom_call.1} parent=0
    #allocation2 [shape = 'u8[8192]{0}', space=vmem, size = 0x2000, scoped, tag = 'input window, operand 0, single buffered']
    #allocation3 [shape = 's32[1]{0}', space=sflag, size = 0x4, scoped, tag = 'scoped memory for tpu_custom_call.1']
    #allocation4 [shape = 's32[1]{0}', space=sflag, size = 0x4, scoped, tag = 'scoped memory for tpu_custom_call.1']
    #allocation5 [shape = 'u8[2048]{0}', space=vmem, size = 0x800, scoped, tag = 'input window, operand 1, single buffered']
    #allocation6 [shape = 's32[1]{0}', space=sflag, size = 0x4, scoped, tag = 'scoped memory for tpu_custom_call.1']
    #allocation7 [shape = 'u8[8192]{0}', space=vmem, size = 0x2000, scoped, tag = 'input window, operand 3, single buffered']
    #allocation8 [shape = 'u8[8192]{0}', space=vmem, size = 0x2000, scoped, tag = 'input window, operand 4, single buffered']
    #allocation9 [shape = 's32[1]{0}', space=sflag, size = 0x4, scoped, tag = 'scoped memory for tpu_custom_call.1']
    #allocation10 [shape = 'u8[65536]{0}', space=vmem, size = 0x10000, scoped, tag = 'input window, operand 5, single buffered']
    #allocation11 [shape = 'u8[65536]{0}', space=vmem, size = 0x10000, scoped, tag = 'input window, operand 6, single buffered']
    #allocation12 [shape = 's32[1]{0}', space=sflag, size = 0x4, scoped, tag = 'scoped memory for tpu_custom_call.1']
    #allocation13 [shape = 'u8[16384]{0}', space=vmem, size = 0x4000, scoped, tag = 'input window, operand 7, single buffered']
    #allocation14 [shape = 'u8[8192]{0}', space=vmem, size = 0x2000, scoped, tag = 'output window, operand 0, single buffered']
    %13 = vsyncpa [#allocation3], 0
    %14 = vsyncpa [#allocation6], 0
    %15 = vsyncpa [#allocation9], 0
    %16 = vsyncpa [#allocation12], 0
    %17 = vsyncpa [#allocation4], 0
    // Predicated region
    $region2: #{tpu_custom_call.1} parent=1 // pred_check
      _
    $region3: #{tpu_custom_call.1} parent=1 // pred_check_branch
      %19 = sbr.rel (0) target = $region5
    $region4: #{tpu_custom_call.1} parent=1 // pred_region
      %s21 = ssub.s32 256, 256
      %22 = vsyncadd [#allocation3], %s21
      %s23 = sshll.u32 [#allocation2], 4
      %s24 = int_to_ptr.vmem [resolvable:$true] %s23
      %29 = dma.hbm_to_vmem [thread:$0]  %s0, 256, %s24, [#allocation3], 128, 128, 8
    $region5: #{tpu_custom_call.1} parent=1 // pred_fallthru
      _
    // Predicated region
    $region6: #{tpu_custom_call.1} parent=1 // pred_check
      _
    $region7: #{tpu_custom_call.1} parent=1 // pred_check_branch
      %31 = sbr.rel (0) target = $region9
    $region8: #{tpu_custom_call.1} parent=1 // pred_region
      %s33 = ssub.s32 64, 64
      %34 = vsyncadd [#allocation6], %s33
      %s36 = sshll.u32 [#allocation5], 4
      %s37 = int_to_ptr.vmem [resolvable:$true] %s36
      %39 = dma.hbm_to_vmem [thread:$0]  %s1, 64, %s37, [#allocation6]
    $region9: #{tpu_custom_call.1} parent=1 // pred_fallthru
      _
    // Predicated region
    $region10: #{tpu_custom_call.1} parent=1 // pred_check
      _
    $region11: #{tpu_custom_call.1} parent=1 // pred_check_branch
      %41 = sbr.rel (0) target = $region13
    $region12: #{tpu_custom_call.1} parent=1 // pred_region
      _
    $region13: #{tpu_custom_call.1} parent=1 // pred_fallthru
      _
    // Predicated region
    $region14: #{tpu_custom_call.1} parent=1 // pred_check
      _
    $region15: #{tpu_custom_call.1} parent=1 // pred_check_branch
      %43 = sbr.rel (0) target = $region17
    $region16: #{tpu_custom_call.1} parent=1 // pred_region
      %s45 = ssub.s32 256, 256
      %46 = vsyncadd [#allocation6], %s45
      %s47 = sshll.u32 [#allocation7], 4
      %s48 = int_to_ptr.vmem [resolvable:$true] %s47
      %53 = dma.hbm_to_vmem [thread:$0]  %s3, 256, %s48, [#allocation6], 128, 128, 8
    $region17: #{tpu_custom_call.1} parent=1 // pred_fallthru
      _
    // Predicated region
    $region18: #{tpu_custom_call.1} parent=1 // pred_check
      _
    $region19: #{tpu_custom_call.1} parent=1 // pred_check_branch
      %55 = sbr.rel (0) target = $region21
    $region20: #{tpu_custom_call.1} parent=1 // pred_region
      %s57 = ssub.s32 256, 256
      %58 = vsyncadd [#allocation9], %s57
      %s59 = sshll.u32 [#allocation8], 4
      %s60 = int_to_ptr.vmem [resolvable:$true] %s59
      %65 = dma.hbm_to_vmem [thread:$0]  %s4, 256, %s60, [#allocation9], 128, 128, 8
    $region21: #{tpu_custom_call.1} parent=1 // pred_fallthru
      _
    // Predicated region
    $region22: #{tpu_custom_call.1} parent=1 // pred_check
      _
    $region23: #{tpu_custom_call.1} parent=1 // pred_check_branch
      %67 = sbr.rel (0) target = $region25
    $region24: #{tpu_custom_call.1} parent=1 // pred_region
      %s69 = ssub.s32 2048, 2048
      %70 = vsyncadd [#allocation9], %s69
      %s71 = sshll.u32 [#allocation10], 4
      %s72 = int_to_ptr.vmem [resolvable:$true] %s71
      %77 = dma.hbm_to_vmem [thread:$0]  %s5, 2048, %s72, [#allocation9], 128, 128, 8
    $region25: #{tpu_custom_call.1} parent=1 // pred_fallthru
      _
    // Predicated region
    $region26: #{tpu_custom_call.1} parent=1 // pred_check
      _
    $region27: #{tpu_custom_call.1} parent=1 // pred_check_branch
      %79 = sbr.rel (0) target = $region29
    $region28: #{tpu_custom_call.1} parent=1 // pred_region
      %s81 = ssub.s32 2048, 2048
      %82 = vsyncadd [#allocation12], %s81
      %s83 = sshll.u32 [#allocation11], 4
      %s84 = int_to_ptr.vmem [resolvable:$true] %s83
      %89 = dma.hbm_to_vmem [thread:$0]  %s6, 2048, %s84, [#allocation12], 128, 128, 8
    $region29: #{tpu_custom_call.1} parent=1 // pred_fallthru
      _
    // Predicated region
    $region30: #{tpu_custom_call.1} parent=1 // pred_check
      _
    $region31: #{tpu_custom_call.1} parent=1 // pred_check_branch
      %91 = sbr.rel (0) target = $region33
    $region32: #{tpu_custom_call.1} parent=1 // pred_region
      %s93 = ssub.s32 512, 512
      %94 = vsyncadd [#allocation12], %s93
      %s95 = sshll.u32 [#allocation13], 4
      %s96 = int_to_ptr.vmem [resolvable:$true] %s95
      %101 = dma.hbm_to_vmem [thread:$0]  %s7, 512, %s96, [#allocation12], 128, 128, 8
    $region33: #{tpu_custom_call.1} parent=1 // pred_fallthru
      _
    // Predicated region
    $region34: #{tpu_custom_call.1} parent=1 // pred_check
      _
    $region35: #{tpu_custom_call.1} parent=1 // pred_check_branch
      %103 = sbr.rel (0) target = $region37
    $region36: #{tpu_custom_call.1} parent=1 // pred_region
      %104 = dma.done [#allocation3], 256
    $region37: #{tpu_custom_call.1} parent=1 // pred_fallthru
      _
    // Predicated region
    $region38: #{tpu_custom_call.1} parent=1 // pred_check
      _
    $region39: #{tpu_custom_call.1} parent=1 // pred_check_branch
      %106 = sbr.rel (0) target = $region41
    $region40: #{tpu_custom_call.1} parent=1 // pred_region
      %107 = dma.done [#allocation6], 64
    $region41: #{tpu_custom_call.1} parent=1 // pred_fallthru
      _
    // Predicated region
    $region42: #{tpu_custom_call.1} parent=1 // pred_check
      _
    $region43: #{tpu_custom_call.1} parent=1 // pred_check_branch
      %109 = sbr.rel (0) target = $region45
    $region44: #{tpu_custom_call.1} parent=1 // pred_region
      %110 = dma.done [#allocation6], 256
    $region45: #{tpu_custom_call.1} parent=1 // pred_fallthru
      _
    // Predicated region
    $region46: #{tpu_custom_call.1} parent=1 // pred_check
      _
    $region47: #{tpu_custom_call.1} parent=1 // pred_check_branch
      %112 = sbr.rel (0) target = $region49
    $region48: #{tpu_custom_call.1} parent=1 // pred_region
      %113 = dma.done [#allocation9], 256
    $region49: #{tpu_custom_call.1} parent=1 // pred_fallthru
      _
    // Predicated region
    $region50: #{tpu_custom_call.1} parent=1 // pred_check
      _
    $region51: #{tpu_custom_call.1} parent=1 // pred_check_branch
      %115 = sbr.rel (0) target = $region53
    $region52: #{tpu_custom_call.1} parent=1 // pred_region
      %116 = dma.done [#allocation9], 2048
    $region53: #{tpu_custom_call.1} parent=1 // pred_fallthru
      _
    // Predicated region
    $region54: #{tpu_custom_call.1} parent=1 // pred_check
      _
    $region55: #{tpu_custom_call.1} parent=1 // pred_check_branch
      %118 = sbr.rel (0) target = $region57
    $region56: #{tpu_custom_call.1} parent=1 // pred_region
      %119 = dma.done [#allocation12], 2048
    $region57: #{tpu_custom_call.1} parent=1 // pred_fallthru
      _
    // Predicated region
    $region58: #{tpu_custom_call.1} parent=1 // pred_check
      _
    $region59: #{tpu_custom_call.1} parent=1 // pred_check_branch
      %121 = sbr.rel (0) target = $region61
    $region60: #{tpu_custom_call.1} parent=1 // pred_region
      %122 = dma.done [#allocation12], 512
    $region61: #{tpu_custom_call.1} parent=1 // pred_fallthru
      _
    %v123 = vld [vmem:[#allocation2] sm:$0xff]
    %s124 = scalar_lea.vmem [#allocation2], 8
    %v125 = vld [vmem:[%s124] sm:$0xff]
    %vm126 = vcmask 261120
    %v127 = vsel %vm126, %v123, 0.0
    %128 = vadd.xlane.f32.xlu0 %v127
    %v129 = vpop.xlane.xlu0 %128
    %v130 = vsel %vm126, %v125, 0.0
    %131 = vadd.xlane.f32.xlu0 %v130
    %v132 = vpop.xlane.xlu0 %131
    %v133 = vrcp.pop 32.0
    %v134 = vmul.f32 %v129, %v133
    %v135 = vmul.f32 %v132, %v133
    %v136 = vsub.f32 %v123, %v134
    %v137 = vsub.f32 %v125, %v135
    %v138 = vmul.f32 %v136, %v136
    %v139 = vmul.f32 %v137, %v137
    %v140 = vsel %vm126, %v138, 0.0
    %141 = vadd.xlane.f32.xlu0 %v140
    %v142 = vpop.xlane.xlu0 %141
    %v143 = vsel %vm126, %v139, 0.0
    %144 = vadd.xlane.f32.xlu0 %v143
    %v145 = vpop.xlane.xlu0 %144
    %v146 = vmul.f32 %v142, %v133
    %v147 = vmul.f32 %v145, %v133
    %v148 = vadd.f32 %v146, 1e-05
    %v149 = vadd.f32 %v147, 1e-05
    %v150 = vrsqrt.pop %v148
    %v151 = vrsqrt.pop %v149
    %v152 = vmul.f32 %v136, %v150
    %v153 = vmul.f32 %v137, %v151
    %v154 = vld [vmem:[#allocation5] sm:$0x1]
    %v155 = vlaneseq
    %v156 = vshrl.u32 %v155, 7
    %v157 = vsub.s32 0, %v156
    %v158 = vrot.slane %v154, %v157
    %v159 = vmul.f32 %v152, %v158
    %v160 = vmul.f32 %v153, %v158
    %v161 = vld [vmem:[%s2] sm:$0x1]
    %v162 = vlaneseq
    %v163 = vshrl.u32 %v162, 7
    %v164 = vsub.s32 0, %v163
    %v165 = vrot.slane %v161, %v164
    %v166 = vadd.f32 %v159, %v165
    %v167 = vadd.f32 %v160, %v165
    %v168 = vld [vmem:[#allocation7] sm:$0x1]
    %v169 = vlaneseq
    %v170 = vshrl.u32 %v169, 7
    %v171 = vsub.s32 0, %v170
    %v172 = vrot.slane %v168, %v171
    %v173 = vmul.f32 %v166, %v172
    %v174 = vld [vmem:[#allocation7 + $0x1] sm:$0x1]
    %v175 = vlaneseq
    %v176 = vshrl.u32 %v175, 7
    %v177 = vsub.s32 0, %v176
    %v178 = vrot.slane %v174, %v177
    %v179 = vmul.f32 %v166, %v178
    %v180 = vld [vmem:[#allocation7 + $0x2] sm:$0x1]
    %v181 = vlaneseq
    %v182 = vshrl.u32 %v181, 7
    %v183 = vsub.s32 0, %v182
    %v184 = vrot.slane %v180, %v183
    %v185 = vmul.f32 %v166, %v184
    %v186 = vld [vmem:[#allocation7 + $0x3] sm:$0x1]
    %v187 = vlaneseq
    %v188 = vshrl.u32 %v187, 7
    %v189 = vsub.s32 0, %v188
    %v190 = vrot.slane %v186, %v189
    %v191 = vmul.f32 %v166, %v190
    %v193 = vsel %vm126, %v173, 0
    %v196 = vsel %vm126, %v179, 0
    %v199 = vsel %vm126, %v185, 0
    %v202 = vsel %vm126, %v191, 0
    %v205 = vsel %vm126, %v166, 0
    %207 = vmatprep.subr.mxu0 0.0
    %208 = vmatpush1.xpose.msra.mxu0 %v205
    %209 = vmatprep.subr.mxu0 0.0
    %210 = vmatpush1.xpose.msra.mxu0 0.0
    %211 = vmatprep.subr.mxu0 0.0
    %212 = vmatpush1.xpose.msra.mxu0 0.0
    %213 = vmatprep.subr.mxu0 0.0
    %214 = vmatpush1.xpose.msra.mxu0 0.0
    %215 = vmatprep.subr.mxu0 0.0
    %216 = vmatpush1.xpose.msra.mxu0 0.0
    %217 = vmatprep.subr.mxu0 0.0
    %218 = vmatpush1.xpose.msra.mxu0 0.0
    %219 = vmatprep.subr.mxu0 0.0
    %220 = vmatpush1.xpose.msra.mxu0 0.0
    %221 = vmatprep.subr.mxu0 0.0
    %222 = vmatpush1.xpose.msra.mxu0 0.0
    %223 = vmatprep.subr.mxu0 0.0
    %224 = vmatpush1.xpose.msra.mxu0 0.0
    %225 = vmatprep.subr.mxu0 0.0
    %226 = vmatpush1.xpose.msra.mxu0 0.0
    %227 = vmatprep.subr.mxu0 0.0
    %228 = vmatpush1.xpose.msra.mxu0 0.0
    %229 = vmatprep.subr.mxu0 0.0
    %230 = vmatpush1.xpose.msra.mxu0 0.0
    %231 = vmatprep.subr.mxu0 0.0
    %232 = vmatpush1.xpose.msra.mxu0 0.0
    %233 = vmatprep.subr.mxu0 0.0
    %234 = vmatpush1.xpose.msra.mxu0 0.0
    %235 = vmatprep.subr.mxu0 0.0
    %236 = vmatpush1.xpose.msra.mxu0 0.0
    %237 = vmatprep.subr.mxu0 0.0
    %238 = vmatpush1.xpose.msra.mxu0 0.0
    %239 = vmatprep.subr.mxu0 0.0
    %240 = vmatpush1.xpose.msra.mxu0 0.0
    %241 = vmatprep.subr.mxu0 0.0
    %242 = vmatpush1.xpose.msra.mxu0 0.0
    %243 = vmatprep.subr.mxu0 0.0
    %244 = vmatpush1.xpose.msra.mxu0 0.0
    %245 = vmatprep.subr.mxu0 0.0
    %246 = vmatpush1.xpose.msra.mxu0 0.0
    %247 = vmatprep.subr.mxu0 0.0
    %248 = vmatpush1.xpose.msra.mxu0 0.0
    %249 = vmatprep.subr.mxu0 0.0
    %250 = vmatpush1.xpose.msra.mxu0 0.0
    %251 = vmatprep.subr.mxu0 0.0
    %252 = vmatpush1.xpose.msra.mxu0 0.0
    %253 = vmatprep.subr.mxu0 0.0
    %254 = vmatpush1.xpose.msra.mxu0 0.0
    %255 = vmatprep.subr.mxu0 0.0
    %256 = vmatpush1.xpose.msra.mxu0 0.0
    %257 = vmatprep.subr.mxu0 0.0
    %258 = vmatpush1.xpose.msra.mxu0 0.0
    %259 = vmatprep.subr.mxu0 0.0
    %260 = vmatpush1.xpose.msra.mxu0 0.0
    %261 = vmatprep.subr.mxu0 0.0
    %262 = vmatpush1.xpose.msra.mxu0 0.0
    %263 = vmatprep.subr.mxu0 0.0
    %264 = vmatpush1.xpose.msra.mxu0 0.0
    %265 = vmatprep.subr.mxu0 0.0
    %266 = vmatpush1.xpose.msra.mxu0 0.0
    %267 = vmatprep.subr.mxu0 0.0
    %268 = vmatpush1.xpose.msra.mxu0 0.0
    %269 = vmatprep.subr.mxu0 0.0
    %270 = vmatpush1.xpose.msra.mxu0 0.0
    %271 = vmatprep.mubr.f32.mxu0 0.0
    %272 = vmatmul.mubr.f32.gmra.mrb[0].mxu0 %v193
    %v273 = vpop.f32.mrb[0].mxu0
    %v274 = vadd.f32 0.0, %v273
    %v275 = vpop.f32.mrb[0].mxu0
    %276 = vmatprep.mubr.f32.mxu0 0.0
    %277 = vmatmul.mubr.f32.gmra.mrb[0].mxu0 %v196
    %v278 = vpop.f32.mrb[0].mxu0
    %v279 = vadd.f32 0.0, %v278
    %v280 = vpop.f32.mrb[0].mxu0
    %281 = vmatprep.mubr.f32.mxu0 0.0
    %282 = vmatmul.mubr.f32.gmra.mrb[0].mxu0 %v199
    %v283 = vpop.f32.mrb[0].mxu0
    %v284 = vadd.f32 0.0, %v283
    %v285 = vpop.f32.mrb[0].mxu0
    %286 = vmatprep.mubr.f32.mxu0 0.0
    %287 = vmatmul.mubr.f32.gmra.mrb[0].mxu0 %v202
    %v288 = vpop.f32.mrb[0].mxu0
    %v289 = vadd.f32 0.0, %v288
    %v290 = vpop.f32.mrb[0].mxu0
    %291 = vdwg.mxu0
    %v292 = vmul.f32 %v274, 0.35355338
    %v293 = vmul.f32 %v279, 0.35355338
    %v294 = vmul.f32 %v284, 0.35355338
    %v295 = vmul.f32 %v289, 0.35355338
    %vm296 = vcmask 64512
    %v297 = vsel %vm296, %v292, -inf
    %298 = vmax.xlane.f32.xlu0 %v297
    %v299 = vpop.xlane.xlu0 %298
    %v300 = vsel %vm296, %v293, -inf
    %301 = vmax.xlane.f32.xlu0 %v300
    %v302 = vpop.xlane.xlu0 %301
    %v303 = vsel %vm296, %v294, -inf
    %304 = vmax.xlane.f32.xlu0 %v303
    %v305 = vpop.xlane.xlu0 %304
    %v306 = vsel %vm296, %v295, -inf
    %307 = vmax.xlane.f32.xlu0 %v306
    %v308 = vpop.xlane.xlu0 %307
    %v309 = vsub.f32 %v292, %v299
    %v310 = vsub.f32 %v293, %v302
    %v311 = vsub.f32 %v294, %v305
    %v312 = vsub.f32 %v295, %v308
    %v313 = vmul.f32 %v309, 1.442695
    %v314 = vpow.pop %v313
    %v315 = vmul.f32 %v310, 1.442695
    %v316 = vpow.pop %v315
    %v317 = vmul.f32 %v311, 1.442695
    %v318 = vpow.pop %v317
    %v319 = vmul.f32 %v312, 1.442695
    %v320 = vpow.pop %v319
    %v321 = vsel %vm296, %v314, 0.0
    %322 = vadd.xlane.f32.xlu0 %v321
    %v323 = vpop.xlane.xlu0 %322
    %v324 = vsel %vm296, %v316, 0.0
    %325 = vadd.xlane.f32.xlu0 %v324
    %v326 = vpop.xlane.xlu0 %325
    %v327 = vsel %vm296, %v318, 0.0
    %328 = vadd.xlane.f32.xlu0 %v327
    %v329 = vpop.xlane.xlu0 %328
    %v330 = vsel %vm296, %v320, 0.0
    %331 = vadd.xlane.f32.xlu0 %v330
    %v332 = vpop.xlane.xlu0 %331
    %v333 = vrcp.pop %v323
    %v334 = vrcp.pop %v326
    %v335 = vrcp.pop %v329
    %v336 = vrcp.pop %v332
    %v337 = vmul.f32 %v314, %v333
    %v338 = vmul.f32 %v316, %v334
    %v339 = vmul.f32 %v318, %v335
    %v340 = vmul.f32 %v320, %v336
    %v342 = vsel %vm296, %v337, 0
    %v345 = vsel %vm296, %v338, 0
    %v348 = vsel %vm296, %v339, 0
    %v351 = vsel %vm296, %v340, 0
    %353 = vmatprep.subr.mxu0 0.0
    %354 = vmatpush1.msra.mxu0 %v166
    %355 = vmatprep.subr.mxu0 0.0
    %356 = vmatpush1.msra.mxu0 0.0
    %357 = vmatprep.subr.mxu0 0.0
    %358 = vmatpush1.msra.mxu0 0.0
    %359 = vmatprep.subr.mxu0 0.0
    %360 = vmatpush1.msra.mxu0 0.0
    %361 = vmatprep.subr.mxu0 0.0
    %362 = vmatpush1.msra.mxu0 0.0
    %363 = vmatprep.subr.mxu0 0.0
    %364 = vmatpush1.msra.mxu0 0.0
    %365 = vmatprep.subr.mxu0 0.0
    %366 = vmatpush1.msra.mxu0 0.0
    %367 = vmatprep.subr.mxu0 0.0
    %368 = vmatpush1.msra.mxu0 0.0
    %369 = vmatprep.subr.mxu0 0.0
    %370 = vmatpush1.msra.mxu0 0.0
    %371 = vmatprep.subr.mxu0 0.0
    %372 = vmatpush1.msra.mxu0 0.0
    %373 = vmatprep.subr.mxu0 0.0
    %374 = vmatpush1.msra.mxu0 0.0
    %375 = vmatprep.subr.mxu0 0.0
    %376 = vmatpush1.msra.mxu0 0.0
    %377 = vmatprep.subr.mxu0 0.0
    %378 = vmatpush1.msra.mxu0 0.0
    %379 = vmatprep.subr.mxu0 0.0
    %380 = vmatpush1.msra.mxu0 0.0
    %381 = vmatprep.subr.mxu0 0.0
    %382 = vmatpush1.msra.mxu0 0.0
    %383 = vmatprep.subr.mxu0 0.0
    %384 = vmatpush1.msra.mxu0 0.0
    %385 = vmatprep.subr.mxu0 0.0
    %386 = vmatpush1.msra.mxu0 0.0
    %387 = vmatprep.subr.mxu0 0.0
    %388 = vmatpush1.msra.mxu0 0.0
    %389 = vmatprep.subr.mxu0 0.0
    %390 = vmatpush1.msra.mxu0 0.0
    %391 = vmatprep.subr.mxu0 0.0
    %392 = vmatpush1.msra.mxu0 0.0
    %393 = vmatprep.subr.mxu0 0.0
    %394 = vmatpush1.msra.mxu0 0.0
    %395 = vmatprep.subr.mxu0 0.0
    %396 = vmatpush1.msra.mxu0 0.0
    %397 = vmatprep.subr.mxu0 0.0
    %398 = vmatpush1.msra.mxu0 0.0
    %399 = vmatprep.subr.mxu0 0.0
    %400 = vmatpush1.msra.mxu0 0.0
    %401 = vmatprep.subr.mxu0 0.0
    %402 = vmatpush1.msra.mxu0 0.0
    %403 = vmatprep.subr.mxu0 0.0
    %404 = vmatpush1.msra.mxu0 0.0
    %405 = vmatprep.subr.mxu0 0.0
    %406 = vmatpush1.msra.mxu0 0.0
    %407 = vmatprep.subr.mxu0 0.0
    %408 = vmatpush1.msra.mxu0 0.0
    %409 = vmatprep.subr.mxu0 0.0
    %410 = vmatpush1.msra.mxu0 0.0
    %411 = vmatprep.subr.mxu0 0.0
    %412 = vmatpush1.msra.mxu0 0.0
    %413 = vmatprep.subr.mxu0 0.0
    %414 = vmatpush1.msra.mxu0 0.0
    %415 = vmatprep.subr.mxu0 0.0
    %416 = vmatpush1.msra.mxu0 0.0
    %417 = vmatprep.mubr.f32.mxu0 0.0
    %418 = vmatmul.mubr.f32.gmra.mrb[0].mxu0 %v342
    %v419 = vpop.f32.mrb[0].mxu0
    %v420 = vadd.f32 0.0, %v419
    %v421 = vpop.f32.mrb[0].mxu0
    %422 = vmatprep.mubr.f32.mxu0 0.0
    %423 = vmatmul.mubr.f32.gmra.mrb[0].mxu0 %v345
    %v424 = vpop.f32.mrb[0].mxu0
    %v425 = vadd.f32 0.0, %v424
    %v426 = vpop.f32.mrb[0].mxu0
    %427 = vmatprep.mubr.f32.mxu0 0.0
    %428 = vmatmul.mubr.f32.gmra.mrb[0].mxu0 %v348
    %v429 = vpop.f32.mrb[0].mxu0
    %v430 = vadd.f32 0.0, %v429
    %v431 = vpop.f32.mrb[0].mxu0
    %432 = vmatprep.mubr.f32.mxu0 0.0
    %433 = vmatmul.mubr.f32.gmra.mrb[0].mxu0 %v351
    %v434 = vpop.f32.mrb[0].mxu0
    %v435 = vadd.f32 0.0, %v434
    %v436 = vpop.f32.mrb[0].mxu0
    %437 = vdwg.mxu0
    %v438 = vld [vmem:[#allocation8] sm:$0x1]
    %v439 = vlaneseq
    %v440 = vshrl.u32 %v439, 7
    %v441 = vsub.s32 0, %v440
    %v442 = vrot.slane %v438, %v441
    %v443 = vmul.f32 %v420, %v442
    %v444 = vld [vmem:[#allocation8 + $0x1] sm:$0x1]
    %v445 = vlaneseq
    %v446 = vshrl.u32 %v445, 7
    %v447 = vsub.s32 0, %v446
    %v448 = vrot.slane %v444, %v447
    %v449 = vmul.f32 %v425, %v448
    %v450 = vadd.f32 %v443, %v449
    %v451 = vld [vmem:[#allocation8 + $0x2] sm:$0x1]
    %v452 = vlaneseq
    %v453 = vshrl.u32 %v452, 7
    %v454 = vsub.s32 0, %v453
    %v455 = vrot.slane %v451, %v454
    %v456 = vmul.f32 %v430, %v455
    %v457 = vadd.f32 %v450, %v456
    %v458 = vld [vmem:[#allocation8 + $0x3] sm:$0x1]
    %v459 = vlaneseq
    %v460 = vshrl.u32 %v459, 7
    %v461 = vsub.s32 0, %v460
    %v462 = vrot.slane %v458, %v461
    %v463 = vmul.f32 %v435, %v462
    %v464 = vadd.f32 %v457, %v463
    %v465 = vmul.f32 %v167, %v172
    %v466 = vmul.f32 %v167, %v178
    %v467 = vmul.f32 %v167, %v184
    %v468 = vmul.f32 %v167, %v190
    %v470 = vsel %vm126, %v465, 0
    %v473 = vsel %vm126, %v466, 0
    %v476 = vsel %vm126, %v467, 0
    %v479 = vsel %vm126, %v468, 0
    %v482 = vsel %vm126, %v167, 0
    %484 = vmatprep.subr.mxu0 0.0
    %485 = vmatpush1.xpose.msra.mxu0 %v482
    %486 = vmatprep.subr.mxu0 0.0
    %487 = vmatpush1.xpose.msra.mxu0 0.0
    %488 = vmatprep.subr.mxu0 0.0
    %489 = vmatpush1.xpose.msra.mxu0 0.0
    %490 = vmatprep.subr.mxu0 0.0
    %491 = vmatpush1.xpose.msra.mxu0 0.0
    %492 = vmatprep.subr.mxu0 0.0
    %493 = vmatpush1.xpose.msra.mxu0 0.0
    %494 = vmatprep.subr.mxu0 0.0
    %495 = vmatpush1.xpose.msra.mxu0 0.0
    %496 = vmatprep.subr.mxu0 0.0
    %497 = vmatpush1.xpose.msra.mxu0 0.0
    %498 = vmatprep.subr.mxu0 0.0
    %499 = vmatpush1.xpose.msra.mxu0 0.0
    %500 = vmatprep.subr.mxu0 0.0
    %501 = vmatpush1.xpose.msra.mxu0 0.0
    %502 = vmatprep.subr.mxu0 0.0
    %503 = vmatpush1.xpose.msra.mxu0 0.0
    %504 = vmatprep.subr.mxu0 0.0
    %505 = vmatpush1.xpose.msra.mxu0 0.0
    %506 = vmatprep.subr.mxu0 0.0
    %507 = vmatpush1.xpose.msra.mxu0 0.0
    %508 = vmatprep.subr.mxu0 0.0
    %509 = vmatpush1.xpose.msra.mxu0 0.0
    %510 = vmatprep.subr.mxu0 0.0
    %511 = vmatpush1.xpose.msra.mxu0 0.0
    %512 = vmatprep.subr.mxu0 0.0
    %513 = vmatpush1.xpose.msra.mxu0 0.0
    %514 = vmatprep.subr.mxu0 0.0
    %515 = vmatpush1.xpose.msra.mxu0 0.0
    %516 = vmatprep.subr.mxu0 0.0
    %517 = vmatpush1.xpose.msra.mxu0 0.0
    %518 = vmatprep.subr.mxu0 0.0
    %519 = vmatpush1.xpose.msra.mxu0 0.0
    %520 = vmatprep.subr.mxu0 0.0
    %521 = vmatpush1.xpose.msra.mxu0 0.0
    %522 = vmatprep.subr.mxu0 0.0
    %523 = vmatpush1.xpose.msra.mxu0 0.0
    %524 = vmatprep.subr.mxu0 0.0
    %525 = vmatpush1.xpose.msra.mxu0 0.0
    %526 = vmatprep.subr.mxu0 0.0
    %527 = vmatpush1.xpose.msra.mxu0 0.0
    %528 = vmatprep.subr.mxu0 0.0
    %529 = vmatpush1.xpose.msra.mxu0 0.0
    %530 = vmatprep.subr.mxu0 0.0
    %531 = vmatpush1.xpose.msra.mxu0 0.0
    %532 = vmatprep.subr.mxu0 0.0
    %533 = vmatpush1.xpose.msra.mxu0 0.0
    %534 = vmatprep.subr.mxu0 0.0
    %535 = vmatpush1.xpose.msra.mxu0 0.0
    %536 = vmatprep.subr.mxu0 0.0
    %537 = vmatpush1.xpose.msra.mxu0 0.0
    %538 = vmatprep.subr.mxu0 0.0
    %539 = vmatpush1.xpose.msra.mxu0 0.0
    %540 = vmatprep.subr.mxu0 0.0
    %541 = vmatpush1.xpose.msra.mxu0 0.0
    %542 = vmatprep.subr.mxu0 0.0
    %543 = vmatpush1.xpose.msra.mxu0 0.0
    %544 = vmatprep.subr.mxu0 0.0
    %545 = vmatpush1.xpose.msra.mxu0 0.0
    %546 = vmatprep.subr.mxu0 0.0
    %547 = vmatpush1.xpose.msra.mxu0 0.0
    %548 = vmatprep.mubr.f32.mxu0 0.0
    %549 = vmatmul.mubr.f32.gmra.mrb[0].mxu0 %v470
    %v550 = vpop.f32.mrb[0].mxu0
    %v551 = vadd.f32 0.0, %v550
    %v552 = vpop.f32.mrb[0].mxu0
    %553 = vmatprep.mubr.f32.mxu0 0.0
    %554 = vmatmul.mubr.f32.gmra.mrb[0].mxu0 %v473
    %v555 = vpop.f32.mrb[0].mxu0
    %v556 = vadd.f32 0.0, %v555
    %v557 = vpop.f32.mrb[0].mxu0
    %558 = vmatprep.mubr.f32.mxu0 0.0
    %559 = vmatmul.mubr.f32.gmra.mrb[0].mxu0 %v476
    %v560 = vpop.f32.mrb[0].mxu0
    %v561 = vadd.f32 0.0, %v560
    %v562 = vpop.f32.mrb[0].mxu0
    %563 = vmatprep.mubr.f32.mxu0 0.0
    %564 = vmatmul.mubr.f32.gmra.mrb[0].mxu0 %v479
    %v565 = vpop.f32.mrb[0].mxu0
    %v566 = vadd.f32 0.0, %v565
    %v567 = vpop.f32.mrb[0].mxu0
    %568 = vdwg.mxu0
    %v569 = vmul.f32 %v551, 0.35355338
    %v570 = vmul.f32 %v556, 0.35355338
    %v571 = vmul.f32 %v561, 0.35355338
    %v572 = vmul.f32 %v566, 0.35355338
    %v573 = vsel %vm296, %v569, -inf
    %574 = vmax.xlane.f32.xlu0 %v573
    %v575 = vpop.xlane.xlu0 %574
    %v576 = vsel %vm296, %v570, -inf
    %577 = vmax.xlane.f32.xlu0 %v576
    %v578 = vpop.xlane.xlu0 %577
    %v579 = vsel %vm296, %v571, -inf
    %580 = vmax.xlane.f32.xlu0 %v579
    %v581 = vpop.xlane.xlu0 %580
    %v582 = vsel %vm296, %v572, -inf
    %583 = vmax.xlane.f32.xlu0 %v582
    %v584 = vpop.xlane.xlu0 %583
    %v585 = vsub.f32 %v569, %v575
    %v586 = vsub.f32 %v570, %v578
    %v587 = vsub.f32 %v571, %v581
    %v588 = vsub.f32 %v572, %v584
    %v589 = vmul.f32 %v585, 1.442695
    %v590 = vpow.pop %v589
    %v591 = vmul.f32 %v586, 1.442695
    %v592 = vpow.pop %v591
    %v593 = vmul.f32 %v587, 1.442695
    %v594 = vpow.pop %v593
    %v595 = vmul.f32 %v588, 1.442695
    %v596 = vpow.pop %v595
    %v597 = vsel %vm296, %v590, 0.0
    %598 = vadd.xlane.f32.xlu0 %v597
    %v599 = vpop.xlane.xlu0 %598
    %v600 = vsel %vm296, %v592, 0.0
    %601 = vadd.xlane.f32.xlu0 %v600
    %v602 = vpop.xlane.xlu0 %601
    %v603 = vsel %vm296, %v594, 0.0
    %604 = vadd.xlane.f32.xlu0 %v603
    %v605 = vpop.xlane.xlu0 %604
    %v606 = vsel %vm296, %v596, 0.0
    %607 = vadd.xlane.f32.xlu0 %v606
    %v608 = vpop.xlane.xlu0 %607
    %v609 = vrcp.pop %v599
    %v610 = vrcp.pop %v602
    %v611 = vrcp.pop %v605
    %v612 = vrcp.pop %v608
    %v613 = vmul.f32 %v590, %v609
    %v614 = vmul.f32 %v592, %v610
    %v615 = vmul.f32 %v594, %v611
    %v616 = vmul.f32 %v596, %v612
    %v618 = vsel %vm296, %v613, 0
    %v621 = vsel %vm296, %v614, 0
    %v624 = vsel %vm296, %v615, 0
    %v627 = vsel %vm296, %v616, 0
    %629 = vmatprep.subr.mxu0 0.0
    %630 = vmatpush1.msra.mxu0 %v167
    %631 = vmatprep.subr.mxu0 0.0
    %632 = vmatpush1.msra.mxu0 0.0
    %633 = vmatprep.subr.mxu0 0.0
    %634 = vmatpush1.msra.mxu0 0.0
    %635 = vmatprep.subr.mxu0 0.0
    %636 = vmatpush1.msra.mxu0 0.0
    %637 = vmatprep.subr.mxu0 0.0
    %638 = vmatpush1.msra.mxu0 0.0
    %639 = vmatprep.subr.mxu0 0.0
    %640 = vmatpush1.msra.mxu0 0.0
    %641 = vmatprep.subr.mxu0 0.0
    %642 = vmatpush1.msra.mxu0 0.0
    %643 = vmatprep.subr.mxu0 0.0
    %644 = vmatpush1.msra.mxu0 0.0
    %645 = vmatprep.subr.mxu0 0.0
    %646 = vmatpush1.msra.mxu0 0.0
    %647 = vmatprep.subr.mxu0 0.0
    %648 = vmatpush1.msra.mxu0 0.0
    %649 = vmatprep.subr.mxu0 0.0
    %650 = vmatpush1.msra.mxu0 0.0
    %651 = vmatprep.subr.mxu0 0.0
    %652 = vmatpush1.msra.mxu0 0.0
    %653 = vmatprep.subr.mxu0 0.0
    %654 = vmatpush1.msra.mxu0 0.0
    %655 = vmatprep.subr.mxu0 0.0
    %656 = vmatpush1.msra.mxu0 0.0
    %657 = vmatprep.subr.mxu0 0.0
    %658 = vmatpush1.msra.mxu0 0.0
    %659 = vmatprep.subr.mxu0 0.0
    %660 = vmatpush1.msra.mxu0 0.0
    %661 = vmatprep.subr.mxu0 0.0
    %662 = vmatpush1.msra.mxu0 0.0
    %663 = vmatprep.subr.mxu0 0.0
    %664 = vmatpush1.msra.mxu0 0.0
    %665 = vmatprep.subr.mxu0 0.0
    %666 = vmatpush1.msra.mxu0 0.0
    %667 = vmatprep.subr.mxu0 0.0
    %668 = vmatpush1.msra.mxu0 0.0
    %669 = vmatprep.subr.mxu0 0.0
    %670 = vmatpush1.msra.mxu0 0.0
    %671 = vmatprep.subr.mxu0 0.0
    %672 = vmatpush1.msra.mxu0 0.0
    %673 = vmatprep.subr.mxu0 0.0
    %674 = vmatpush1.msra.mxu0 0.0
    %675 = vmatprep.subr.mxu0 0.0
    %676 = vmatpush1.msra.mxu0 0.0
    %677 = vmatprep.subr.mxu0 0.0
    %678 = vmatpush1.msra.mxu0 0.0
    %679 = vmatprep.subr.mxu0 0.0
    %680 = vmatpush1.msra.mxu0 0.0
    %681 = vmatprep.subr.mxu0 0.0
    %682 = vmatpush1.msra.mxu0 0.0
    %683 = vmatprep.subr.mxu0 0.0
    %684 = vmatpush1.msra.mxu0 0.0
    %685 = vmatprep.subr.mxu0 0.0
    %686 = vmatpush1.msra.mxu0 0.0
    %687 = vmatprep.subr.mxu0 0.0
    %688 = vmatpush1.msra.mxu0 0.0
    %689 = vmatprep.subr.mxu0 0.0
    %690 = vmatpush1.msra.mxu0 0.0
    %691 = vmatprep.subr.mxu0 0.0
    %692 = vmatpush1.msra.mxu0 0.0
    %693 = vmatprep.mubr.f32.mxu0 0.0
    %694 = vmatmul.mubr.f32.gmra.mrb[0].mxu0 %v618
    %v695 = vpop.f32.mrb[0].mxu0
    %v696 = vadd.f32 0.0, %v695
    %v697 = vpop.f32.mrb[0].mxu0
    %698 = vmatprep.mubr.f32.mxu0 0.0
    %699 = vmatmul.mubr.f32.gmra.mrb[0].mxu0 %v621
    %v700 = vpop.f32.mrb[0].mxu0
    %v701 = vadd.f32 0.0, %v700
    %v702 = vpop.f32.mrb[0].mxu0
    %703 = vmatprep.mubr.f32.mxu0 0.0
    %704 = vmatmul.mubr.f32.gmra.mrb[0].mxu0 %v624
    %v705 = vpop.f32.mrb[0].mxu0
    %v706 = vadd.f32 0.0, %v705
    %v707 = vpop.f32.mrb[0].mxu0
    %708 = vmatprep.mubr.f32.mxu0 0.0
    %709 = vmatmul.mubr.f32.gmra.mrb[0].mxu0 %v627
    %v710 = vpop.f32.mrb[0].mxu0
    %v711 = vadd.f32 0.0, %v710
    %v712 = vpop.f32.mrb[0].mxu0
    %713 = vdwg.mxu0
    %v714 = vmul.f32 %v696, %v442
    %v715 = vmul.f32 %v701, %v448
    %v716 = vadd.f32 %v714, %v715
    %v717 = vmul.f32 %v706, %v455
    %v718 = vadd.f32 %v716, %v717
    %v719 = vmul.f32 %v711, %v462
    %v720 = vadd.f32 %v718, %v719
    %v721 = vld [vmem:[#allocation10] sm:$0xff]
    %v722 = vld [vmem:[#allocation10 + $0x8] sm:$0xff]
    %v723 = vld [vmem:[#allocation10 + $0x10] sm:$0xff]
    %v724 = vld [vmem:[#allocation10 + $0x18] sm:$0xff]
    %725 = vmatprep.subr.mxu0 0.0
    %726 = vmatpush1.msra.mxu0 %v721
    %727 = vmatprep.subr.mxu0 0.0
    %728 = vmatpush1.msra.mxu0 %v722
    %729 = vmatprep.subr.mxu0 0.0
    %730 = vmatpush1.msra.mxu0 %v723
    %731 = vmatprep.subr.mxu0 0.0
    %732 = vmatpush1.msra.mxu0 %v724
    %733 = vmatprep.subr.mxu0 0.0
    %734 = vmatpush1.msra.mxu0 0.0
    %735 = vmatprep.subr.mxu0 0.0
    %736 = vmatpush1.msra.mxu0 0.0
    %737 = vmatprep.subr.mxu0 0.0
    %738 = vmatpush1.msra.mxu0 0.0
    %739 = vmatprep.subr.mxu0 0.0
    %740 = vmatpush1.msra.mxu0 0.0
    %741 = vmatprep.subr.mxu0 0.0
    %742 = vmatpush1.msra.mxu0 0.0
    %743 = vmatprep.subr.mxu0 0.0
    %744 = vmatpush1.msra.mxu0 0.0
    %745 = vmatprep.subr.mxu0 0.0
    %746 = vmatpush1.msra.mxu0 0.0
    %747 = vmatprep.subr.mxu0 0.0
    %748 = vmatpush1.msra.mxu0 0.0
    %749 = vmatprep.subr.mxu0 0.0
    %750 = vmatpush1.msra.mxu0 0.0
    %751 = vmatprep.subr.mxu0 0.0
    %752 = vmatpush1.msra.mxu0 0.0
    %753 = vmatprep.subr.mxu0 0.0
    %754 = vmatpush1.msra.mxu0 0.0
    %755 = vmatprep.subr.mxu0 0.0
    %756 = vmatpush1.msra.mxu0 0.0
    %757 = vmatprep.subr.mxu0 0.0
    %758 = vmatpush1.msra.mxu0 0.0
    %759 = vmatprep.subr.mxu0 0.0
    %760 = vmatpush1.msra.mxu0 0.0
    %761 = vmatprep.subr.mxu0 0.0
    %762 = vmatpush1.msra.mxu0 0.0
    %763 = vmatprep.subr.mxu0 0.0
    %764 = vmatpush1.msra.mxu0 0.0
    %765 = vmatprep.subr.mxu0 0.0
    %766 = vmatpush1.msra.mxu0 0.0
    %767 = vmatprep.subr.mxu0 0.0
    %768 = vmatpush1.msra.mxu0 0.0
    %769 = vmatprep.subr.mxu0 0.0
    %770 = vmatpush1.msra.mxu0 0.0
    %771 = vmatprep.subr.mxu0 0.0
    %772 = vmatpush1.msra.mxu0 0.0
    %773 = vmatprep.subr.mxu0 0.0
    %774 = vmatpush1.msra.mxu0 0.0
    %775 = vmatprep.subr.mxu0 0.0
    %776 = vmatpush1.msra.mxu0 0.0
    %777 = vmatprep.subr.mxu0 0.0
    %778 = vmatpush1.msra.mxu0 0.0
    %779 = vmatprep.subr.mxu0 0.0
    %780 = vmatpush1.msra.mxu0 0.0
    %781 = vmatprep.subr.mxu0 0.0
    %782 = vmatpush1.msra.mxu0 0.0
    %783 = vmatprep.subr.mxu0 0.0
    %784 = vmatpush1.msra.mxu0 0.0
    %785 = vmatprep.subr.mxu0 0.0
    %786 = vmatpush1.msra.mxu0 0.0
    %787 = vmatprep.subr.mxu0 0.0
    %788 = vmatpush1.msra.mxu0 0.0
    %789 = vmatprep.mubr.f32.mxu0 0.0
    %790 = vmatmul.mubr.f32.gmra.mrb[0].mxu0 %v205
    %v791 = vpop.f32.mrb[0].mxu0
    %v792 = vadd.f32 0.0, %v791
    %v793 = vpop.f32.mrb[0].mxu0
    %794 = vmatprep.mubr.f32.mxu0 0.0
    %795 = vmatmul.mubr.f32.gmra.mrb[0].mxu0 %v482
    %v796 = vpop.f32.mrb[0].mxu0
    %v797 = vadd.f32 0.0, %v796
    %v798 = vpop.f32.mrb[0].mxu0
    %799 = vdwg.mxu0
    %v800 = vmul.f32 %v792, 0.5
    %v801 = vmul.f32 %v797, 0.5
    %v802 = vmul.f32 %v792, 0.044715
    %v803 = vmul.f32 %v797, 0.044715
    %v804 = vmul.f32 %v802, %v792
    %v805 = vmul.f32 %v803, %v797
    %v806 = vmul.f32 %v804, %v792
    %v807 = vmul.f32 %v805, %v797
    %v808 = vadd.f32 %v792, %v806
    %v809 = vadd.f32 %v797, %v807
    %v810 = vmul.f32 %v808, 0.7978846
    %v811 = vmul.f32 %v809, 0.7978846
    %v812 = vtanh.pop %v810
    %v813 = vtanh.pop %v811
    %v814 = vadd.f32 %v812, 1.0
    %v815 = vadd.f32 %v813, 1.0
    %v816 = vmul.f32 %v800, %v814
    %v817 = vmul.f32 %v801, %v815
    %v818 = vld [vmem:[#allocation11] sm:$0xff]
    %v819 = vld [vmem:[#allocation11 + $0x8] sm:$0xff]
    %v820 = vld [vmem:[#allocation11 + $0x10] sm:$0xff]
    %v821 = vld [vmem:[#allocation11 + $0x18] sm:$0xff]
    %v823 = vsel %vm126, %v816, 0
    %v826 = vsel %vm126, %v817, 0
    %828 = vmatprep.subr.mxu0 0.0
    %829 = vmatpush1.msra.mxu0 %v818
    %830 = vmatprep.subr.mxu0 0.0
    %831 = vmatpush1.msra.mxu0 %v819
    %832 = vmatprep.subr.mxu0 0.0
    %833 = vmatpush1.msra.mxu0 %v820
    %834 = vmatprep.subr.mxu0 0.0
    %835 = vmatpush1.msra.mxu0 %v821
    %836 = vmatprep.subr.mxu0 0.0
    %837 = vmatpush1.msra.mxu0 0.0
    %838 = vmatprep.subr.mxu0 0.0
    %839 = vmatpush1.msra.mxu0 0.0
    %840 = vmatprep.subr.mxu0 0.0
    %841 = vmatpush1.msra.mxu0 0.0
    %842 = vmatprep.subr.mxu0 0.0
    %843 = vmatpush1.msra.mxu0 0.0
    %844 = vmatprep.subr.mxu0 0.0
    %845 = vmatpush1.msra.mxu0 0.0
    %846 = vmatprep.subr.mxu0 0.0
    %847 = vmatpush1.msra.mxu0 0.0
    %848 = vmatprep.subr.mxu0 0.0
    %849 = vmatpush1.msra.mxu0 0.0
    %850 = vmatprep.subr.mxu0 0.0
    %851 = vmatpush1.msra.mxu0 0.0
    %852 = vmatprep.subr.mxu0 0.0
    %853 = vmatpush1.msra.mxu0 0.0
    %854 = vmatprep.subr.mxu0 0.0
    %855 = vmatpush1.msra.mxu0 0.0
    %856 = vmatprep.subr.mxu0 0.0
    %857 = vmatpush1.msra.mxu0 0.0
    %858 = vmatprep.subr.mxu0 0.0
    %859 = vmatpush1.msra.mxu0 0.0
    %860 = vmatprep.subr.mxu0 0.0
    %861 = vmatpush1.msra.mxu0 0.0
    %862 = vmatprep.subr.mxu0 0.0
    %863 = vmatpush1.msra.mxu0 0.0
    %864 = vmatprep.subr.mxu0 0.0
    %865 = vmatpush1.msra.mxu0 0.0
    %866 = vmatprep.subr.mxu0 0.0
    %867 = vmatpush1.msra.mxu0 0.0
    %868 = vmatprep.subr.mxu0 0.0
    %869 = vmatpush1.msra.mxu0 0.0
    %870 = vmatprep.subr.mxu0 0.0
    %871 = vmatpush1.msra.mxu0 0.0
    %872 = vmatprep.subr.mxu0 0.0
    %873 = vmatpush1.msra.mxu0 0.0
    %874 = vmatprep.subr.mxu0 0.0
    %875 = vmatpush1.msra.mxu0 0.0
    %876 = vmatprep.subr.mxu0 0.0
    %877 = vmatpush1.msra.mxu0 0.0
    %878 = vmatprep.subr.mxu0 0.0
    %879 = vmatpush1.msra.mxu0 0.0
    %880 = vmatprep.subr.mxu0 0.0
    %881 = vmatpush1.msra.mxu0 0.0
    %882 = vmatprep.subr.mxu0 0.0
    %883 = vmatpush1.msra.mxu0 0.0
    %884 = vmatprep.subr.mxu0 0.0
    %885 = vmatpush1.msra.mxu0 0.0
    %886 = vmatprep.subr.mxu0 0.0
    %887 = vmatpush1.msra.mxu0 0.0
    %888 = vmatprep.subr.mxu0 0.0
    %889 = vmatpush1.msra.mxu0 0.0
    %890 = vmatprep.subr.mxu0 0.0
    %891 = vmatpush1.msra.mxu0 0.0
    %892 = vmatprep.mubr.f32.mxu0 0.0
    %893 = vmatmul.mubr.f32.gmra.mrb[0].mxu0 %v823
    %v894 = vpop.f32.mrb[0].mxu0
    %v895 = vadd.f32 0.0, %v894
    %v896 = vpop.f32.mrb[0].mxu0
    %897 = vmatprep.mubr.f32.mxu0 0.0
    %898 = vmatmul.mubr.f32.gmra.mrb[0].mxu0 %v826
    %v899 = vpop.f32.mrb[0].mxu0
    %v900 = vadd.f32 0.0, %v899
    %v901 = vpop.f32.mrb[0].mxu0
    %902 = vdwg.mxu0
    %v903 = vadd.f32 %v123, %v464
    %v904 = vadd.f32 %v125, %v720
    %v905 = vadd.f32 %v903, %v895
    %v906 = vadd.f32 %v904, %v900
    %v907 = vsel %vm126, %v905, 0.0
    %908 = vadd.xlane.f32.xlu0 %v907
    %v909 = vpop.xlane.xlu0 %908
    %v910 = vsel %vm126, %v906, 0.0
    %911 = vadd.xlane.f32.xlu0 %v910
    %v912 = vpop.xlane.xlu0 %911
    %v913 = vmul.f32 %v909, %v133
    %v914 = vmul.f32 %v912, %v133
    %v915 = vsub.f32 %v905, %v913
    %v916 = vsub.f32 %v906, %v914
    %v917 = vmul.f32 %v915, %v915
    %v918 = vmul.f32 %v916, %v916
    %v919 = vsel %vm126, %v917, 0.0
    %920 = vadd.xlane.f32.xlu0 %v919
    %v921 = vpop.xlane.xlu0 %920
    %v922 = vsel %vm126, %v918, 0.0
    %923 = vadd.xlane.f32.xlu0 %v922
    %v924 = vpop.xlane.xlu0 %923
    %v925 = vmul.f32 %v921, %v133
    %v926 = vmul.f32 %v924, %v133
    %v927 = vadd.f32 %v925, 1e-05
    %v928 = vadd.f32 %v926, 1e-05
    %v929 = vrsqrt.pop %v927
    %v930 = vrsqrt.pop %v928
    %v931 = vmul.f32 %v915, %v929
    %v932 = vmul.f32 %v916, %v930
    %v933 = vld [vmem:[#allocation5 + $0x1] sm:$0x1]
    %v934 = vlaneseq
    %v935 = vshrl.u32 %v934, 7
    %v936 = vsub.s32 0, %v935
    %v937 = vrot.slane %v933, %v936
    %v938 = vmul.f32 %v931, %v937
    %v939 = vmul.f32 %v932, %v937
    %v940 = vld [vmem:[%s2 + $0x1] sm:$0x1]
    %v941 = vlaneseq
    %v942 = vshrl.u32 %v941, 7
    %v943 = vsub.s32 0, %v942
    %v944 = vrot.slane %v940, %v943
    %v945 = vadd.f32 %v938, %v944
    %v946 = vadd.f32 %v939, %v944
    %v947 = vld [vmem:[#allocation7 + $0x4] sm:$0x1]
    %v948 = vlaneseq
    %v949 = vshrl.u32 %v948, 7
    %v950 = vsub.s32 0, %v949
    %v951 = vrot.slane %v947, %v950
    %v952 = vmul.f32 %v945, %v951
    %v953 = vld [vmem:[#allocation7 + $0x5] sm:$0x1]
    %v954 = vlaneseq
    %v955 = vshrl.u32 %v954, 7
    %v956 = vsub.s32 0, %v955
    %v957 = vrot.slane %v953, %v956
    %v958 = vmul.f32 %v945, %v957
    %v959 = vld [vmem:[#allocation7 + $0x6] sm:$0x1]
    %v960 = vlaneseq
    %v961 = vshrl.u32 %v960, 7
    %v962 = vsub.s32 0, %v961
    %v963 = vrot.slane %v959, %v962
    %v964 = vmul.f32 %v945, %v963
    %v965 = vld [vmem:[#allocation7 + $0x7] sm:$0x1]
    %v966 = vlaneseq
    %v967 = vshrl.u32 %v966, 7
    %v968 = vsub.s32 0, %v967
    %v969 = vrot.slane %v965, %v968
    %v970 = vmul.f32 %v945, %v969
    %v972 = vsel %vm126, %v952, 0
    %v975 = vsel %vm126, %v958, 0
    %v978 = vsel %vm126, %v964, 0
    %v981 = vsel %vm126, %v970, 0
    %v984 = vsel %vm126, %v945, 0
    %986 = vmatprep.subr.mxu0 0.0
    %987 = vmatpush1.xpose.msra.mxu0 %v984
    %988 = vmatprep.subr.mxu0 0.0
    %989 = vmatpush1.xpose.msra.mxu0 0.0
    %990 = vmatprep.subr.mxu0 0.0
    %991 = vmatpush1.xpose.msra.mxu0 0.0
    %992 = vmatprep.subr.mxu0 0.0
    %993 = vmatpush1.xpose.msra.mxu0 0.0
    %994 = vmatprep.subr.mxu0 0.0
    %995 = vmatpush1.xpose.msra.mxu0 0.0
    %996 = vmatprep.subr.mxu0 0.0
    %997 = vmatpush1.xpose.msra.mxu0 0.0
    %998 = vmatprep.subr.mxu0 0.0
    %999 = vmatpush1.xpose.msra.mxu0 0.0
    %1000 = vmatprep.subr.mxu0 0.0
    %1001 = vmatpush1.xpose.msra.mxu0 0.0
    %1002 = vmatprep.subr.mxu0 0.0
    %1003 = vmatpush1.xpose.msra.mxu0 0.0
    %1004 = vmatprep.subr.mxu0 0.0
    %1005 = vmatpush1.xpose.msra.mxu0 0.0
    %1006 = vmatprep.subr.mxu0 0.0
    %1007 = vmatpush1.xpose.msra.mxu0 0.0
    %1008 = vmatprep.subr.mxu0 0.0
    %1009 = vmatpush1.xpose.msra.mxu0 0.0
    %1010 = vmatprep.subr.mxu0 0.0
    %1011 = vmatpush1.xpose.msra.mxu0 0.0
    %1012 = vmatprep.subr.mxu0 0.0
    %1013 = vmatpush1.xpose.msra.mxu0 0.0
    %1014 = vmatprep.subr.mxu0 0.0
    %1015 = vmatpush1.xpose.msra.mxu0 0.0
    %1016 = vmatprep.subr.mxu0 0.0
    %1017 = vmatpush1.xpose.msra.mxu0 0.0
    %1018 = vmatprep.subr.mxu0 0.0
    %1019 = vmatpush1.xpose.msra.mxu0 0.0
    %1020 = vmatprep.subr.mxu0 0.0
    %1021 = vmatpush1.xpose.msra.mxu0 0.0
    %1022 = vmatprep.subr.mxu0 0.0
    %1023 = vmatpush1.xpose.msra.mxu0 0.0
    %1024 = vmatprep.subr.mxu0 0.0
    %1025 = vmatpush1.xpose.msra.mxu0 0.0
    %1026 = vmatprep.subr.mxu0 0.0
    %1027 = vmatpush1.xpose.msra.mxu0 0.0
    %1028 = vmatprep.subr.mxu0 0.0
    %1029 = vmatpush1.xpose.msra.mxu0 0.0
    %1030 = vmatprep.subr.mxu0 0.0
    %1031 = vmatpush1.xpose.msra.mxu0 0.0
    %1032 = vmatprep.subr.mxu0 0.0
    %1033 = vmatpush1.xpose.msra.mxu0 0.0
    %1034 = vmatprep.subr.mxu0 0.0
    %1035 = vmatpush1.xpose.msra.mxu0 0.0
    %1036 = vmatprep.subr.mxu0 0.0
    %1037 = vmatpush1.xpose.msra.mxu0 0.0
    %1038 = vmatprep.subr.mxu0 0.0
    %1039 = vmatpush1.xpose.msra.mxu0 0.0
    %1040 = vmatprep.subr.mxu0 0.0
    %1041 = vmatpush1.xpose.msra.mxu0 0.0
    %1042 = vmatprep.subr.mxu0 0.0
    %1043 = vmatpush1.xpose.msra.mxu0 0.0
    %1044 = vmatprep.subr.mxu0 0.0
    %1045 = vmatpush1.xpose.msra.mxu0 0.0
    %1046 = vmatprep.subr.mxu0 0.0
    %1047 = vmatpush1.xpose.msra.mxu0 0.0
    %1048 = vmatprep.subr.mxu0 0.0
    %1049 = vmatpush1.xpose.msra.mxu0 0.0
    %1050 = vmatprep.mubr.f32.mxu0 0.0
    %1051 = vmatmul.mubr.f32.gmra.mrb[0].mxu0 %v972
    %v1052 = vpop.f32.mrb[0].mxu0
    %v1053 = vadd.f32 0.0, %v1052
    %v1054 = vpop.f32.mrb[0].mxu0
    %1055 = vmatprep.mubr.f32.mxu0 0.0
    %1056 = vmatmul.mubr.f32.gmra.mrb[0].mxu0 %v975
    %v1057 = vpop.f32.mrb[0].mxu0
    %v1058 = vadd.f32 0.0, %v1057
    %v1059 = vpop.f32.mrb[0].mxu0
    %1060 = vmatprep.mubr.f32.mxu0 0.0
    %1061 = vmatmul.mubr.f32.gmra.mrb[0].mxu0 %v978
    %v1062 = vpop.f32.mrb[0].mxu0
    %v1063 = vadd.f32 0.0, %v1062
    %v1064 = vpop.f32.mrb[0].mxu0
    %1065 = vmatprep.mubr.f32.mxu0 0.0
    %1066 = vmatmul.mubr.f32.gmra.mrb[0].mxu0 %v981
    %v1067 = vpop.f32.mrb[0].mxu0
    %v1068 = vadd.f32 0.0, %v1067
    %v1069 = vpop.f32.mrb[0].mxu0
    %1070 = vdwg.mxu0
    %v1071 = vmul.f32 %v1053, 0.35355338
    %v1072 = vmul.f32 %v1058, 0.35355338
    %v1073 = vmul.f32 %v1063, 0.35355338
    %v1074 = vmul.f32 %v1068, 0.35355338
    %v1075 = vsel %vm296, %v1071, -inf
    %1076 = vmax.xlane.f32.xlu0 %v1075
    %v1077 = vpop.xlane.xlu0 %1076
    %v1078 = vsel %vm296, %v1072, -inf
    %1079 = vmax.xlane.f32.xlu0 %v1078
    %v1080 = vpop.xlane.xlu0 %1079
    %v1081 = vsel %vm296, %v1073, -inf
    %1082 = vmax.xlane.f32.xlu0 %v1081
    %v1083 = vpop.xlane.xlu0 %1082
    %v1084 = vsel %vm296, %v1074, -inf
    %1085 = vmax.xlane.f32.xlu0 %v1084
    %v1086 = vpop.xlane.xlu0 %1085
    %v1087 = vsub.f32 %v1071, %v1077
    %v1088 = vsub.f32 %v1072, %v1080
    %v1089 = vsub.f32 %v1073, %v1083
    %v1090 = vsub.f32 %v1074, %v1086
    %v1091 = vmul.f32 %v1087, 1.442695
    %v1092 = vpow.pop %v1091
    %v1093 = vmul.f32 %v1088, 1.442695
    %v1094 = vpow.pop %v1093
    %v1095 = vmul.f32 %v1089, 1.442695
    %v1096 = vpow.pop %v1095
    %v1097 = vmul.f32 %v1090, 1.442695
    %v1098 = vpow.pop %v1097
    %v1099 = vsel %vm296, %v1092, 0.0
    %1100 = vadd.xlane.f32.xlu0 %v1099
    %v1101 = vpop.xlane.xlu0 %1100
    %v1102 = vsel %vm296, %v1094, 0.0
    %1103 = vadd.xlane.f32.xlu0 %v1102
    %v1104 = vpop.xlane.xlu0 %1103
    %v1105 = vsel %vm296, %v1096, 0.0
    %1106 = vadd.xlane.f32.xlu0 %v1105
    %v1107 = vpop.xlane.xlu0 %1106
    %v1108 = vsel %vm296, %v1098, 0.0
    %1109 = vadd.xlane.f32.xlu0 %v1108
    %v1110 = vpop.xlane.xlu0 %1109
    %v1111 = vrcp.pop %v1101
    %v1112 = vrcp.pop %v1104
    %v1113 = vrcp.pop %v1107
    %v1114 = vrcp.pop %v1110
    %v1115 = vmul.f32 %v1092, %v1111
    %v1116 = vmul.f32 %v1094, %v1112
    %v1117 = vmul.f32 %v1096, %v1113
    %v1118 = vmul.f32 %v1098, %v1114
    %v1120 = vsel %vm296, %v1115, 0
    %v1123 = vsel %vm296, %v1116, 0
    %v1126 = vsel %vm296, %v1117, 0
    %v1129 = vsel %vm296, %v1118, 0
    %1131 = vmatprep.subr.mxu0 0.0
    %1132 = vmatpush1.msra.mxu0 %v945
    %1133 = vmatprep.subr.mxu0 0.0
    %1134 = vmatpush1.msra.mxu0 0.0
    %1135 = vmatprep.subr.mxu0 0.0
    %1136 = vmatpush1.msra.mxu0 0.0
    %1137 = vmatprep.subr.mxu0 0.0
    %1138 = vmatpush1.msra.mxu0 0.0
    %1139 = vmatprep.subr.mxu0 0.0
    %1140 = vmatpush1.msra.mxu0 0.0
    %1141 = vmatprep.subr.mxu0 0.0
    %1142 = vmatpush1.msra.mxu0 0.0
    %1143 = vmatprep.subr.mxu0 0.0
    %1144 = vmatpush1.msra.mxu0 0.0
    %1145 = vmatprep.subr.mxu0 0.0
    %1146 = vmatpush1.msra.mxu0 0.0
    %1147 = vmatprep.subr.mxu0 0.0
    %1148 = vmatpush1.msra.mxu0 0.0
    %1149 = vmatprep.subr.mxu0 0.0
    %1150 = vmatpush1.msra.mxu0 0.0
    %1151 = vmatprep.subr.mxu0 0.0
    %1152 = vmatpush1.msra.mxu0 0.0
    %1153 = vmatprep.subr.mxu0 0.0
    %1154 = vmatpush1.msra.mxu0 0.0
    %1155 = vmatprep.subr.mxu0 0.0
    %1156 = vmatpush1.msra.mxu0 0.0
    %1157 = vmatprep.subr.mxu0 0.0
    %1158 = vmatpush1.msra.mxu0 0.0
    %1159 = vmatprep.subr.mxu0 0.0
    %1160 = vmatpush1.msra.mxu0 0.0
    %1161 = vmatprep.subr.mxu0 0.0
    %1162 = vmatpush1.msra.mxu0 0.0
    %1163 = vmatprep.subr.mxu0 0.0
    %1164 = vmatpush1.msra.mxu0 0.0
    %1165 = vmatprep.subr.mxu0 0.0
    %1166 = vmatpush1.msra.mxu0 0.0
    %1167 = vmatprep.subr.mxu0 0.0
    %1168 = vmatpush1.msra.mxu0 0.0
    %1169 = vmatprep.subr.mxu0 0.0
    %1170 = vmatpush1.msra.mxu0 0.0
    %1171 = vmatprep.subr.mxu0 0.0
    %1172 = vmatpush1.msra.mxu0 0.0
    %1173 = vmatprep.subr.mxu0 0.0
    %1174 = vmatpush1.msra.mxu0 0.0
    %1175 = vmatprep.subr.mxu0 0.0
    %1176 = vmatpush1.msra.mxu0 0.0
    %1177 = vmatprep.subr.mxu0 0.0
    %1178 = vmatpush1.msra.mxu0 0.0
    %1179 = vmatprep.subr.mxu0 0.0
    %1180 = vmatpush1.msra.mxu0 0.0
    %1181 = vmatprep.subr.mxu0 0.0
    %1182 = vmatpush1.msra.mxu0 0.0
    %1183 = vmatprep.subr.mxu0 0.0
    %1184 = vmatpush1.msra.mxu0 0.0
    %1185 = vmatprep.subr.mxu0 0.0
    %1186 = vmatpush1.msra.mxu0 0.0
    %1187 = vmatprep.subr.mxu0 0.0
    %1188 = vmatpush1.msra.mxu0 0.0
    %1189 = vmatprep.subr.mxu0 0.0
    %1190 = vmatpush1.msra.mxu0 0.0
    %1191 = vmatprep.subr.mxu0 0.0
    %1192 = vmatpush1.msra.mxu0 0.0
    %1193 = vmatprep.subr.mxu0 0.0
    %1194 = vmatpush1.msra.mxu0 0.0
    %1195 = vmatprep.mubr.f32.mxu0 0.0
    %1196 = vmatmul.mubr.f32.gmra.mrb[0].mxu0 %v1120
    %v1197 = vpop.f32.mrb[0].mxu0
    %v1198 = vadd.f32 0.0, %v1197
    %v1199 = vpop.f32.mrb[0].mxu0
    %1200 = vmatprep.mubr.f32.mxu0 0.0
    %1201 = vmatmul.mubr.f32.gmra.mrb[0].mxu0 %v1123
    %v1202 = vpop.f32.mrb[0].mxu0
    %v1203 = vadd.f32 0.0, %v1202
    %v1204 = vpop.f32.mrb[0].mxu0
    %1205 = vmatprep.mubr.f32.mxu0 0.0
    %1206 = vmatmul.mubr.f32.gmra.mrb[0].mxu0 %v1126
    %v1207 = vpop.f32.mrb[0].mxu0
    %v1208 = vadd.f32 0.0, %v1207
    %v1209 = vpop.f32.mrb[0].mxu0
    %1210 = vmatprep.mubr.f32.mxu0 0.0
    %1211 = vmatmul.mubr.f32.gmra.mrb[0].mxu0 %v1129
    %v1212 = vpop.f32.mrb[0].mxu0
    %v1213 = vadd.f32 0.0, %v1212
    %v1214 = vpop.f32.mrb[0].mxu0
    %1215 = vdwg.mxu0
    %v1216 = vld [vmem:[#allocation8 + $0x4] sm:$0x1]
    %v1217 = vlaneseq
    %v1218 = vshrl.u32 %v1217, 7
    %v1219 = vsub.s32 0, %v1218
    %v1220 = vrot.slane %v1216, %v1219
    %v1221 = vmul.f32 %v1198, %v1220
    %v1222 = vld [vmem:[#allocation8 + $0x5] sm:$0x1]
    %v1223 = vlaneseq
    %v1224 = vshrl.u32 %v1223, 7
    %v1225 = vsub.s32 0, %v1224
    %v1226 = vrot.slane %v1222, %v1225
    %v1227 = vmul.f32 %v1203, %v1226
    %v1228 = vadd.f32 %v1221, %v1227
    %v1229 = vld [vmem:[#allocation8 + $0x6] sm:$0x1]
    %v1230 = vlaneseq
    %v1231 = vshrl.u32 %v1230, 7
    %v1232 = vsub.s32 0, %v1231
    %v1233 = vrot.slane %v1229, %v1232
    %v1234 = vmul.f32 %v1208, %v1233
    %v1235 = vadd.f32 %v1228, %v1234
    %v1236 = vld [vmem:[#allocation8 + $0x7] sm:$0x1]
    %v1237 = vlaneseq
    %v1238 = vshrl.u32 %v1237, 7
    %v1239 = vsub.s32 0, %v1238
    %v1240 = vrot.slane %v1236, %v1239
    %v1241 = vmul.f32 %v1213, %v1240
    %v1242 = vadd.f32 %v1235, %v1241
    %v1243 = vmul.f32 %v946, %v951
    %v1244 = vmul.f32 %v946, %v957
    %v1245 = vmul.f32 %v946, %v963
    %v1246 = vmul.f32 %v946, %v969
    %v1248 = vsel %vm126, %v1243, 0
    %v1251 = vsel %vm126, %v1244, 0
    %v1254 = vsel %vm126, %v1245, 0
    %v1257 = vsel %vm126, %v1246, 0
    %v1260 = vsel %vm126, %v946, 0
    %1262 = vmatprep.subr.mxu0 0.0
    %1263 = vmatpush1.xpose.msra.mxu0 %v1260
    %1264 = vmatprep.subr.mxu0 0.0
    %1265 = vmatpush1.xpose.msra.mxu0 0.0
    %1266 = vmatprep.subr.mxu0 0.0
    %1267 = vmatpush1.xpose.msra.mxu0 0.0
    %1268 = vmatprep.subr.mxu0 0.0
    %1269 = vmatpush1.xpose.msra.mxu0 0.0
    %1270 = vmatprep.subr.mxu0 0.0
    %1271 = vmatpush1.xpose.msra.mxu0 0.0
    %1272 = vmatprep.subr.mxu0 0.0
    %1273 = vmatpush1.xpose.msra.mxu0 0.0
    %1274 = vmatprep.subr.mxu0 0.0
    %1275 = vmatpush1.xpose.msra.mxu0 0.0
    %1276 = vmatprep.subr.mxu0 0.0
    %1277 = vmatpush1.xpose.msra.mxu0 0.0
    %1278 = vmatprep.subr.mxu0 0.0
    %1279 = vmatpush1.xpose.msra.mxu0 0.0
    %1280 = vmatprep.subr.mxu0 0.0
    %1281 = vmatpush1.xpose.msra.mxu0 0.0
    %1282 = vmatprep.subr.mxu0 0.0
    %1283 = vmatpush1.xpose.msra.mxu0 0.0
    %1284 = vmatprep.subr.mxu0 0.0
    %1285 = vmatpush1.xpose.msra.mxu0 0.0
    %1286 = vmatprep.subr.mxu0 0.0
    %1287 = vmatpush1.xpose.msra.mxu0 0.0
    %1288 = vmatprep.subr.mxu0 0.0
    %1289 = vmatpush1.xpose.msra.mxu0 0.0
    %1290 = vmatprep.subr.mxu0 0.0
    %1291 = vmatpush1.xpose.msra.mxu0 0.0
    %1292 = vmatprep.subr.mxu0 0.0
    %1293 = vmatpush1.xpose.msra.mxu0 0.0
    %1294 = vmatprep.subr.mxu0 0.0
    %1295 = vmatpush1.xpose.msra.mxu0 0.0
    %1296 = vmatprep.subr.mxu0 0.0
    %1297 = vmatpush1.xpose.msra.mxu0 0.0
    %1298 = vmatprep.subr.mxu0 0.0
    %1299 = vmatpush1.xpose.msra.mxu0 0.0
    %1300 = vmatprep.subr.mxu0 0.0
    %1301 = vmatpush1.xpose.msra.mxu0 0.0
    %1302 = vmatprep.subr.mxu0 0.0
    %1303 = vmatpush1.xpose.msra.mxu0 0.0
    %1304 = vmatprep.subr.mxu0 0.0
    %1305 = vmatpush1.xpose.msra.mxu0 0.0
    %1306 = vmatprep.subr.mxu0 0.0
    %1307 = vmatpush1.xpose.msra.mxu0 0.0
    %1308 = vmatprep.subr.mxu0 0.0
    %1309 = vmatpush1.xpose.msra.mxu0 0.0
    %1310 = vmatprep.subr.mxu0 0.0
    %1311 = vmatpush1.xpose.msra.mxu0 0.0
    %1312 = vmatprep.subr.mxu0 0.0
    %1313 = vmatpush1.xpose.msra.mxu0 0.0
    %1314 = vmatprep.subr.mxu0 0.0
    %1315 = vmatpush1.xpose.msra.mxu0 0.0
    %1316 = vmatprep.subr.mxu0 0.0
    %1317 = vmatpush1.xpose.msra.mxu0 0.0
    %1318 = vmatprep.subr.mxu0 0.0
    %1319 = vmatpush1.xpose.msra.mxu0 0.0
    %1320 = vmatprep.subr.mxu0 0.0
    %1321 = vmatpush1.xpose.msra.mxu0 0.0
    %1322 = vmatprep.subr.mxu0 0.0
    %1323 = vmatpush1.xpose.msra.mxu0 0.0
    %1324 = vmatprep.subr.mxu0 0.0
    %1325 = vmatpush1.xpose.msra.mxu0 0.0
    %1326 = vmatprep.mubr.f32.mxu0 0.0
    %1327 = vmatmul.mubr.f32.gmra.mrb[0].mxu0 %v1248
    %v1328 = vpop.f32.mrb[0].mxu0
    %v1329 = vadd.f32 0.0, %v1328
    %v1330 = vpop.f32.mrb[0].mxu0
    %1331 = vmatprep.mubr.f32.mxu0 0.0
    %1332 = vmatmul.mubr.f32.gmra.mrb[0].mxu0 %v1251
    %v1333 = vpop.f32.mrb[0].mxu0
    %v1334 = vadd.f32 0.0, %v1333
    %v1335 = vpop.f32.mrb[0].mxu0
    %1336 = vmatprep.mubr.f32.mxu0 0.0
    %1337 = vmatmul.mubr.f32.gmra.mrb[0].mxu0 %v1254
    %v1338 = vpop.f32.mrb[0].mxu0
    %v1339 = vadd.f32 0.0, %v1338
    %v1340 = vpop.f32.mrb[0].mxu0
    %1341 = vmatprep.mubr.f32.mxu0 0.0
    %1342 = vmatmul.mubr.f32.gmra.mrb[0].mxu0 %v1257
    %v1343 = vpop.f32.mrb[0].mxu0
    %v1344 = vadd.f32 0.0, %v1343
    %v1345 = vpop.f32.mrb[0].mxu0
    %1346 = vdwg.mxu0
    %v1347 = vmul.f32 %v1329, 0.35355338
    %v1348 = vmul.f32 %v1334, 0.35355338
    %v1349 = vmul.f32 %v1339, 0.35355338
    %v1350 = vmul.f32 %v1344, 0.35355338
    %v1351 = vsel %vm296, %v1347, -inf
    %1352 = vmax.xlane.f32.xlu0 %v1351
    %v1353 = vpop.xlane.xlu0 %1352
    %v1354 = vsel %vm296, %v1348, -inf
    %1355 = vmax.xlane.f32.xlu0 %v1354
    %v1356 = vpop.xlane.xlu0 %1355
    %v1357 = vsel %vm296, %v1349, -inf
    %1358 = vmax.xlane.f32.xlu0 %v1357
    %v1359 = vpop.xlane.xlu0 %1358
    %v1360 = vsel %vm296, %v1350, -inf
    %1361 = vmax.xlane.f32.xlu0 %v1360
    %v1362 = vpop.xlane.xlu0 %1361
    %v1363 = vsub.f32 %v1347, %v1353
    %v1364 = vsub.f32 %v1348, %v1356
    %v1365 = vsub.f32 %v1349, %v1359
    %v1366 = vsub.f32 %v1350, %v1362
    %v1367 = vmul.f32 %v1363, 1.442695
    %v1368 = vpow.pop %v1367
    %v1369 = vmul.f32 %v1364, 1.442695
    %v1370 = vpow.pop %v1369
    %v1371 = vmul.f32 %v1365, 1.442695
    %v1372 = vpow.pop %v1371
    %v1373 = vmul.f32 %v1366, 1.442695
    %v1374 = vpow.pop %v1373
    %v1375 = vsel %vm296, %v1368, 0.0
    %1376 = vadd.xlane.f32.xlu0 %v1375
    %v1377 = vpop.xlane.xlu0 %1376
    %v1378 = vsel %vm296, %v1370, 0.0
    %1379 = vadd.xlane.f32.xlu0 %v1378
    %v1380 = vpop.xlane.xlu0 %1379
    %v1381 = vsel %vm296, %v1372, 0.0
    %1382 = vadd.xlane.f32.xlu0 %v1381
    %v1383 = vpop.xlane.xlu0 %1382
    %v1384 = vsel %vm296, %v1374, 0.0
    %1385 = vadd.xlane.f32.xlu0 %v1384
    %v1386 = vpop.xlane.xlu0 %1385
    %v1387 = vrcp.pop %v1377
    %v1388 = vrcp.pop %v1380
    %v1389 = vrcp.pop %v1383
    %v1390 = vrcp.pop %v1386
    %v1391 = vmul.f32 %v1368, %v1387
    %v1392 = vmul.f32 %v1370, %v1388
    %v1393 = vmul.f32 %v1372, %v1389
    %v1394 = vmul.f32 %v1374, %v1390
    %v1396 = vsel %vm296, %v1391, 0
    %v1399 = vsel %vm296, %v1392, 0
    %v1402 = vsel %vm296, %v1393, 0
    %v1405 = vsel %vm296, %v1394, 0
    %1407 = vmatprep.subr.mxu0 0.0
    %1408 = vmatpush1.msra.mxu0 %v946
    %1409 = vmatprep.subr.mxu0 0.0
    %1410 = vmatpush1.msra.mxu0 0.0
    %1411 = vmatprep.subr.mxu0 0.0
    %1412 = vmatpush1.msra.mxu0 0.0
    %1413 = vmatprep.subr.mxu0 0.0
    %1414 = vmatpush1.msra.mxu0 0.0
    %1415 = vmatprep.subr.mxu0 0.0
    %1416 = vmatpush1.msra.mxu0 0.0
    %1417 = vmatprep.subr.mxu0 0.0
    %1418 = vmatpush1.msra.mxu0 0.0
    %1419 = vmatprep.subr.mxu0 0.0
    %1420 = vmatpush1.msra.mxu0 0.0
    %1421 = vmatprep.subr.mxu0 0.0
    %1422 = vmatpush1.msra.mxu0 0.0
    %1423 = vmatprep.subr.mxu0 0.0
    %1424 = vmatpush1.msra.mxu0 0.0
    %1425 = vmatprep.subr.mxu0 0.0
    %1426 = vmatpush1.msra.mxu0 0.0
    %1427 = vmatprep.subr.mxu0 0.0
    %1428 = vmatpush1.msra.mxu0 0.0
    %1429 = vmatprep.subr.mxu0 0.0
    %1430 = vmatpush1.msra.mxu0 0.0
    %1431 = vmatprep.subr.mxu0 0.0
    %1432 = vmatpush1.msra.mxu0 0.0
    %1433 = vmatprep.subr.mxu0 0.0
    %1434 = vmatpush1.msra.mxu0 0.0
    %1435 = vmatprep.subr.mxu0 0.0
    %1436 = vmatpush1.msra.mxu0 0.0
    %1437 = vmatprep.subr.mxu0 0.0
    %1438 = vmatpush1.msra.mxu0 0.0
    %1439 = vmatprep.subr.mxu0 0.0
    %1440 = vmatpush1.msra.mxu0 0.0
    %1441 = vmatprep.subr.mxu0 0.0
    %1442 = vmatpush1.msra.mxu0 0.0
    %1443 = vmatprep.subr.mxu0 0.0
    %1444 = vmatpush1.msra.mxu0 0.0
    %1445 = vmatprep.subr.mxu0 0.0
    %1446 = vmatpush1.msra.mxu0 0.0
    %1447 = vmatprep.subr.mxu0 0.0
    %1448 = vmatpush1.msra.mxu0 0.0
    %1449 = vmatprep.subr.mxu0 0.0
    %1450 = vmatpush1.msra.mxu0 0.0
    %1451 = vmatprep.subr.mxu0 0.0
    %1452 = vmatpush1.msra.mxu0 0.0
    %1453 = vmatprep.subr.mxu0 0.0
    %1454 = vmatpush1.msra.mxu0 0.0
    %1455 = vmatprep.subr.mxu0 0.0
    %1456 = vmatpush1.msra.mxu0 0.0
    %1457 = vmatprep.subr.mxu0 0.0
    %1458 = vmatpush1.msra.mxu0 0.0
    %1459 = vmatprep.subr.mxu0 0.0
    %1460 = vmatpush1.msra.mxu0 0.0
    %1461 = vmatprep.subr.mxu0 0.0
    %1462 = vmatpush1.msra.mxu0 0.0
    %1463 = vmatprep.subr.mxu0 0.0
    %1464 = vmatpush1.msra.mxu0 0.0
    %1465 = vmatprep.subr.mxu0 0.0
    %1466 = vmatpush1.msra.mxu0 0.0
    %1467 = vmatprep.subr.mxu0 0.0
    %1468 = vmatpush1.msra.mxu0 0.0
    %1469 = vmatprep.subr.mxu0 0.0
    %1470 = vmatpush1.msra.mxu0 0.0
    %1471 = vmatprep.mubr.f32.mxu0 0.0
    %1472 = vmatmul.mubr.f32.gmra.mrb[0].mxu0 %v1396
    %v1473 = vpop.f32.mrb[0].mxu0
    %v1474 = vadd.f32 0.0, %v1473
    %v1475 = vpop.f32.mrb[0].mxu0
    %1476 = vmatprep.mubr.f32.mxu0 0.0
    %1477 = vmatmul.mubr.f32.gmra.mrb[0].mxu0 %v1399
    %v1478 = vpop.f32.mrb[0].mxu0
    %v1479 = vadd.f32 0.0, %v1478
    %v1480 = vpop.f32.mrb[0].mxu0
    %1481 = vmatprep.mubr.f32.mxu0 0.0
    %1482 = vmatmul.mubr.f32.gmra.mrb[0].mxu0 %v1402
    %v1483 = vpop.f32.mrb[0].mxu0
    %v1484 = vadd.f32 0.0, %v1483
    %v1485 = vpop.f32.mrb[0].mxu0
    %1486 = vmatprep.mubr.f32.mxu0 0.0
    %1487 = vmatmul.mubr.f32.gmra.mrb[0].mxu0 %v1405
    %v1488 = vpop.f32.mrb[0].mxu0
    %v1489 = vadd.f32 0.0, %v1488
    %v1490 = vpop.f32.mrb[0].mxu0
    %1491 = vdwg.mxu0
    %v1492 = vmul.f32 %v1474, %v1220
    %v1493 = vmul.f32 %v1479, %v1226
    %v1494 = vadd.f32 %v1492, %v1493
    %v1495 = vmul.f32 %v1484, %v1233
    %v1496 = vadd.f32 %v1494, %v1495
    %v1497 = vmul.f32 %v1489, %v1240
    %v1498 = vadd.f32 %v1496, %v1497
    %s1499 = scalar_lea.vmem [#allocation10], 32
    %v1500 = vld [vmem:[%s1499] sm:$0xff]
    %v1501 = vld [vmem:[%s1499 + $0x8] sm:$0xff]
    %v1502 = vld [vmem:[%s1499 + $0x10] sm:$0xff]
    %v1503 = vld [vmem:[%s1499 + $0x18] sm:$0xff]
    %1504 = vmatprep.subr.mxu0 0.0
    %1505 = vmatpush1.msra.mxu0 %v1500
    %1506 = vmatprep.subr.mxu0 0.0
    %1507 = vmatpush1.msra.mxu0 %v1501
    %1508 = vmatprep.subr.mxu0 0.0
    %1509 = vmatpush1.msra.mxu0 %v1502
    %1510 = vmatprep.subr.mxu0 0.0
    %1511 = vmatpush1.msra.mxu0 %v1503
    %1512 = vmatprep.subr.mxu0 0.0
    %1513 = vmatpush1.msra.mxu0 0.0
    %1514 = vmatprep.subr.mxu0 0.0
    %1515 = vmatpush1.msra.mxu0 0.0
    %1516 = vmatprep.subr.mxu0 0.0
    %1517 = vmatpush1.msra.mxu0 0.0
    %1518 = vmatprep.subr.mxu0 0.0
    %1519 = vmatpush1.msra.mxu0 0.0
    %1520 = vmatprep.subr.mxu0 0.0
    %1521 = vmatpush1.msra.mxu0 0.0
    %1522 = vmatprep.subr.mxu0 0.0
    %1523 = vmatpush1.msra.mxu0 0.0
    %1524 = vmatprep.subr.mxu0 0.0
    %1525 = vmatpush1.msra.mxu0 0.0
    %1526 = vmatprep.subr.mxu0 0.0
    %1527 = vmatpush1.msra.mxu0 0.0
    %1528 = vmatprep.subr.mxu0 0.0
    %1529 = vmatpush1.msra.mxu0 0.0
    %1530 = vmatprep.subr.mxu0 0.0
    %1531 = vmatpush1.msra.mxu0 0.0
    %1532 = vmatprep.subr.mxu0 0.0
    %1533 = vmatpush1.msra.mxu0 0.0
    %1534 = vmatprep.subr.mxu0 0.0
    %1535 = vmatpush1.msra.mxu0 0.0
    %1536 = vmatprep.subr.mxu0 0.0
    %1537 = vmatpush1.msra.mxu0 0.0
    %1538 = vmatprep.subr.mxu0 0.0
    %1539 = vmatpush1.msra.mxu0 0.0
    %1540 = vmatprep.subr.mxu0 0.0
    %1541 = vmatpush1.msra.mxu0 0.0
    %1542 = vmatprep.subr.mxu0 0.0
    %1543 = vmatpush1.msra.mxu0 0.0
    %1544 = vmatprep.subr.mxu0 0.0
    %1545 = vmatpush1.msra.mxu0 0.0
    %1546 = vmatprep.subr.mxu0 0.0
    %1547 = vmatpush1.msra.mxu0 0.0
    %1548 = vmatprep.subr.mxu0 0.0
    %1549 = vmatpush1.msra.mxu0 0.0
    %1550 = vmatprep.subr.mxu0 0.0
    %1551 = vmatpush1.msra.mxu0 0.0
    %1552 = vmatprep.subr.mxu0 0.0
    %1553 = vmatpush1.msra.mxu0 0.0
    %1554 = vmatprep.subr.mxu0 0.0
    %1555 = vmatpush1.msra.mxu0 0.0
    %1556 = vmatprep.subr.mxu0 0.0
    %1557 = vmatpush1.msra.mxu0 0.0
    %1558 = vmatprep.subr.mxu0 0.0
    %1559 = vmatpush1.msra.mxu0 0.0
    %1560 = vmatprep.subr.mxu0 0.0
    %1561 = vmatpush1.msra.mxu0 0.0
    %1562 = vmatprep.subr.mxu0 0.0
    %1563 = vmatpush1.msra.mxu0 0.0
    %1564 = vmatprep.subr.mxu0 0.0
    %1565 = vmatpush1.msra.mxu0 0.0
    %1566 = vmatprep.subr.mxu0 0.0
    %1567 = vmatpush1.msra.mxu0 0.0
    %1568 = vmatprep.mubr.f32.mxu0 0.0
    %1569 = vmatmul.mubr.f32.gmra.mrb[0].mxu0 %v984
    %v1570 = vpop.f32.mrb[0].mxu0
    %v1571 = vadd.f32 0.0, %v1570
    %v1572 = vpop.f32.mrb[0].mxu0
    %1573 = vmatprep.mubr.f32.mxu0 0.0
    %1574 = vmatmul.mubr.f32.gmra.mrb[0].mxu0 %v1260
    %v1575 = vpop.f32.mrb[0].mxu0
    %v1576 = vadd.f32 0.0, %v1575
    %v1577 = vpop.f32.mrb[0].mxu0
    %1578 = vdwg.mxu0
    %v1579 = vmul.f32 %v1571, 0.5
    %v1580 = vmul.f32 %v1576, 0.5
    %v1581 = vmul.f32 %v1571, 0.044715
    %v1582 = vmul.f32 %v1576, 0.044715
    %v1583 = vmul.f32 %v1581, %v1571
    %v1584 = vmul.f32 %v1582, %v1576
    %v1585 = vmul.f32 %v1583, %v1571
    %v1586 = vmul.f32 %v1584, %v1576
    %v1587 = vadd.f32 %v1571, %v1585
    %v1588 = vadd.f32 %v1576, %v1586
    %v1589 = vmul.f32 %v1587, 0.7978846
    %v1590 = vmul.f32 %v1588, 0.7978846
    %v1591 = vtanh.pop %v1589
    %v1592 = vtanh.pop %v1590
    %v1593 = vadd.f32 %v1591, 1.0
    %v1594 = vadd.f32 %v1592, 1.0
    %v1595 = vmul.f32 %v1579, %v1593
    %v1596 = vmul.f32 %v1580, %v1594
    %s1597 = scalar_lea.vmem [#allocation11], 32
    %v1598 = vld [vmem:[%s1597] sm:$0xff]
    %v1599 = vld [vmem:[%s1597 + $0x8] sm:$0xff]
    %v1600 = vld [vmem:[%s1597 + $0x10] sm:$0xff]
    %v1601 = vld [vmem:[%s1597 + $0x18] sm:$0xff]
    %v1603 = vsel %vm126, %v1595, 0
    %v1606 = vsel %vm126, %v1596, 0
    %1608 = vmatprep.subr.mxu0 0.0
    %1609 = vmatpush1.msra.mxu0 %v1598
    %1610 = vmatprep.subr.mxu0 0.0
    %1611 = vmatpush1.msra.mxu0 %v1599
    %1612 = vmatprep.subr.mxu0 0.0
    %1613 = vmatpush1.msra.mxu0 %v1600
    %1614 = vmatprep.subr.mxu0 0.0
    %1615 = vmatpush1.msra.mxu0 %v1601
    %1616 = vmatprep.subr.mxu0 0.0
    %1617 = vmatpush1.msra.mxu0 0.0
    %1618 = vmatprep.subr.mxu0 0.0
    %1619 = vmatpush1.msra.mxu0 0.0
    %1620 = vmatprep.subr.mxu0 0.0
    %1621 = vmatpush1.msra.mxu0 0.0
    %1622 = vmatprep.subr.mxu0 0.0
    %1623 = vmatpush1.msra.mxu0 0.0
    %1624 = vmatprep.subr.mxu0 0.0
    %1625 = vmatpush1.msra.mxu0 0.0
    %1626 = vmatprep.subr.mxu0 0.0
    %1627 = vmatpush1.msra.mxu0 0.0
    %1628 = vmatprep.subr.mxu0 0.0
    %1629 = vmatpush1.msra.mxu0 0.0
    %1630 = vmatprep.subr.mxu0 0.0
    %1631 = vmatpush1.msra.mxu0 0.0
    %1632 = vmatprep.subr.mxu0 0.0
    %1633 = vmatpush1.msra.mxu0 0.0
    %1634 = vmatprep.subr.mxu0 0.0
    %1635 = vmatpush1.msra.mxu0 0.0
    %1636 = vmatprep.subr.mxu0 0.0
    %1637 = vmatpush1.msra.mxu0 0.0
    %1638 = vmatprep.subr.mxu0 0.0
    %1639 = vmatpush1.msra.mxu0 0.0
    %1640 = vmatprep.subr.mxu0 0.0
    %1641 = vmatpush1.msra.mxu0 0.0
    %1642 = vmatprep.subr.mxu0 0.0
    %1643 = vmatpush1.msra.mxu0 0.0
    %1644 = vmatprep.subr.mxu0 0.0
    %1645 = vmatpush1.msra.mxu0 0.0
    %1646 = vmatprep.subr.mxu0 0.0
    %1647 = vmatpush1.msra.mxu0 0.0
    %1648 = vmatprep.subr.mxu0 0.0
    %1649 = vmatpush1.msra.mxu0 0.0
    %1650 = vmatprep.subr.mxu0 0.0
    %1651 = vmatpush1.msra.mxu0 0.0
    %1652 = vmatprep.subr.mxu0 0.0
    %1653 = vmatpush1.msra.mxu0 0.0
    %1654 = vmatprep.subr.mxu0 0.0
    %1655 = vmatpush1.msra.mxu0 0.0
    %1656 = vmatprep.subr.mxu0 0.0
    %1657 = vmatpush1.msra.mxu0 0.0
    %1658 = vmatprep.subr.mxu0 0.0
    %1659 = vmatpush1.msra.mxu0 0.0
    %1660 = vmatprep.subr.mxu0 0.0
    %1661 = vmatpush1.msra.mxu0 0.0
    %1662 = vmatprep.subr.mxu0 0.0
    %1663 = vmatpush1.msra.mxu0 0.0
    %1664 = vmatprep.subr.mxu0 0.0
    %1665 = vmatpush1.msra.mxu0 0.0
    %1666 = vmatprep.subr.mxu0 0.0
    %1667 = vmatpush1.msra.mxu0 0.0
    %1668 = vmatprep.subr.mxu0 0.0
    %1669 = vmatpush1.msra.mxu0 0.0
    %1670 = vmatprep.subr.mxu0 0.0
    %1671 = vmatpush1.msra.mxu0 0.0
    %1672 = vmatprep.mubr.f32.mxu0 0.0
    %1673 = vmatmul.mubr.f32.gmra.mrb[0].mxu0 %v1603
    %v1674 = vpop.f32.mrb[0].mxu0
    %v1675 = vadd.f32 0.0, %v1674
    %v1676 = vpop.f32.mrb[0].mxu0
    %1677 = vmatprep.mubr.f32.mxu0 0.0
    %1678 = vmatmul.mubr.f32.gmra.mrb[0].mxu0 %v1606
    %v1679 = vpop.f32.mrb[0].mxu0
    %v1680 = vadd.f32 0.0, %v1679
    %v1681 = vpop.f32.mrb[0].mxu0
    %1682 = vdwg.mxu0
    %v1683 = vadd.f32 %v905, %v1242
    %v1684 = vadd.f32 %v906, %v1498
    %v1685 = vadd.f32 %v1683, %v1675
    %v1686 = vadd.f32 %v1684, %v1680
    %v1687 = vsel %vm126, %v1685, 0.0
    %1688 = vadd.xlane.f32.xlu0 %v1687
    %v1689 = vpop.xlane.xlu0 %1688
    %v1690 = vsel %vm126, %v1686, 0.0
    %1691 = vadd.xlane.f32.xlu0 %v1690
    %v1692 = vpop.xlane.xlu0 %1691
    %v1693 = vmul.f32 %v1689, %v133
    %v1694 = vmul.f32 %v1692, %v133
    %v1695 = vsub.f32 %v1685, %v1693
    %v1696 = vsub.f32 %v1686, %v1694
    %v1697 = vmul.f32 %v1695, %v1695
    %v1698 = vmul.f32 %v1696, %v1696
    %v1699 = vsel %vm126, %v1697, 0.0
    %1700 = vadd.xlane.f32.xlu0 %v1699
    %v1701 = vpop.xlane.xlu0 %1700
    %v1702 = vsel %vm126, %v1698, 0.0
    %1703 = vadd.xlane.f32.xlu0 %v1702
    %v1704 = vpop.xlane.xlu0 %1703
    %v1705 = vmul.f32 %v1701, %v133
    %v1706 = vmul.f32 %v1704, %v133
    %v1707 = vadd.f32 %v1705, 1e-05
    %v1708 = vadd.f32 %v1706, 1e-05
    %v1709 = vrsqrt.pop %v1707
    %v1710 = vrsqrt.pop %v1708
    %v1711 = vmul.f32 %v1695, %v1709
    %v1712 = vmul.f32 %v1696, %v1710
    %v1713 = vld [vmem:[#allocation5 + $0x2] sm:$0x1]
    %v1714 = vlaneseq
    %v1715 = vshrl.u32 %v1714, 7
    %v1716 = vsub.s32 0, %v1715
    %v1717 = vrot.slane %v1713, %v1716
    %v1718 = vmul.f32 %v1711, %v1717
    %v1719 = vmul.f32 %v1712, %v1717
    %v1720 = vld [vmem:[%s2 + $0x2] sm:$0x1]
    %v1721 = vlaneseq
    %v1722 = vshrl.u32 %v1721, 7
    %v1723 = vsub.s32 0, %v1722
    %v1724 = vrot.slane %v1720, %v1723
    %v1725 = vadd.f32 %v1718, %v1724
    %v1726 = vadd.f32 %v1719, %v1724
    %v1727 = vld [vmem:[#allocation7 + $0x8] sm:$0x1]
    %v1728 = vlaneseq
    %v1729 = vshrl.u32 %v1728, 7
    %v1730 = vsub.s32 0, %v1729
    %v1731 = vrot.slane %v1727, %v1730
    %v1732 = vmul.f32 %v1725, %v1731
    %v1733 = vld [vmem:[#allocation7 + $0x9] sm:$0x1]
    %v1734 = vlaneseq
    %v1735 = vshrl.u32 %v1734, 7
    %v1736 = vsub.s32 0, %v1735
    %v1737 = vrot.slane %v1733, %v1736
    %v1738 = vmul.f32 %v1725, %v1737
    %v1739 = vld [vmem:[#allocation7 + $0xa] sm:$0x1]
    %v1740 = vlaneseq
    %v1741 = vshrl.u32 %v1740, 7
    %v1742 = vsub.s32 0, %v1741
    %v1743 = vrot.slane %v1739, %v1742
    %v1744 = vmul.f32 %v1725, %v1743
    %v1745 = vld [vmem:[#allocation7 + $0xb] sm:$0x1]
    %v1746 = vlaneseq
    %v1747 = vshrl.u32 %v1746, 7
    %v1748 = vsub.s32 0, %v1747
    %v1749 = vrot.slane %v1745, %v1748
    %v1750 = vmul.f32 %v1725, %v1749
    %v1752 = vsel %vm126, %v1732, 0
    %v1755 = vsel %vm126, %v1738, 0
    %v1758 = vsel %vm126, %v1744, 0
    %v1761 = vsel %vm126, %v1750, 0
    %v1764 = vsel %vm126, %v1725, 0
    %1766 = vmatprep.subr.mxu0 0.0
    %1767 = vmatpush1.xpose.msra.mxu0 %v1764
    %1768 = vmatprep.subr.mxu0 0.0
    %1769 = vmatpush1.xpose.msra.mxu0 0.0
    %1770 = vmatprep.subr.mxu0 0.0
    %1771 = vmatpush1.xpose.msra.mxu0 0.0
    %1772 = vmatprep.subr.mxu0 0.0
    %1773 = vmatpush1.xpose.msra.mxu0 0.0
    %1774 = vmatprep.subr.mxu0 0.0
    %1775 = vmatpush1.xpose.msra.mxu0 0.0
    %1776 = vmatprep.subr.mxu0 0.0
    %1777 = vmatpush1.xpose.msra.mxu0 0.0
    %1778 = vmatprep.subr.mxu0 0.0
    %1779 = vmatpush1.xpose.msra.mxu0 0.0
    %1780 = vmatprep.subr.mxu0 0.0
    %1781 = vmatpush1.xpose.msra.mxu0 0.0
    %1782 = vmatprep.subr.mxu0 0.0
    %1783 = vmatpush1.xpose.msra.mxu0 0.0
    %1784 = vmatprep.subr.mxu0 0.0
    %1785 = vmatpush1.xpose.msra.mxu0 0.0
    %1786 = vmatprep.subr.mxu0 0.0
    %1787 = vmatpush1.xpose.msra.mxu0 0.0
    %1788 = vmatprep.subr.mxu0 0.0
    %1789 = vmatpush1.xpose.msra.mxu0 0.0
    %1790 = vmatprep.subr.mxu0 0.0
    %1791 = vmatpush1.xpose.msra.mxu0 0.0
    %1792 = vmatprep.subr.mxu0 0.0
    %1793 = vmatpush1.xpose.msra.mxu0 0.0
    %1794 = vmatprep.subr.mxu0 0.0
    %1795 = vmatpush1.xpose.msra.mxu0 0.0
    %1796 = vmatprep.subr.mxu0 0.0
    %1797 = vmatpush1.xpose.msra.mxu0 0.0
    %1798 = vmatprep.subr.mxu0 0.0
    %1799 = vmatpush1.xpose.msra.mxu0 0.0
    %1800 = vmatprep.subr.mxu0 0.0
    %1801 = vmatpush1.xpose.msra.mxu0 0.0
    %1802 = vmatprep.subr.mxu0 0.0
    %1803 = vmatpush1.xpose.msra.mxu0 0.0
    %1804 = vmatprep.subr.mxu0 0.0
    %1805 = vmatpush1.xpose.msra.mxu0 0.0
    %1806 = vmatprep.subr.mxu0 0.0
    %1807 = vmatpush1.xpose.msra.mxu0 0.0
    %1808 = vmatprep.subr.mxu0 0.0
    %1809 = vmatpush1.xpose.msra.mxu0 0.0
    %1810 = vmatprep.subr.mxu0 0.0
    %1811 = vmatpush1.xpose.msra.mxu0 0.0
    %1812 = vmatprep.subr.mxu0 0.0
    %1813 = vmatpush1.xpose.msra.mxu0 0.0
    %1814 = vmatprep.subr.mxu0 0.0
    %1815 = vmatpush1.xpose.msra.mxu0 0.0
    %1816 = vmatprep.subr.mxu0 0.0
    %1817 = vmatpush1.xpose.msra.mxu0 0.0
    %1818 = vmatprep.subr.mxu0 0.0
    %1819 = vmatpush1.xpose.msra.mxu0 0.0
    %1820 = vmatprep.subr.mxu0 0.0
    %1821 = vmatpush1.xpose.msra.mxu0 0.0
    %1822 = vmatprep.subr.mxu0 0.0
    %1823 = vmatpush1.xpose.msra.mxu0 0.0
    %1824 = vmatprep.subr.mxu0 0.0
    %1825 = vmatpush1.xpose.msra.mxu0 0.0
    %1826 = vmatprep.subr.mxu0 0.0
    %1827 = vmatpush1.xpose.msra.mxu0 0.0
    %1828 = vmatprep.subr.mxu0 0.0
    %1829 = vmatpush1.xpose.msra.mxu0 0.0
    %1830 = vmatprep.mubr.f32.mxu0 0.0
    %1831 = vmatmul.mubr.f32.gmra.mrb[0].mxu0 %v1752
    %v1832 = vpop.f32.mrb[0].mxu0
    %v1833 = vadd.f32 0.0, %v1832
    %v1834 = vpop.f32.mrb[0].mxu0
    %1835 = vmatprep.mubr.f32.mxu0 0.0
    %1836 = vmatmul.mubr.f32.gmra.mrb[0].mxu0 %v1755
    %v1837 = vpop.f32.mrb[0].mxu0
    %v1838 = vadd.f32 0.0, %v1837
    %v1839 = vpop.f32.mrb[0].mxu0
    %1840 = vmatprep.mubr.f32.mxu0 0.0
    %1841 = vmatmul.mubr.f32.gmra.mrb[0].mxu0 %v1758
    %v1842 = vpop.f32.mrb[0].mxu0
    %v1843 = vadd.f32 0.0, %v1842
    %v1844 = vpop.f32.mrb[0].mxu0
    %1845 = vmatprep.mubr.f32.mxu0 0.0
    %1846 = vmatmul.mubr.f32.gmra.mrb[0].mxu0 %v1761
    %v1847 = vpop.f32.mrb[0].mxu0
    %v1848 = vadd.f32 0.0, %v1847
    %v1849 = vpop.f32.mrb[0].mxu0
    %1850 = vdwg.mxu0
    %v1851 = vmul.f32 %v1833, 0.35355338
    %v1852 = vmul.f32 %v1838, 0.35355338
    %v1853 = vmul.f32 %v1843, 0.35355338
    %v1854 = vmul.f32 %v1848, 0.35355338
    %v1855 = vsel %vm296, %v1851, -inf
    %1856 = vmax.xlane.f32.xlu0 %v1855
    %v1857 = vpop.xlane.xlu0 %1856
    %v1858 = vsel %vm296, %v1852, -inf
    %1859 = vmax.xlane.f32.xlu0 %v1858
    %v1860 = vpop.xlane.xlu0 %1859
    %v1861 = vsel %vm296, %v1853, -inf
    %1862 = vmax.xlane.f32.xlu0 %v1861
    %v1863 = vpop.xlane.xlu0 %1862
    %v1864 = vsel %vm296, %v1854, -inf
    %1865 = vmax.xlane.f32.xlu0 %v1864
    %v1866 = vpop.xlane.xlu0 %1865
    %v1867 = vsub.f32 %v1851, %v1857
    %v1868 = vsub.f32 %v1852, %v1860
    %v1869 = vsub.f32 %v1853, %v1863
    %v1870 = vsub.f32 %v1854, %v1866
    %v1871 = vmul.f32 %v1867, 1.442695
    %v1872 = vpow.pop %v1871
    %v1873 = vmul.f32 %v1868, 1.442695
    %v1874 = vpow.pop %v1873
    %v1875 = vmul.f32 %v1869, 1.442695
    %v1876 = vpow.pop %v1875
    %v1877 = vmul.f32 %v1870, 1.442695
    %v1878 = vpow.pop %v1877
    %v1879 = vsel %vm296, %v1872, 0.0
    %1880 = vadd.xlane.f32.xlu0 %v1879
    %v1881 = vpop.xlane.xlu0 %1880
    %v1882 = vsel %vm296, %v1874, 0.0
    %1883 = vadd.xlane.f32.xlu0 %v1882
    %v1884 = vpop.xlane.xlu0 %1883
    %v1885 = vsel %vm296, %v1876, 0.0
    %1886 = vadd.xlane.f32.xlu0 %v1885
    %v1887 = vpop.xlane.xlu0 %1886
    %v1888 = vsel %vm296, %v1878, 0.0
    %1889 = vadd.xlane.f32.xlu0 %v1888
    %v1890 = vpop.xlane.xlu0 %1889
    %v1891 = vrcp.pop %v1881
    %v1892 = vrcp.pop %v1884
    %v1893 = vrcp.pop %v1887
    %v1894 = vrcp.pop %v1890
    %v1895 = vmul.f32 %v1872, %v1891
    %v1896 = vmul.f32 %v1874, %v1892
    %v1897 = vmul.f32 %v1876, %v1893
    %v1898 = vmul.f32 %v1878, %v1894
    %v1900 = vsel %vm296, %v1895, 0
    %v1903 = vsel %vm296, %v1896, 0
    %v1906 = vsel %vm296, %v1897, 0
    %v1909 = vsel %vm296, %v1898, 0
    %1911 = vmatprep.subr.mxu0 0.0
    %1912 = vmatpush1.msra.mxu0 %v1725
    %1913 = vmatprep.subr.mxu0 0.0
    %1914 = vmatpush1.msra.mxu0 0.0
    %1915 = vmatprep.subr.mxu0 0.0
    %1916 = vmatpush1.msra.mxu0 0.0
    %1917 = vmatprep.subr.mxu0 0.0
    %1918 = vmatpush1.msra.mxu0 0.0
    %1919 = vmatprep.subr.mxu0 0.0
    %1920 = vmatpush1.msra.mxu0 0.0
    %1921 = vmatprep.subr.mxu0 0.0
    %1922 = vmatpush1.msra.mxu0 0.0
    %1923 = vmatprep.subr.mxu0 0.0
    %1924 = vmatpush1.msra.mxu0 0.0
    %1925 = vmatprep.subr.mxu0 0.0
    %1926 = vmatpush1.msra.mxu0 0.0
    %1927 = vmatprep.subr.mxu0 0.0
    %1928 = vmatpush1.msra.mxu0 0.0
    %1929 = vmatprep.subr.mxu0 0.0
    %1930 = vmatpush1.msra.mxu0 0.0
    %1931 = vmatprep.subr.mxu0 0.0
    %1932 = vmatpush1.msra.mxu0 0.0
    %1933 = vmatprep.subr.mxu0 0.0
    %1934 = vmatpush1.msra.mxu0 0.0
    %1935 = vmatprep.subr.mxu0 0.0
    %1936 = vmatpush1.msra.mxu0 0.0
    %1937 = vmatprep.subr.mxu0 0.0
    %1938 = vmatpush1.msra.mxu0 0.0
    %1939 = vmatprep.subr.mxu0 0.0
    %1940 = vmatpush1.msra.mxu0 0.0
    %1941 = vmatprep.subr.mxu0 0.0
    %1942 = vmatpush1.msra.mxu0 0.0
    %1943 = vmatprep.subr.mxu0 0.0
    %1944 = vmatpush1.msra.mxu0 0.0
    %1945 = vmatprep.subr.mxu0 0.0
    %1946 = vmatpush1.msra.mxu0 0.0
    %1947 = vmatprep.subr.mxu0 0.0
    %1948 = vmatpush1.msra.mxu0 0.0
    %1949 = vmatprep.subr.mxu0 0.0
    %1950 = vmatpush1.msra.mxu0 0.0
    %1951 = vmatprep.subr.mxu0 0.0
    %1952 = vmatpush1.msra.mxu0 0.0
    %1953 = vmatprep.subr.mxu0 0.0
    %1954 = vmatpush1.msra.mxu0 0.0
    %1955 = vmatprep.subr.mxu0 0.0
    %1956 = vmatpush1.msra.mxu0 0.0
    %1957 = vmatprep.subr.mxu0 0.0
    %1958 = vmatpush1.msra.mxu0 0.0
    %1959 = vmatprep.subr.mxu0 0.0
    %1960 = vmatpush1.msra.mxu0 0.0
    %1961 = vmatprep.subr.mxu0 0.0
    %1962 = vmatpush1.msra.mxu0 0.0
    %1963 = vmatprep.subr.mxu0 0.0
    %1964 = vmatpush1.msra.mxu0 0.0
    %1965 = vmatprep.subr.mxu0 0.0
    %1966 = vmatpush1.msra.mxu0 0.0
    %1967 = vmatprep.subr.mxu0 0.0
    %1968 = vmatpush1.msra.mxu0 0.0
    %1969 = vmatprep.subr.mxu0 0.0
    %1970 = vmatpush1.msra.mxu0 0.0
    %1971 = vmatprep.subr.mxu0 0.0
    %1972 = vmatpush1.msra.mxu0 0.0
    %1973 = vmatprep.subr.mxu0 0.0
    %1974 = vmatpush1.msra.mxu0 0.0
    %1975 = vmatprep.mubr.f32.mxu0 0.0
    %1976 = vmatmul.mubr.f32.gmra.mrb[0].mxu0 %v1900
    %v1977 = vpop.f32.mrb[0].mxu0
    %v1978 = vadd.f32 0.0, %v1977
    %v1979 = vpop.f32.mrb[0].mxu0
    %1980 = vmatprep.mubr.f32.mxu0 0.0
    %1981 = vmatmul.mubr.f32.gmra.mrb[0].mxu0 %v1903
    %v1982 = vpop.f32.mrb[0].mxu0
    %v1983 = vadd.f32 0.0, %v1982
    %v1984 = vpop.f32.mrb[0].mxu0
    %1985 = vmatprep.mubr.f32.mxu0 0.0
    %1986 = vmatmul.mubr.f32.gmra.mrb[0].mxu0 %v1906
    %v1987 = vpop.f32.mrb[0].mxu0
    %v1988 = vadd.f32 0.0, %v1987
    %v1989 = vpop.f32.mrb[0].mxu0
    %1990 = vmatprep.mubr.f32.mxu0 0.0
    %1991 = vmatmul.mubr.f32.gmra.mrb[0].mxu0 %v1909
    %v1992 = vpop.f32.mrb[0].mxu0
    %v1993 = vadd.f32 0.0, %v1992
    %v1994 = vpop.f32.mrb[0].mxu0
    %1995 = vdwg.mxu0
    %v1996 = vld [vmem:[#allocation8 + $0x8] sm:$0x1]
    %v1997 = vlaneseq
    %v1998 = vshrl.u32 %v1997, 7
    %v1999 = vsub.s32 0, %v1998
    %v2000 = vrot.slane %v1996, %v1999
    %v2001 = vmul.f32 %v1978, %v2000
    %v2002 = vld [vmem:[#allocation8 + $0x9] sm:$0x1]
    %v2003 = vlaneseq
    %v2004 = vshrl.u32 %v2003, 7
    %v2005 = vsub.s32 0, %v2004
    %v2006 = vrot.slane %v2002, %v2005
    %v2007 = vmul.f32 %v1983, %v2006
    %v2008 = vadd.f32 %v2001, %v2007
    %v2009 = vld [vmem:[#allocation8 + $0xa] sm:$0x1]
    %v2010 = vlaneseq
    %v2011 = vshrl.u32 %v2010, 7
    %v2012 = vsub.s32 0, %v2011
    %v2013 = vrot.slane %v2009, %v2012
    %v2014 = vmul.f32 %v1988, %v2013
    %v2015 = vadd.f32 %v2008, %v2014
    %v2016 = vld [vmem:[#allocation8 + $0xb] sm:$0x1]
    %v2017 = vlaneseq
    %v2018 = vshrl.u32 %v2017, 7
    %v2019 = vsub.s32 0, %v2018
    %v2020 = vrot.slane %v2016, %v2019
    %v2021 = vmul.f32 %v1993, %v2020
    %v2022 = vadd.f32 %v2015, %v2021
    %v2023 = vmul.f32 %v1726, %v1731
    %v2024 = vmul.f32 %v1726, %v1737
    %v2025 = vmul.f32 %v1726, %v1743
    %v2026 = vmul.f32 %v1726, %v1749
    %v2028 = vsel %vm126, %v2023, 0
    %v2031 = vsel %vm126, %v2024, 0
    %v2034 = vsel %vm126, %v2025, 0
    %v2037 = vsel %vm126, %v2026, 0
    %v2040 = vsel %vm126, %v1726, 0
    %2042 = vmatprep.subr.mxu0 0.0
    %2043 = vmatpush1.xpose.msra.mxu0 %v2040
    %2044 = vmatprep.subr.mxu0 0.0
    %2045 = vmatpush1.xpose.msra.mxu0 0.0
    %2046 = vmatprep.subr.mxu0 0.0
    %2047 = vmatpush1.xpose.msra.mxu0 0.0
    %2048 = vmatprep.subr.mxu0 0.0
    %2049 = vmatpush1.xpose.msra.mxu0 0.0
    %2050 = vmatprep.subr.mxu0 0.0
    %2051 = vmatpush1.xpose.msra.mxu0 0.0
    %2052 = vmatprep.subr.mxu0 0.0
    %2053 = vmatpush1.xpose.msra.mxu0 0.0
    %2054 = vmatprep.subr.mxu0 0.0
    %2055 = vmatpush1.xpose.msra.mxu0 0.0
    %2056 = vmatprep.subr.mxu0 0.0
    %2057 = vmatpush1.xpose.msra.mxu0 0.0
    %2058 = vmatprep.subr.mxu0 0.0
    %2059 = vmatpush1.xpose.msra.mxu0 0.0
    %2060 = vmatprep.subr.mxu0 0.0
    %2061 = vmatpush1.xpose.msra.mxu0 0.0
    %2062 = vmatprep.subr.mxu0 0.0
    %2063 = vmatpush1.xpose.msra.mxu0 0.0
    %2064 = vmatprep.subr.mxu0 0.0
    %2065 = vmatpush1.xpose.msra.mxu0 0.0
    %2066 = vmatprep.subr.mxu0 0.0
    %2067 = vmatpush1.xpose.msra.mxu0 0.0
    %2068 = vmatprep.subr.mxu0 0.0
    %2069 = vmatpush1.xpose.msra.mxu0 0.0
    %2070 = vmatprep.subr.mxu0 0.0
    %2071 = vmatpush1.xpose.msra.mxu0 0.0
    %2072 = vmatprep.subr.mxu0 0.0
    %2073 = vmatpush1.xpose.msra.mxu0 0.0
    %2074 = vmatprep.subr.mxu0 0.0
    %2075 = vmatpush1.xpose.msra.mxu0 0.0
    %2076 = vmatprep.subr.mxu0 0.0
    %2077 = vmatpush1.xpose.msra.mxu0 0.0
    %2078 = vmatprep.subr.mxu0 0.0
    %2079 = vmatpush1.xpose.msra.mxu0 0.0
    %2080 = vmatprep.subr.mxu0 0.0
    %2081 = vmatpush1.xpose.msra.mxu0 0.0
    %2082 = vmatprep.subr.mxu0 0.0
    %2083 = vmatpush1.xpose.msra.mxu0 0.0
    %2084 = vmatprep.subr.mxu0 0.0
    %2085 = vmatpush1.xpose.msra.mxu0 0.0
    %2086 = vmatprep.subr.mxu0 0.0
    %2087 = vmatpush1.xpose.msra.mxu0 0.0
    %2088 = vmatprep.subr.mxu0 0.0
    %2089 = vmatpush1.xpose.msra.mxu0 0.0
    %2090 = vmatprep.subr.mxu0 0.0
    %2091 = vmatpush1.xpose.msra.mxu0 0.0
    %2092 = vmatprep.subr.mxu0 0.0
    %2093 = vmatpush1.xpose.msra.mxu0 0.0
    %2094 = vmatprep.subr.mxu0 0.0
    %2095 = vmatpush1.xpose.msra.mxu0 0.0
    %2096 = vmatprep.subr.mxu0 0.0
    %2097 = vmatpush1.xpose.msra.mxu0 0.0
    %2098 = vmatprep.subr.mxu0 0.0
    %2099 = vmatpush1.xpose.msra.mxu0 0.0
    %2100 = vmatprep.subr.mxu0 0.0
    %2101 = vmatpush1.xpose.msra.mxu0 0.0
    %2102 = vmatprep.subr.mxu0 0.0
    %2103 = vmatpush1.xpose.msra.mxu0 0.0
    %2104 = vmatprep.subr.mxu0 0.0
    %2105 = vmatpush1.xpose.msra.mxu0 0.0
    %2106 = vmatprep.mubr.f32.mxu0 0.0
    %2107 = vmatmul.mubr.f32.gmra.mrb[0].mxu0 %v2028
    %v2108 = vpop.f32.mrb[0].mxu0
    %v2109 = vadd.f32 0.0, %v2108
    %v2110 = vpop.f32.mrb[0].mxu0
    %2111 = vmatprep.mubr.f32.mxu0 0.0
    %2112 = vmatmul.mubr.f32.gmra.mrb[0].mxu0 %v2031
    %v2113 = vpop.f32.mrb[0].mxu0
    %v2114 = vadd.f32 0.0, %v2113
    %v2115 = vpop.f32.mrb[0].mxu0
    %2116 = vmatprep.mubr.f32.mxu0 0.0
    %2117 = vmatmul.mubr.f32.gmra.mrb[0].mxu0 %v2034
    %v2118 = vpop.f32.mrb[0].mxu0
    %v2119 = vadd.f32 0.0, %v2118
    %v2120 = vpop.f32.mrb[0].mxu0
    %2121 = vmatprep.mubr.f32.mxu0 0.0
    %2122 = vmatmul.mubr.f32.gmra.mrb[0].mxu0 %v2037
    %v2123 = vpop.f32.mrb[0].mxu0
    %v2124 = vadd.f32 0.0, %v2123
    %v2125 = vpop.f32.mrb[0].mxu0
    %2126 = vdwg.mxu0
    %v2127 = vmul.f32 %v2109, 0.35355338
    %v2128 = vmul.f32 %v2114, 0.35355338
    %v2129 = vmul.f32 %v2119, 0.35355338
    %v2130 = vmul.f32 %v2124, 0.35355338
    %v2131 = vsel %vm296, %v2127, -inf
    %2132 = vmax.xlane.f32.xlu0 %v2131
    %v2133 = vpop.xlane.xlu0 %2132
    %v2134 = vsel %vm296, %v2128, -inf
    %2135 = vmax.xlane.f32.xlu0 %v2134
    %v2136 = vpop.xlane.xlu0 %2135
    %v2137 = vsel %vm296, %v2129, -inf
    %2138 = vmax.xlane.f32.xlu0 %v2137
    %v2139 = vpop.xlane.xlu0 %2138
    %v2140 = vsel %vm296, %v2130, -inf
    %2141 = vmax.xlane.f32.xlu0 %v2140
    %v2142 = vpop.xlane.xlu0 %2141
    %v2143 = vsub.f32 %v2127, %v2133
    %v2144 = vsub.f32 %v2128, %v2136
    %v2145 = vsub.f32 %v2129, %v2139
    %v2146 = vsub.f32 %v2130, %v2142
    %v2147 = vmul.f32 %v2143, 1.442695
    %v2148 = vpow.pop %v2147
    %v2149 = vmul.f32 %v2144, 1.442695
    %v2150 = vpow.pop %v2149
    %v2151 = vmul.f32 %v2145, 1.442695
    %v2152 = vpow.pop %v2151
    %v2153 = vmul.f32 %v2146, 1.442695
    %v2154 = vpow.pop %v2153
    %v2155 = vsel %vm296, %v2148, 0.0
    %2156 = vadd.xlane.f32.xlu0 %v2155
    %v2157 = vpop.xlane.xlu0 %2156
    %v2158 = vsel %vm296, %v2150, 0.0
    %2159 = vadd.xlane.f32.xlu0 %v2158
    %v2160 = vpop.xlane.xlu0 %2159
    %v2161 = vsel %vm296, %v2152, 0.0
    %2162 = vadd.xlane.f32.xlu0 %v2161
    %v2163 = vpop.xlane.xlu0 %2162
    %v2164 = vsel %vm296, %v2154, 0.0
    %2165 = vadd.xlane.f32.xlu0 %v2164
    %v2166 = vpop.xlane.xlu0 %2165
    %v2167 = vrcp.pop %v2157
    %v2168 = vrcp.pop %v2160
    %v2169 = vrcp.pop %v2163
    %v2170 = vrcp.pop %v2166
    %v2171 = vmul.f32 %v2148, %v2167
    %v2172 = vmul.f32 %v2150, %v2168
    %v2173 = vmul.f32 %v2152, %v2169
    %v2174 = vmul.f32 %v2154, %v2170
    %v2176 = vsel %vm296, %v2171, 0
    %v2179 = vsel %vm296, %v2172, 0
    %v2182 = vsel %vm296, %v2173, 0
    %v2185 = vsel %vm296, %v2174, 0
    %2187 = vmatprep.subr.mxu0 0.0
    %2188 = vmatpush1.msra.mxu0 %v1726
    %2189 = vmatprep.subr.mxu0 0.0
    %2190 = vmatpush1.msra.mxu0 0.0
    %2191 = vmatprep.subr.mxu0 0.0
    %2192 = vmatpush1.msra.mxu0 0.0
    %2193 = vmatprep.subr.mxu0 0.0
    %2194 = vmatpush1.msra.mxu0 0.0
    %2195 = vmatprep.subr.mxu0 0.0
    %2196 = vmatpush1.msra.mxu0 0.0
    %2197 = vmatprep.subr.mxu0 0.0
    %2198 = vmatpush1.msra.mxu0 0.0
    %2199 = vmatprep.subr.mxu0 0.0
    %2200 = vmatpush1.msra.mxu0 0.0
    %2201 = vmatprep.subr.mxu0 0.0
    %2202 = vmatpush1.msra.mxu0 0.0
    %2203 = vmatprep.subr.mxu0 0.0
    %2204 = vmatpush1.msra.mxu0 0.0
    %2205 = vmatprep.subr.mxu0 0.0
    %2206 = vmatpush1.msra.mxu0 0.0
    %2207 = vmatprep.subr.mxu0 0.0
    %2208 = vmatpush1.msra.mxu0 0.0
    %2209 = vmatprep.subr.mxu0 0.0
    %2210 = vmatpush1.msra.mxu0 0.0
    %2211 = vmatprep.subr.mxu0 0.0
    %2212 = vmatpush1.msra.mxu0 0.0
    %2213 = vmatprep.subr.mxu0 0.0
    %2214 = vmatpush1.msra.mxu0 0.0
    %2215 = vmatprep.subr.mxu0 0.0
    %2216 = vmatpush1.msra.mxu0 0.0
    %2217 = vmatprep.subr.mxu0 0.0
    %2218 = vmatpush1.msra.mxu0 0.0
    %2219 = vmatprep.subr.mxu0 0.0
    %2220 = vmatpush1.msra.mxu0 0.0
    %2221 = vmatprep.subr.mxu0 0.0
    %2222 = vmatpush1.msra.mxu0 0.0
    %2223 = vmatprep.subr.mxu0 0.0
    %2224 = vmatpush1.msra.mxu0 0.0
    %2225 = vmatprep.subr.mxu0 0.0
    %2226 = vmatpush1.msra.mxu0 0.0
    %2227 = vmatprep.subr.mxu0 0.0
    %2228 = vmatpush1.msra.mxu0 0.0
    %2229 = vmatprep.subr.mxu0 0.0
    %2230 = vmatpush1.msra.mxu0 0.0
    %2231 = vmatprep.subr.mxu0 0.0
    %2232 = vmatpush1.msra.mxu0 0.0
    %2233 = vmatprep.subr.mxu0 0.0
    %2234 = vmatpush1.msra.mxu0 0.0
    %2235 = vmatprep.subr.mxu0 0.0
    %2236 = vmatpush1.msra.mxu0 0.0
    %2237 = vmatprep.subr.mxu0 0.0
    %2238 = vmatpush1.msra.mxu0 0.0
    %2239 = vmatprep.subr.mxu0 0.0
    %2240 = vmatpush1.msra.mxu0 0.0
    %2241 = vmatprep.subr.mxu0 0.0
    %2242 = vmatpush1.msra.mxu0 0.0
    %2243 = vmatprep.subr.mxu0 0.0
    %2244 = vmatpush1.msra.mxu0 0.0
    %2245 = vmatprep.subr.mxu0 0.0
    %2246 = vmatpush1.msra.mxu0 0.0
    %2247 = vmatprep.subr.mxu0 0.0
    %2248 = vmatpush1.msra.mxu0 0.0
    %2249 = vmatprep.subr.mxu0 0.0
    %2250 = vmatpush1.msra.mxu0 0.0
    %2251 = vmatprep.mubr.f32.mxu0 0.0
    %2252 = vmatmul.mubr.f32.gmra.mrb[0].mxu0 %v2176
    %v2253 = vpop.f32.mrb[0].mxu0
    %v2254 = vadd.f32 0.0, %v2253
    %v2255 = vpop.f32.mrb[0].mxu0
    %2256 = vmatprep.mubr.f32.mxu0 0.0
    %2257 = vmatmul.mubr.f32.gmra.mrb[0].mxu0 %v2179
    %v2258 = vpop.f32.mrb[0].mxu0
    %v2259 = vadd.f32 0.0, %v2258
    %v2260 = vpop.f32.mrb[0].mxu0
    %2261 = vmatprep.mubr.f32.mxu0 0.0
    %2262 = vmatmul.mubr.f32.gmra.mrb[0].mxu0 %v2182
    %v2263 = vpop.f32.mrb[0].mxu0
    %v2264 = vadd.f32 0.0, %v2263
    %v2265 = vpop.f32.mrb[0].mxu0
    %2266 = vmatprep.mubr.f32.mxu0 0.0
    %2267 = vmatmul.mubr.f32.gmra.mrb[0].mxu0 %v2185
    %v2268 = vpop.f32.mrb[0].mxu0
    %v2269 = vadd.f32 0.0, %v2268
    %v2270 = vpop.f32.mrb[0].mxu0
    %2271 = vdwg.mxu0
    %v2272 = vmul.f32 %v2254, %v2000
    %v2273 = vmul.f32 %v2259, %v2006
    %v2274 = vadd.f32 %v2272, %v2273
    %v2275 = vmul.f32 %v2264, %v2013
    %v2276 = vadd.f32 %v2274, %v2275
    %v2277 = vmul.f32 %v2269, %v2020
    %v2278 = vadd.f32 %v2276, %v2277
    %s2279 = scalar_lea.vmem [#allocation10], 64
    %v2280 = vld [vmem:[%s2279] sm:$0xff]
    %v2281 = vld [vmem:[%s2279 + $0x8] sm:$0xff]
    %v2282 = vld [vmem:[%s2279 + $0x10] sm:$0xff]
    %v2283 = vld [vmem:[%s2279 + $0x18] sm:$0xff]
    %2284 = vmatprep.subr.mxu0 0.0
    %2285 = vmatpush1.msra.mxu0 %v2280
    %2286 = vmatprep.subr.mxu0 0.0
    %2287 = vmatpush1.msra.mxu0 %v2281
    %2288 = vmatprep.subr.mxu0 0.0
    %2289 = vmatpush1.msra.mxu0 %v2282
    %2290 = vmatprep.subr.mxu0 0.0
    %2291 = vmatpush1.msra.mxu0 %v2283
    %2292 = vmatprep.subr.mxu0 0.0
    %2293 = vmatpush1.msra.mxu0 0.0
    %2294 = vmatprep.subr.mxu0 0.0
    %2295 = vmatpush1.msra.mxu0 0.0
    %2296 = vmatprep.subr.mxu0 0.0
    %2297 = vmatpush1.msra.mxu0 0.0
    %2298 = vmatprep.subr.mxu0 0.0
    %2299 = vmatpush1.msra.mxu0 0.0
    %2300 = vmatprep.subr.mxu0 0.0
    %2301 = vmatpush1.msra.mxu0 0.0
    %2302 = vmatprep.subr.mxu0 0.0
    %2303 = vmatpush1.msra.mxu0 0.0
    %2304 = vmatprep.subr.mxu0 0.0
    %2305 = vmatpush1.msra.mxu0 0.0
    %2306 = vmatprep.subr.mxu0 0.0
    %2307 = vmatpush1.msra.mxu0 0.0
    %2308 = vmatprep.subr.mxu0 0.0
    %2309 = vmatpush1.msra.mxu0 0.0
    %2310 = vmatprep.subr.mxu0 0.0
    %2311 = vmatpush1.msra.mxu0 0.0
    %2312 = vmatprep.subr.mxu0 0.0
    %2313 = vmatpush1.msra.mxu0 0.0
    %2314 = vmatprep.subr.mxu0 0.0
    %2315 = vmatpush1.msra.mxu0 0.0
    %2316 = vmatprep.subr.mxu0 0.0
    %2317 = vmatpush1.msra.mxu0 0.0
    %2318 = vmatprep.subr.mxu0 0.0
    %2319 = vmatpush1.msra.mxu0 0.0
    %2320 = vmatprep.subr.mxu0 0.0
    %2321 = vmatpush1.msra.mxu0 0.0
    %2322 = vmatprep.subr.mxu0 0.0
    %2323 = vmatpush1.msra.mxu0 0.0
    %2324 = vmatprep.subr.mxu0 0.0
    %2325 = vmatpush1.msra.mxu0 0.0
    %2326 = vmatprep.subr.mxu0 0.0
    %2327 = vmatpush1.msra.mxu0 0.0
    %2328 = vmatprep.subr.mxu0 0.0
    %2329 = vmatpush1.msra.mxu0 0.0
    %2330 = vmatprep.subr.mxu0 0.0
    %2331 = vmatpush1.msra.mxu0 0.0
    %2332 = vmatprep.subr.mxu0 0.0
    %2333 = vmatpush1.msra.mxu0 0.0
    %2334 = vmatprep.subr.mxu0 0.0
    %2335 = vmatpush1.msra.mxu0 0.0
    %2336 = vmatprep.subr.mxu0 0.0
    %2337 = vmatpush1.msra.mxu0 0.0
    %2338 = vmatprep.subr.mxu0 0.0
    %2339 = vmatpush1.msra.mxu0 0.0
    %2340 = vmatprep.subr.mxu0 0.0
    %2341 = vmatpush1.msra.mxu0 0.0
    %2342 = vmatprep.subr.mxu0 0.0
    %2343 = vmatpush1.msra.mxu0 0.0
    %2344 = vmatprep.subr.mxu0 0.0
    %2345 = vmatpush1.msra.mxu0 0.0
    %2346 = vmatprep.subr.mxu0 0.0
    %2347 = vmatpush1.msra.mxu0 0.0
    %2348 = vmatprep.mubr.f32.mxu0 0.0
    %2349 = vmatmul.mubr.f32.gmra.mrb[0].mxu0 %v1764
    %v2350 = vpop.f32.mrb[0].mxu0
    %v2351 = vadd.f32 0.0, %v2350
    %v2352 = vpop.f32.mrb[0].mxu0
    %2353 = vmatprep.mubr.f32.mxu0 0.0
    %2354 = vmatmul.mubr.f32.gmra.mrb[0].mxu0 %v2040
    %v2355 = vpop.f32.mrb[0].mxu0
    %v2356 = vadd.f32 0.0, %v2355
    %v2357 = vpop.f32.mrb[0].mxu0
    %2358 = vdwg.mxu0
    %v2359 = vmul.f32 %v2351, 0.5
    %v2360 = vmul.f32 %v2356, 0.5
    %v2361 = vmul.f32 %v2351, 0.044715
    %v2362 = vmul.f32 %v2356, 0.044715
    %v2363 = vmul.f32 %v2361, %v2351
    %v2364 = vmul.f32 %v2362, %v2356
    %v2365 = vmul.f32 %v2363, %v2351
    %v2366 = vmul.f32 %v2364, %v2356
    %v2367 = vadd.f32 %v2351, %v2365
    %v2368 = vadd.f32 %v2356, %v2366
    %v2369 = vmul.f32 %v2367, 0.7978846
    %v2370 = vmul.f32 %v2368, 0.7978846
    %v2371 = vtanh.pop %v2369
    %v2372 = vtanh.pop %v2370
    %v2373 = vadd.f32 %v2371, 1.0
    %v2374 = vadd.f32 %v2372, 1.0
    %v2375 = vmul.f32 %v2359, %v2373
    %v2376 = vmul.f32 %v2360, %v2374
    %s2377 = scalar_lea.vmem [#allocation11], 64
    %v2378 = vld [vmem:[%s2377] sm:$0xff]
    %v2379 = vld [vmem:[%s2377 + $0x8] sm:$0xff]
    %v2380 = vld [vmem:[%s2377 + $0x10] sm:$0xff]
    %v2381 = vld [vmem:[%s2377 + $0x18] sm:$0xff]
    %v2383 = vsel %vm126, %v2375, 0
    %v2386 = vsel %vm126, %v2376, 0
    %2388 = vmatprep.subr.mxu0 0.0
    %2389 = vmatpush1.msra.mxu0 %v2378
    %2390 = vmatprep.subr.mxu0 0.0
    %2391 = vmatpush1.msra.mxu0 %v2379
    %2392 = vmatprep.subr.mxu0 0.0
    %2393 = vmatpush1.msra.mxu0 %v2380
    %2394 = vmatprep.subr.mxu0 0.0
    %2395 = vmatpush1.msra.mxu0 %v2381
    %2396 = vmatprep.subr.mxu0 0.0
    %2397 = vmatpush1.msra.mxu0 0.0
    %2398 = vmatprep.subr.mxu0 0.0
    %2399 = vmatpush1.msra.mxu0 0.0
    %2400 = vmatprep.subr.mxu0 0.0
    %2401 = vmatpush1.msra.mxu0 0.0
    %2402 = vmatprep.subr.mxu0 0.0
    %2403 = vmatpush1.msra.mxu0 0.0
    %2404 = vmatprep.subr.mxu0 0.0
    %2405 = vmatpush1.msra.mxu0 0.0
    %2406 = vmatprep.subr.mxu0 0.0
    %2407 = vmatpush1.msra.mxu0 0.0
    %2408 = vmatprep.subr.mxu0 0.0
    %2409 = vmatpush1.msra.mxu0 0.0
    %2410 = vmatprep.subr.mxu0 0.0
    %2411 = vmatpush1.msra.mxu0 0.0
    %2412 = vmatprep.subr.mxu0 0.0
    %2413 = vmatpush1.msra.mxu0 0.0
    %2414 = vmatprep.subr.mxu0 0.0
    %2415 = vmatpush1.msra.mxu0 0.0
    %2416 = vmatprep.subr.mxu0 0.0
    %2417 = vmatpush1.msra.mxu0 0.0
    %2418 = vmatprep.subr.mxu0 0.0
    %2419 = vmatpush1.msra.mxu0 0.0
    %2420 = vmatprep.subr.mxu0 0.0
    %2421 = vmatpush1.msra.mxu0 0.0
    %2422 = vmatprep.subr.mxu0 0.0
    %2423 = vmatpush1.msra.mxu0 0.0
    %2424 = vmatprep.subr.mxu0 0.0
    %2425 = vmatpush1.msra.mxu0 0.0
    %2426 = vmatprep.subr.mxu0 0.0
    %2427 = vmatpush1.msra.mxu0 0.0
    %2428 = vmatprep.subr.mxu0 0.0
    %2429 = vmatpush1.msra.mxu0 0.0
    %2430 = vmatprep.subr.mxu0 0.0
    %2431 = vmatpush1.msra.mxu0 0.0
    %2432 = vmatprep.subr.mxu0 0.0
    %2433 = vmatpush1.msra.mxu0 0.0
    %2434 = vmatprep.subr.mxu0 0.0
    %2435 = vmatpush1.msra.mxu0 0.0
    %2436 = vmatprep.subr.mxu0 0.0
    %2437 = vmatpush1.msra.mxu0 0.0
    %2438 = vmatprep.subr.mxu0 0.0
    %2439 = vmatpush1.msra.mxu0 0.0
    %2440 = vmatprep.subr.mxu0 0.0
    %2441 = vmatpush1.msra.mxu0 0.0
    %2442 = vmatprep.subr.mxu0 0.0
    %2443 = vmatpush1.msra.mxu0 0.0
    %2444 = vmatprep.subr.mxu0 0.0
    %2445 = vmatpush1.msra.mxu0 0.0
    %2446 = vmatprep.subr.mxu0 0.0
    %2447 = vmatpush1.msra.mxu0 0.0
    %2448 = vmatprep.subr.mxu0 0.0
    %2449 = vmatpush1.msra.mxu0 0.0
    %2450 = vmatprep.subr.mxu0 0.0
    %2451 = vmatpush1.msra.mxu0 0.0
    %2452 = vmatprep.mubr.f32.mxu0 0.0
    %2453 = vmatmul.mubr.f32.gmra.mrb[0].mxu0 %v2383
    %v2454 = vpop.f32.mrb[0].mxu0
    %v2455 = vadd.f32 0.0, %v2454
    %v2456 = vpop.f32.mrb[0].mxu0
    %2457 = vmatprep.mubr.f32.mxu0 0.0
    %2458 = vmatmul.mubr.f32.gmra.mrb[0].mxu0 %v2386
    %v2459 = vpop.f32.mrb[0].mxu0
    %v2460 = vadd.f32 0.0, %v2459
    %v2461 = vpop.f32.mrb[0].mxu0
    %2462 = vdwg.mxu0
    %v2463 = vadd.f32 %v1685, %v2022
    %v2464 = vadd.f32 %v1686, %v2278
    %v2465 = vadd.f32 %v2463, %v2455
    %v2466 = vadd.f32 %v2464, %v2460
    %v2467 = vsel %vm126, %v2465, 0.0
    %2468 = vadd.xlane.f32.xlu0 %v2467
    %v2469 = vpop.xlane.xlu0 %2468
    %v2470 = vsel %vm126, %v2466, 0.0
    %2471 = vadd.xlane.f32.xlu0 %v2470
    %v2472 = vpop.xlane.xlu0 %2471
    %v2473 = vmul.f32 %v2469, %v133
    %v2474 = vmul.f32 %v2472, %v133
    %v2475 = vsub.f32 %v2465, %v2473
    %v2476 = vsub.f32 %v2466, %v2474
    %v2477 = vmul.f32 %v2475, %v2475
    %v2478 = vmul.f32 %v2476, %v2476
    %v2479 = vsel %vm126, %v2477, 0.0
    %2480 = vadd.xlane.f32.xlu0 %v2479
    %v2481 = vpop.xlane.xlu0 %2480
    %v2482 = vsel %vm126, %v2478, 0.0
    %2483 = vadd.xlane.f32.xlu0 %v2482
    %v2484 = vpop.xlane.xlu0 %2483
    %v2485 = vmul.f32 %v2481, %v133
    %v2486 = vmul.f32 %v2484, %v133
    %v2487 = vadd.f32 %v2485, 1e-05
    %v2488 = vadd.f32 %v2486, 1e-05
    %v2489 = vrsqrt.pop %v2487
    %v2490 = vrsqrt.pop %v2488
    %v2491 = vmul.f32 %v2475, %v2489
    %v2492 = vmul.f32 %v2476, %v2490
    %v2493 = vld [vmem:[#allocation5 + $0x3] sm:$0x1]
    %v2494 = vlaneseq
    %v2495 = vshrl.u32 %v2494, 7
    %v2496 = vsub.s32 0, %v2495
    %v2497 = vrot.slane %v2493, %v2496
    %v2498 = vmul.f32 %v2491, %v2497
    %v2499 = vmul.f32 %v2492, %v2497
    %v2500 = vld [vmem:[%s2 + $0x3] sm:$0x1]
    %v2501 = vlaneseq
    %v2502 = vshrl.u32 %v2501, 7
    %v2503 = vsub.s32 0, %v2502
    %v2504 = vrot.slane %v2500, %v2503
    %v2505 = vadd.f32 %v2498, %v2504
    %v2506 = vadd.f32 %v2499, %v2504
    %v2507 = vld [vmem:[#allocation7 + $0xc] sm:$0x1]
    %v2508 = vlaneseq
    %v2509 = vshrl.u32 %v2508, 7
    %v2510 = vsub.s32 0, %v2509
    %v2511 = vrot.slane %v2507, %v2510
    %v2512 = vmul.f32 %v2505, %v2511
    %v2513 = vld [vmem:[#allocation7 + $0xd] sm:$0x1]
    %v2514 = vlaneseq
    %v2515 = vshrl.u32 %v2514, 7
    %v2516 = vsub.s32 0, %v2515
    %v2517 = vrot.slane %v2513, %v2516
    %v2518 = vmul.f32 %v2505, %v2517
    %v2519 = vld [vmem:[#allocation7 + $0xe] sm:$0x1]
    %v2520 = vlaneseq
    %v2521 = vshrl.u32 %v2520, 7
    %v2522 = vsub.s32 0, %v2521
    %v2523 = vrot.slane %v2519, %v2522
    %v2524 = vmul.f32 %v2505, %v2523
    %v2525 = vld [vmem:[#allocation7 + $0xf] sm:$0x1]
    %v2526 = vlaneseq
    %v2527 = vshrl.u32 %v2526, 7
    %v2528 = vsub.s32 0, %v2527
    %v2529 = vrot.slane %v2525, %v2528
    %v2530 = vmul.f32 %v2505, %v2529
    %v2532 = vsel %vm126, %v2512, 0
    %v2535 = vsel %vm126, %v2518, 0
    %v2538 = vsel %vm126, %v2524, 0
    %v2541 = vsel %vm126, %v2530, 0
    %v2544 = vsel %vm126, %v2505, 0
    %2546 = vmatprep.subr.mxu0 0.0
    %2547 = vmatpush1.xpose.msra.mxu0 %v2544
    %2548 = vmatprep.subr.mxu0 0.0
    %2549 = vmatpush1.xpose.msra.mxu0 0.0
    %2550 = vmatprep.subr.mxu0 0.0
    %2551 = vmatpush1.xpose.msra.mxu0 0.0
    %2552 = vmatprep.subr.mxu0 0.0
    %2553 = vmatpush1.xpose.msra.mxu0 0.0
    %2554 = vmatprep.subr.mxu0 0.0
    %2555 = vmatpush1.xpose.msra.mxu0 0.0
    %2556 = vmatprep.subr.mxu0 0.0
    %2557 = vmatpush1.xpose.msra.mxu0 0.0
    %2558 = vmatprep.subr.mxu0 0.0
    %2559 = vmatpush1.xpose.msra.mxu0 0.0
    %2560 = vmatprep.subr.mxu0 0.0
    %2561 = vmatpush1.xpose.msra.mxu0 0.0
    %2562 = vmatprep.subr.mxu0 0.0
    %2563 = vmatpush1.xpose.msra.mxu0 0.0
    %2564 = vmatprep.subr.mxu0 0.0
    %2565 = vmatpush1.xpose.msra.mxu0 0.0
    %2566 = vmatprep.subr.mxu0 0.0
    %2567 = vmatpush1.xpose.msra.mxu0 0.0
    %2568 = vmatprep.subr.mxu0 0.0
    %2569 = vmatpush1.xpose.msra.mxu0 0.0
    %2570 = vmatprep.subr.mxu0 0.0
    %2571 = vmatpush1.xpose.msra.mxu0 0.0
    %2572 = vmatprep.subr.mxu0 0.0
    %2573 = vmatpush1.xpose.msra.mxu0 0.0
    %2574 = vmatprep.subr.mxu0 0.0
    %2575 = vmatpush1.xpose.msra.mxu0 0.0
    %2576 = vmatprep.subr.mxu0 0.0
    %2577 = vmatpush1.xpose.msra.mxu0 0.0
    %2578 = vmatprep.subr.mxu0 0.0
    %2579 = vmatpush1.xpose.msra.mxu0 0.0
    %2580 = vmatprep.subr.mxu0 0.0
    %2581 = vmatpush1.xpose.msra.mxu0 0.0
    %2582 = vmatprep.subr.mxu0 0.0
    %2583 = vmatpush1.xpose.msra.mxu0 0.0
    %2584 = vmatprep.subr.mxu0 0.0
    %2585 = vmatpush1.xpose.msra.mxu0 0.0
    %2586 = vmatprep.subr.mxu0 0.0
    %2587 = vmatpush1.xpose.msra.mxu0 0.0
    %2588 = vmatprep.subr.mxu0 0.0
    %2589 = vmatpush1.xpose.msra.mxu0 0.0
    %2590 = vmatprep.subr.mxu0 0.0
    %2591 = vmatpush1.xpose.msra.mxu0 0.0
    %2592 = vmatprep.subr.mxu0 0.0
    %2593 = vmatpush1.xpose.msra.mxu0 0.0
    %2594 = vmatprep.subr.mxu0 0.0
    %2595 = vmatpush1.xpose.msra.mxu0 0.0
    %2596 = vmatprep.subr.mxu0 0.0
    %2597 = vmatpush1.xpose.msra.mxu0 0.0
    %2598 = vmatprep.subr.mxu0 0.0
    %2599 = vmatpush1.xpose.msra.mxu0 0.0
    %2600 = vmatprep.subr.mxu0 0.0
    %2601 = vmatpush1.xpose.msra.mxu0 0.0
    %2602 = vmatprep.subr.mxu0 0.0
    %2603 = vmatpush1.xpose.msra.mxu0 0.0
    %2604 = vmatprep.subr.mxu0 0.0
    %2605 = vmatpush1.xpose.msra.mxu0 0.0
    %2606 = vmatprep.subr.mxu0 0.0
    %2607 = vmatpush1.xpose.msra.mxu0 0.0
    %2608 = vmatprep.subr.mxu0 0.0
    %2609 = vmatpush1.xpose.msra.mxu0 0.0
    %2610 = vmatprep.mubr.f32.mxu0 0.0
    %2611 = vmatmul.mubr.f32.gmra.mrb[0].mxu0 %v2532
    %v2612 = vpop.f32.mrb[0].mxu0
    %v2613 = vadd.f32 0.0, %v2612
    %v2614 = vpop.f32.mrb[0].mxu0
    %2615 = vmatprep.mubr.f32.mxu0 0.0
    %2616 = vmatmul.mubr.f32.gmra.mrb[0].mxu0 %v2535
    %v2617 = vpop.f32.mrb[0].mxu0
    %v2618 = vadd.f32 0.0, %v2617
    %v2619 = vpop.f32.mrb[0].mxu0
    %2620 = vmatprep.mubr.f32.mxu0 0.0
    %2621 = vmatmul.mubr.f32.gmra.mrb[0].mxu0 %v2538
    %v2622 = vpop.f32.mrb[0].mxu0
    %v2623 = vadd.f32 0.0, %v2622
    %v2624 = vpop.f32.mrb[0].mxu0
    %2625 = vmatprep.mubr.f32.mxu0 0.0
    %2626 = vmatmul.mubr.f32.gmra.mrb[0].mxu0 %v2541
    %v2627 = vpop.f32.mrb[0].mxu0
    %v2628 = vadd.f32 0.0, %v2627
    %v2629 = vpop.f32.mrb[0].mxu0
    %2630 = vdwg.mxu0
    %v2631 = vmul.f32 %v2613, 0.35355338
    %v2632 = vmul.f32 %v2618, 0.35355338
    %v2633 = vmul.f32 %v2623, 0.35355338
    %v2634 = vmul.f32 %v2628, 0.35355338
    %v2635 = vsel %vm296, %v2631, -inf
    %2636 = vmax.xlane.f32.xlu0 %v2635
    %v2637 = vpop.xlane.xlu0 %2636
    %v2638 = vsel %vm296, %v2632, -inf
    %2639 = vmax.xlane.f32.xlu0 %v2638
    %v2640 = vpop.xlane.xlu0 %2639
    %v2641 = vsel %vm296, %v2633, -inf
    %2642 = vmax.xlane.f32.xlu0 %v2641
    %v2643 = vpop.xlane.xlu0 %2642
    %v2644 = vsel %vm296, %v2634, -inf
    %2645 = vmax.xlane.f32.xlu0 %v2644
    %v2646 = vpop.xlane.xlu0 %2645
    %v2647 = vsub.f32 %v2631, %v2637
    %v2648 = vsub.f32 %v2632, %v2640
    %v2649 = vsub.f32 %v2633, %v2643
    %v2650 = vsub.f32 %v2634, %v2646
    %v2651 = vmul.f32 %v2647, 1.442695
    %v2652 = vpow.pop %v2651
    %v2653 = vmul.f32 %v2648, 1.442695
    %v2654 = vpow.pop %v2653
    %v2655 = vmul.f32 %v2649, 1.442695
    %v2656 = vpow.pop %v2655
    %v2657 = vmul.f32 %v2650, 1.442695
    %v2658 = vpow.pop %v2657
    %v2659 = vsel %vm296, %v2652, 0.0
    %2660 = vadd.xlane.f32.xlu0 %v2659
    %v2661 = vpop.xlane.xlu0 %2660
    %v2662 = vsel %vm296, %v2654, 0.0
    %2663 = vadd.xlane.f32.xlu0 %v2662
    %v2664 = vpop.xlane.xlu0 %2663
    %v2665 = vsel %vm296, %v2656, 0.0
    %2666 = vadd.xlane.f32.xlu0 %v2665
    %v2667 = vpop.xlane.xlu0 %2666
    %v2668 = vsel %vm296, %v2658, 0.0
    %2669 = vadd.xlane.f32.xlu0 %v2668
    %v2670 = vpop.xlane.xlu0 %2669
    %v2671 = vrcp.pop %v2661
    %v2672 = vrcp.pop %v2664
    %v2673 = vrcp.pop %v2667
    %v2674 = vrcp.pop %v2670
    %v2675 = vmul.f32 %v2652, %v2671
    %v2676 = vmul.f32 %v2654, %v2672
    %v2677 = vmul.f32 %v2656, %v2673
    %v2678 = vmul.f32 %v2658, %v2674
    %v2680 = vsel %vm296, %v2675, 0
    %v2683 = vsel %vm296, %v2676, 0
    %v2686 = vsel %vm296, %v2677, 0
    %v2689 = vsel %vm296, %v2678, 0
    %2691 = vmatprep.subr.mxu0 0.0
    %2692 = vmatpush1.msra.mxu0 %v2505
    %2693 = vmatprep.subr.mxu0 0.0
    %2694 = vmatpush1.msra.mxu0 0.0
    %2695 = vmatprep.subr.mxu0 0.0
    %2696 = vmatpush1.msra.mxu0 0.0
    %2697 = vmatprep.subr.mxu0 0.0
    %2698 = vmatpush1.msra.mxu0 0.0
    %2699 = vmatprep.subr.mxu0 0.0
    %2700 = vmatpush1.msra.mxu0 0.0
    %2701 = vmatprep.subr.mxu0 0.0
    %2702 = vmatpush1.msra.mxu0 0.0
    %2703 = vmatprep.subr.mxu0 0.0
    %2704 = vmatpush1.msra.mxu0 0.0
    %2705 = vmatprep.subr.mxu0 0.0
    %2706 = vmatpush1.msra.mxu0 0.0
    %2707 = vmatprep.subr.mxu0 0.0
    %2708 = vmatpush1.msra.mxu0 0.0
    %2709 = vmatprep.subr.mxu0 0.0
    %2710 = vmatpush1.msra.mxu0 0.0
    %2711 = vmatprep.subr.mxu0 0.0
    %2712 = vmatpush1.msra.mxu0 0.0
    %2713 = vmatprep.subr.mxu0 0.0
    %2714 = vmatpush1.msra.mxu0 0.0
    %2715 = vmatprep.subr.mxu0 0.0
    %2716 = vmatpush1.msra.mxu0 0.0
    %2717 = vmatprep.subr.mxu0 0.0
    %2718 = vmatpush1.msra.mxu0 0.0
    %2719 = vmatprep.subr.mxu0 0.0
    %2720 = vmatpush1.msra.mxu0 0.0
    %2721 = vmatprep.subr.mxu0 0.0
    %2722 = vmatpush1.msra.mxu0 0.0
    %2723 = vmatprep.subr.mxu0 0.0
    %2724 = vmatpush1.msra.mxu0 0.0
    %2725 = vmatprep.subr.mxu0 0.0
    %2726 = vmatpush1.msra.mxu0 0.0
    %2727 = vmatprep.subr.mxu0 0.0
    %2728 = vmatpush1.msra.mxu0 0.0
    %2729 = vmatprep.subr.mxu0 0.0
    %2730 = vmatpush1.msra.mxu0 0.0
    %2731 = vmatprep.subr.mxu0 0.0
    %2732 = vmatpush1.msra.mxu0 0.0
    %2733 = vmatprep.subr.mxu0 0.0
    %2734 = vmatpush1.msra.mxu0 0.0
    %2735 = vmatprep.subr.mxu0 0.0
    %2736 = vmatpush1.msra.mxu0 0.0
    %2737 = vmatprep.subr.mxu0 0.0
    %2738 = vmatpush1.msra.mxu0 0.0
    %2739 = vmatprep.subr.mxu0 0.0
    %2740 = vmatpush1.msra.mxu0 0.0
    %2741 = vmatprep.subr.mxu0 0.0
    %2742 = vmatpush1.msra.mxu0 0.0
    %2743 = vmatprep.subr.mxu0 0.0
    %2744 = vmatpush1.msra.mxu0 0.0
    %2745 = vmatprep.subr.mxu0 0.0
    %2746 = vmatpush1.msra.mxu0 0.0
    %2747 = vmatprep.subr.mxu0 0.0
    %2748 = vmatpush1.msra.mxu0 0.0
    %2749 = vmatprep.subr.mxu0 0.0
    %2750 = vmatpush1.msra.mxu0 0.0
    %2751 = vmatprep.subr.mxu0 0.0
    %2752 = vmatpush1.msra.mxu0 0.0
    %2753 = vmatprep.subr.mxu0 0.0
    %2754 = vmatpush1.msra.mxu0 0.0
    %2755 = vmatprep.mubr.f32.mxu0 0.0
    %2756 = vmatmul.mubr.f32.gmra.mrb[0].mxu0 %v2680
    %v2757 = vpop.f32.mrb[0].mxu0
    %v2758 = vadd.f32 0.0, %v2757
    %v2759 = vpop.f32.mrb[0].mxu0
    %2760 = vmatprep.mubr.f32.mxu0 0.0
    %2761 = vmatmul.mubr.f32.gmra.mrb[0].mxu0 %v2683
    %v2762 = vpop.f32.mrb[0].mxu0
    %v2763 = vadd.f32 0.0, %v2762
    %v2764 = vpop.f32.mrb[0].mxu0
    %2765 = vmatprep.mubr.f32.mxu0 0.0
    %2766 = vmatmul.mubr.f32.gmra.mrb[0].mxu0 %v2686
    %v2767 = vpop.f32.mrb[0].mxu0
    %v2768 = vadd.f32 0.0, %v2767
    %v2769 = vpop.f32.mrb[0].mxu0
    %2770 = vmatprep.mubr.f32.mxu0 0.0
    %2771 = vmatmul.mubr.f32.gmra.mrb[0].mxu0 %v2689
    %v2772 = vpop.f32.mrb[0].mxu0
    %v2773 = vadd.f32 0.0, %v2772
    %v2774 = vpop.f32.mrb[0].mxu0
    %2775 = vdwg.mxu0
    %v2776 = vld [vmem:[#allocation8 + $0xc] sm:$0x1]
    %v2777 = vlaneseq
    %v2778 = vshrl.u32 %v2777, 7
    %v2779 = vsub.s32 0, %v2778
    %v2780 = vrot.slane %v2776, %v2779
    %v2781 = vmul.f32 %v2758, %v2780
    %v2782 = vld [vmem:[#allocation8 + $0xd] sm:$0x1]
    %v2783 = vlaneseq
    %v2784 = vshrl.u32 %v2783, 7
    %v2785 = vsub.s32 0, %v2784
    %v2786 = vrot.slane %v2782, %v2785
    %v2787 = vmul.f32 %v2763, %v2786
    %v2788 = vadd.f32 %v2781, %v2787
    %v2789 = vld [vmem:[#allocation8 + $0xe] sm:$0x1]
    %v2790 = vlaneseq
    %v2791 = vshrl.u32 %v2790, 7
    %v2792 = vsub.s32 0, %v2791
    %v2793 = vrot.slane %v2789, %v2792
    %v2794 = vmul.f32 %v2768, %v2793
    %v2795 = vadd.f32 %v2788, %v2794
    %v2796 = vld [vmem:[#allocation8 + $0xf] sm:$0x1]
    %v2797 = vlaneseq
    %v2798 = vshrl.u32 %v2797, 7
    %v2799 = vsub.s32 0, %v2798
    %v2800 = vrot.slane %v2796, %v2799
    %v2801 = vmul.f32 %v2773, %v2800
    %v2802 = vadd.f32 %v2795, %v2801
    %v2803 = vmul.f32 %v2506, %v2511
    %v2804 = vmul.f32 %v2506, %v2517
    %v2805 = vmul.f32 %v2506, %v2523
    %v2806 = vmul.f32 %v2506, %v2529
    %v2808 = vsel %vm126, %v2803, 0
    %v2811 = vsel %vm126, %v2804, 0
    %v2814 = vsel %vm126, %v2805, 0
    %v2817 = vsel %vm126, %v2806, 0
    %v2820 = vsel %vm126, %v2506, 0
    %2822 = vmatprep.subr.mxu0 0.0
    %2823 = vmatpush1.xpose.msra.mxu0 %v2820
    %2824 = vmatprep.subr.mxu0 0.0
    %2825 = vmatpush1.xpose.msra.mxu0 0.0
    %2826 = vmatprep.subr.mxu0 0.0
    %2827 = vmatpush1.xpose.msra.mxu0 0.0
    %2828 = vmatprep.subr.mxu0 0.0
    %2829 = vmatpush1.xpose.msra.mxu0 0.0
    %2830 = vmatprep.subr.mxu0 0.0
    %2831 = vmatpush1.xpose.msra.mxu0 0.0
    %2832 = vmatprep.subr.mxu0 0.0
    %2833 = vmatpush1.xpose.msra.mxu0 0.0
    %2834 = vmatprep.subr.mxu0 0.0
    %2835 = vmatpush1.xpose.msra.mxu0 0.0
    %2836 = vmatprep.subr.mxu0 0.0
    %2837 = vmatpush1.xpose.msra.mxu0 0.0
    %2838 = vmatprep.subr.mxu0 0.0
    %2839 = vmatpush1.xpose.msra.mxu0 0.0
    %2840 = vmatprep.subr.mxu0 0.0
    %2841 = vmatpush1.xpose.msra.mxu0 0.0
    %2842 = vmatprep.subr.mxu0 0.0
    %2843 = vmatpush1.xpose.msra.mxu0 0.0
    %2844 = vmatprep.subr.mxu0 0.0
    %2845 = vmatpush1.xpose.msra.mxu0 0.0
    %2846 = vmatprep.subr.mxu0 0.0
    %2847 = vmatpush1.xpose.msra.mxu0 0.0
    %2848 = vmatprep.subr.mxu0 0.0
    %2849 = vmatpush1.xpose.msra.mxu0 0.0
    %2850 = vmatprep.subr.mxu0 0.0
    %2851 = vmatpush1.xpose.msra.mxu0 0.0
    %2852 = vmatprep.subr.mxu0 0.0
    %2853 = vmatpush1.xpose.msra.mxu0 0.0
    %2854 = vmatprep.subr.mxu0 0.0
    %2855 = vmatpush1.xpose.msra.mxu0 0.0
    %2856 = vmatprep.subr.mxu0 0.0
    %2857 = vmatpush1.xpose.msra.mxu0 0.0
    %2858 = vmatprep.subr.mxu0 0.0
    %2859 = vmatpush1.xpose.msra.mxu0 0.0
    %2860 = vmatprep.subr.mxu0 0.0
    %2861 = vmatpush1.xpose.msra.mxu0 0.0
    %2862 = vmatprep.subr.mxu0 0.0
    %2863 = vmatpush1.xpose.msra.mxu0 0.0
    %2864 = vmatprep.subr.mxu0 0.0
    %2865 = vmatpush1.xpose.msra.mxu0 0.0
    %2866 = vmatprep.subr.mxu0 0.0
    %2867 = vmatpush1.xpose.msra.mxu0 0.0
    %2868 = vmatprep.subr.mxu0 0.0
    %2869 = vmatpush1.xpose.msra.mxu0 0.0
    %2870 = vmatprep.subr.mxu0 0.0
    %2871 = vmatpush1.xpose.msra.mxu0 0.0
    %2872 = vmatprep.subr.mxu0 0.0
    %2873 = vmatpush1.xpose.msra.mxu0 0.0
    %2874 = vmatprep.subr.mxu0 0.0
    %2875 = vmatpush1.xpose.msra.mxu0 0.0
    %2876 = vmatprep.subr.mxu0 0.0
    %2877 = vmatpush1.xpose.msra.mxu0 0.0
    %2878 = vmatprep.subr.mxu0 0.0
    %2879 = vmatpush1.xpose.msra.mxu0 0.0
    %2880 = vmatprep.subr.mxu0 0.0
    %2881 = vmatpush1.xpose.msra.mxu0 0.0
    %2882 = vmatprep.subr.mxu0 0.0
    %2883 = vmatpush1.xpose.msra.mxu0 0.0
    %2884 = vmatprep.subr.mxu0 0.0
    %2885 = vmatpush1.xpose.msra.mxu0 0.0
    %2886 = vmatprep.mubr.f32.mxu0 0.0
    %2887 = vmatmul.mubr.f32.gmra.mrb[0].mxu0 %v2808
    %v2888 = vpop.f32.mrb[0].mxu0
    %v2889 = vadd.f32 0.0, %v2888
    %v2890 = vpop.f32.mrb[0].mxu0
    %2891 = vmatprep.mubr.f32.mxu0 0.0
    %2892 = vmatmul.mubr.f32.gmra.mrb[0].mxu0 %v2811
    %v2893 = vpop.f32.mrb[0].mxu0
    %v2894 = vadd.f32 0.0, %v2893
    %v2895 = vpop.f32.mrb[0].mxu0
    %2896 = vmatprep.mubr.f32.mxu0 0.0
    %2897 = vmatmul.mubr.f32.gmra.mrb[0].mxu0 %v2814
    %v2898 = vpop.f32.mrb[0].mxu0
    %v2899 = vadd.f32 0.0, %v2898
    %v2900 = vpop.f32.mrb[0].mxu0
    %2901 = vmatprep.mubr.f32.mxu0 0.0
    %2902 = vmatmul.mubr.f32.gmra.mrb[0].mxu0 %v2817
    %v2903 = vpop.f32.mrb[0].mxu0
    %v2904 = vadd.f32 0.0, %v2903
    %v2905 = vpop.f32.mrb[0].mxu0
    %2906 = vdwg.mxu0
    %v2907 = vmul.f32 %v2889, 0.35355338
    %v2908 = vmul.f32 %v2894, 0.35355338
    %v2909 = vmul.f32 %v2899, 0.35355338
    %v2910 = vmul.f32 %v2904, 0.35355338
    %v2911 = vsel %vm296, %v2907, -inf
    %2912 = vmax.xlane.f32.xlu0 %v2911
    %v2913 = vpop.xlane.xlu0 %2912
    %v2914 = vsel %vm296, %v2908, -inf
    %2915 = vmax.xlane.f32.xlu0 %v2914
    %v2916 = vpop.xlane.xlu0 %2915
    %v2917 = vsel %vm296, %v2909, -inf
    %2918 = vmax.xlane.f32.xlu0 %v2917
    %v2919 = vpop.xlane.xlu0 %2918
    %v2920 = vsel %vm296, %v2910, -inf
    %2921 = vmax.xlane.f32.xlu0 %v2920
    %v2922 = vpop.xlane.xlu0 %2921
    %v2923 = vsub.f32 %v2907, %v2913
    %v2924 = vsub.f32 %v2908, %v2916
    %v2925 = vsub.f32 %v2909, %v2919
    %v2926 = vsub.f32 %v2910, %v2922
    %v2927 = vmul.f32 %v2923, 1.442695
    %v2928 = vpow.pop %v2927
    %v2929 = vmul.f32 %v2924, 1.442695
    %v2930 = vpow.pop %v2929
    %v2931 = vmul.f32 %v2925, 1.442695
    %v2932 = vpow.pop %v2931
    %v2933 = vmul.f32 %v2926, 1.442695
    %v2934 = vpow.pop %v2933
    %v2935 = vsel %vm296, %v2928, 0.0
    %2936 = vadd.xlane.f32.xlu0 %v2935
    %v2937 = vpop.xlane.xlu0 %2936
    %v2938 = vsel %vm296, %v2930, 0.0
    %2939 = vadd.xlane.f32.xlu0 %v2938
    %v2940 = vpop.xlane.xlu0 %2939
    %v2941 = vsel %vm296, %v2932, 0.0
    %2942 = vadd.xlane.f32.xlu0 %v2941
    %v2943 = vpop.xlane.xlu0 %2942
    %v2944 = vsel %vm296, %v2934, 0.0
    %2945 = vadd.xlane.f32.xlu0 %v2944
    %v2946 = vpop.xlane.xlu0 %2945
    %v2947 = vrcp.pop %v2937
    %v2948 = vrcp.pop %v2940
    %v2949 = vrcp.pop %v2943
    %v2950 = vrcp.pop %v2946
    %v2951 = vmul.f32 %v2928, %v2947
    %v2952 = vmul.f32 %v2930, %v2948
    %v2953 = vmul.f32 %v2932, %v2949
    %v2954 = vmul.f32 %v2934, %v2950
    %v2956 = vsel %vm296, %v2951, 0
    %v2959 = vsel %vm296, %v2952, 0
    %v2962 = vsel %vm296, %v2953, 0
    %v2965 = vsel %vm296, %v2954, 0
    %2967 = vmatprep.subr.mxu0 0.0
    %2968 = vmatpush1.msra.mxu0 %v2506
    %2969 = vmatprep.subr.mxu0 0.0
    %2970 = vmatpush1.msra.mxu0 0.0
    %2971 = vmatprep.subr.mxu0 0.0
    %2972 = vmatpush1.msra.mxu0 0.0
    %2973 = vmatprep.subr.mxu0 0.0
    %2974 = vmatpush1.msra.mxu0 0.0
    %2975 = vmatprep.subr.mxu0 0.0
    %2976 = vmatpush1.msra.mxu0 0.0
    %2977 = vmatprep.subr.mxu0 0.0
    %2978 = vmatpush1.msra.mxu0 0.0
    %2979 = vmatprep.subr.mxu0 0.0
    %2980 = vmatpush1.msra.mxu0 0.0
    %2981 = vmatprep.subr.mxu0 0.0
    %2982 = vmatpush1.msra.mxu0 0.0
    %2983 = vmatprep.subr.mxu0 0.0
    %2984 = vmatpush1.msra.mxu0 0.0
    %2985 = vmatprep.subr.mxu0 0.0
    %2986 = vmatpush1.msra.mxu0 0.0
    %2987 = vmatprep.subr.mxu0 0.0
    %2988 = vmatpush1.msra.mxu0 0.0
    %2989 = vmatprep.subr.mxu0 0.0
    %2990 = vmatpush1.msra.mxu0 0.0
    %2991 = vmatprep.subr.mxu0 0.0
    %2992 = vmatpush1.msra.mxu0 0.0
    %2993 = vmatprep.subr.mxu0 0.0
    %2994 = vmatpush1.msra.mxu0 0.0
    %2995 = vmatprep.subr.mxu0 0.0
    %2996 = vmatpush1.msra.mxu0 0.0
    %2997 = vmatprep.subr.mxu0 0.0
    %2998 = vmatpush1.msra.mxu0 0.0
    %2999 = vmatprep.subr.mxu0 0.0
    %3000 = vmatpush1.msra.mxu0 0.0
    %3001 = vmatprep.subr.mxu0 0.0
    %3002 = vmatpush1.msra.mxu0 0.0
    %3003 = vmatprep.subr.mxu0 0.0
    %3004 = vmatpush1.msra.mxu0 0.0
    %3005 = vmatprep.subr.mxu0 0.0
    %3006 = vmatpush1.msra.mxu0 0.0
    %3007 = vmatprep.subr.mxu0 0.0
    %3008 = vmatpush1.msra.mxu0 0.0
    %3009 = vmatprep.subr.mxu0 0.0
    %3010 = vmatpush1.msra.mxu0 0.0
    %3011 = vmatprep.subr.mxu0 0.0
    %3012 = vmatpush1.msra.mxu0 0.0
    %3013 = vmatprep.subr.mxu0 0.0
    %3014 = vmatpush1.msra.mxu0 0.0
    %3015 = vmatprep.subr.mxu0 0.0
    %3016 = vmatpush1.msra.mxu0 0.0
    %3017 = vmatprep.subr.mxu0 0.0
    %3018 = vmatpush1.msra.mxu0 0.0
    %3019 = vmatprep.subr.mxu0 0.0
    %3020 = vmatpush1.msra.mxu0 0.0
    %3021 = vmatprep.subr.mxu0 0.0
    %3022 = vmatpush1.msra.mxu0 0.0
    %3023 = vmatprep.subr.mxu0 0.0
    %3024 = vmatpush1.msra.mxu0 0.0
    %3025 = vmatprep.subr.mxu0 0.0
    %3026 = vmatpush1.msra.mxu0 0.0
    %3027 = vmatprep.subr.mxu0 0.0
    %3028 = vmatpush1.msra.mxu0 0.0
    %3029 = vmatprep.subr.mxu0 0.0
    %3030 = vmatpush1.msra.mxu0 0.0
    %3031 = vmatprep.mubr.f32.mxu0 0.0
    %3032 = vmatmul.mubr.f32.gmra.mrb[0].mxu0 %v2956
    %v3033 = vpop.f32.mrb[0].mxu0
    %v3034 = vadd.f32 0.0, %v3033
    %v3035 = vpop.f32.mrb[0].mxu0
    %3036 = vmatprep.mubr.f32.mxu0 0.0
    %3037 = vmatmul.mubr.f32.gmra.mrb[0].mxu0 %v2959
    %v3038 = vpop.f32.mrb[0].mxu0
    %v3039 = vadd.f32 0.0, %v3038
    %v3040 = vpop.f32.mrb[0].mxu0
    %3041 = vmatprep.mubr.f32.mxu0 0.0
    %3042 = vmatmul.mubr.f32.gmra.mrb[0].mxu0 %v2962
    %v3043 = vpop.f32.mrb[0].mxu0
    %v3044 = vadd.f32 0.0, %v3043
    %v3045 = vpop.f32.mrb[0].mxu0
    %3046 = vmatprep.mubr.f32.mxu0 0.0
    %3047 = vmatmul.mubr.f32.gmra.mrb[0].mxu0 %v2965
    %v3048 = vpop.f32.mrb[0].mxu0
    %v3049 = vadd.f32 0.0, %v3048
    %v3050 = vpop.f32.mrb[0].mxu0
    %3051 = vdwg.mxu0
    %v3052 = vmul.f32 %v3034, %v2780
    %v3053 = vmul.f32 %v3039, %v2786
    %v3054 = vadd.f32 %v3052, %v3053
    %v3055 = vmul.f32 %v3044, %v2793
    %v3056 = vadd.f32 %v3054, %v3055
    %v3057 = vmul.f32 %v3049, %v2800
    %v3058 = vadd.f32 %v3056, %v3057
    %s3059 = scalar_lea.vmem [#allocation10], 96
    %v3060 = vld [vmem:[%s3059] sm:$0xff]
    %v3061 = vld [vmem:[%s3059 + $0x8] sm:$0xff]
    %v3062 = vld [vmem:[%s3059 + $0x10] sm:$0xff]
    %v3063 = vld [vmem:[%s3059 + $0x18] sm:$0xff]
    %3064 = vmatprep.subr.mxu0 0.0
    %3065 = vmatpush1.msra.mxu0 %v3060
    %3066 = vmatprep.subr.mxu0 0.0
    %3067 = vmatpush1.msra.mxu0 %v3061
    %3068 = vmatprep.subr.mxu0 0.0
    %3069 = vmatpush1.msra.mxu0 %v3062
    %3070 = vmatprep.subr.mxu0 0.0
    %3071 = vmatpush1.msra.mxu0 %v3063
    %3072 = vmatprep.subr.mxu0 0.0
    %3073 = vmatpush1.msra.mxu0 0.0
    %3074 = vmatprep.subr.mxu0 0.0
    %3075 = vmatpush1.msra.mxu0 0.0
    %3076 = vmatprep.subr.mxu0 0.0
    %3077 = vmatpush1.msra.mxu0 0.0
    %3078 = vmatprep.subr.mxu0 0.0
    %3079 = vmatpush1.msra.mxu0 0.0
    %3080 = vmatprep.subr.mxu0 0.0
    %3081 = vmatpush1.msra.mxu0 0.0
    %3082 = vmatprep.subr.mxu0 0.0
    %3083 = vmatpush1.msra.mxu0 0.0
    %3084 = vmatprep.subr.mxu0 0.0
    %3085 = vmatpush1.msra.mxu0 0.0
    %3086 = vmatprep.subr.mxu0 0.0
    %3087 = vmatpush1.msra.mxu0 0.0
    %3088 = vmatprep.subr.mxu0 0.0
    %3089 = vmatpush1.msra.mxu0 0.0
    %3090 = vmatprep.subr.mxu0 0.0
    %3091 = vmatpush1.msra.mxu0 0.0
    %3092 = vmatprep.subr.mxu0 0.0
    %3093 = vmatpush1.msra.mxu0 0.0
    %3094 = vmatprep.subr.mxu0 0.0
    %3095 = vmatpush1.msra.mxu0 0.0
    %3096 = vmatprep.subr.mxu0 0.0
    %3097 = vmatpush1.msra.mxu0 0.0
    %3098 = vmatprep.subr.mxu0 0.0
    %3099 = vmatpush1.msra.mxu0 0.0
    %3100 = vmatprep.subr.mxu0 0.0
    %3101 = vmatpush1.msra.mxu0 0.0
    %3102 = vmatprep.subr.mxu0 0.0
    %3103 = vmatpush1.msra.mxu0 0.0
    %3104 = vmatprep.subr.mxu0 0.0
    %3105 = vmatpush1.msra.mxu0 0.0
    %3106 = vmatprep.subr.mxu0 0.0
    %3107 = vmatpush1.msra.mxu0 0.0
    %3108 = vmatprep.subr.mxu0 0.0
    %3109 = vmatpush1.msra.mxu0 0.0
    %3110 = vmatprep.subr.mxu0 0.0
    %3111 = vmatpush1.msra.mxu0 0.0
    %3112 = vmatprep.subr.mxu0 0.0
    %3113 = vmatpush1.msra.mxu0 0.0
    %3114 = vmatprep.subr.mxu0 0.0
    %3115 = vmatpush1.msra.mxu0 0.0
    %3116 = vmatprep.subr.mxu0 0.0
    %3117 = vmatpush1.msra.mxu0 0.0
    %3118 = vmatprep.subr.mxu0 0.0
    %3119 = vmatpush1.msra.mxu0 0.0
    %3120 = vmatprep.subr.mxu0 0.0
    %3121 = vmatpush1.msra.mxu0 0.0
    %3122 = vmatprep.subr.mxu0 0.0
    %3123 = vmatpush1.msra.mxu0 0.0
    %3124 = vmatprep.subr.mxu0 0.0
    %3125 = vmatpush1.msra.mxu0 0.0
    %3126 = vmatprep.subr.mxu0 0.0
    %3127 = vmatpush1.msra.mxu0 0.0
    %3128 = vmatprep.mubr.f32.mxu0 0.0
    %3129 = vmatmul.mubr.f32.gmra.mrb[0].mxu0 %v2544
    %v3130 = vpop.f32.mrb[0].mxu0
    %v3131 = vadd.f32 0.0, %v3130
    %v3132 = vpop.f32.mrb[0].mxu0
    %3133 = vmatprep.mubr.f32.mxu0 0.0
    %3134 = vmatmul.mubr.f32.gmra.mrb[0].mxu0 %v2820
    %v3135 = vpop.f32.mrb[0].mxu0
    %v3136 = vadd.f32 0.0, %v3135
    %v3137 = vpop.f32.mrb[0].mxu0
    %3138 = vdwg.mxu0
    %v3139 = vmul.f32 %v3131, 0.5
    %v3140 = vmul.f32 %v3136, 0.5
    %v3141 = vmul.f32 %v3131, 0.044715
    %v3142 = vmul.f32 %v3136, 0.044715
    %v3143 = vmul.f32 %v3141, %v3131
    %v3144 = vmul.f32 %v3142, %v3136
    %v3145 = vmul.f32 %v3143, %v3131
    %v3146 = vmul.f32 %v3144, %v3136
    %v3147 = vadd.f32 %v3131, %v3145
    %v3148 = vadd.f32 %v3136, %v3146
    %v3149 = vmul.f32 %v3147, 0.7978846
    %v3150 = vmul.f32 %v3148, 0.7978846
    %v3151 = vtanh.pop %v3149
    %v3152 = vtanh.pop %v3150
    %v3153 = vadd.f32 %v3151, 1.0
    %v3154 = vadd.f32 %v3152, 1.0
    %v3155 = vmul.f32 %v3139, %v3153
    %v3156 = vmul.f32 %v3140, %v3154
    %s3157 = scalar_lea.vmem [#allocation11], 96
    %v3158 = vld [vmem:[%s3157] sm:$0xff]
    %v3159 = vld [vmem:[%s3157 + $0x8] sm:$0xff]
    %v3160 = vld [vmem:[%s3157 + $0x10] sm:$0xff]
    %v3161 = vld [vmem:[%s3157 + $0x18] sm:$0xff]
    %v3163 = vsel %vm126, %v3155, 0
    %v3166 = vsel %vm126, %v3156, 0
    %3168 = vmatprep.subr.mxu0 0.0
    %3169 = vmatpush1.msra.mxu0 %v3158
    %3170 = vmatprep.subr.mxu0 0.0
    %3171 = vmatpush1.msra.mxu0 %v3159
    %3172 = vmatprep.subr.mxu0 0.0
    %3173 = vmatpush1.msra.mxu0 %v3160
    %3174 = vmatprep.subr.mxu0 0.0
    %3175 = vmatpush1.msra.mxu0 %v3161
    %3176 = vmatprep.subr.mxu0 0.0
    %3177 = vmatpush1.msra.mxu0 0.0
    %3178 = vmatprep.subr.mxu0 0.0
    %3179 = vmatpush1.msra.mxu0 0.0
    %3180 = vmatprep.subr.mxu0 0.0
    %3181 = vmatpush1.msra.mxu0 0.0
    %3182 = vmatprep.subr.mxu0 0.0
    %3183 = vmatpush1.msra.mxu0 0.0
    %3184 = vmatprep.subr.mxu0 0.0
    %3185 = vmatpush1.msra.mxu0 0.0
    %3186 = vmatprep.subr.mxu0 0.0
    %3187 = vmatpush1.msra.mxu0 0.0
    %3188 = vmatprep.subr.mxu0 0.0
    %3189 = vmatpush1.msra.mxu0 0.0
    %3190 = vmatprep.subr.mxu0 0.0
    %3191 = vmatpush1.msra.mxu0 0.0
    %3192 = vmatprep.subr.mxu0 0.0
    %3193 = vmatpush1.msra.mxu0 0.0
    %3194 = vmatprep.subr.mxu0 0.0
    %3195 = vmatpush1.msra.mxu0 0.0
    %3196 = vmatprep.subr.mxu0 0.0
    %3197 = vmatpush1.msra.mxu0 0.0
    %3198 = vmatprep.subr.mxu0 0.0
    %3199 = vmatpush1.msra.mxu0 0.0
    %3200 = vmatprep.subr.mxu0 0.0
    %3201 = vmatpush1.msra.mxu0 0.0
    %3202 = vmatprep.subr.mxu0 0.0
    %3203 = vmatpush1.msra.mxu0 0.0
    %3204 = vmatprep.subr.mxu0 0.0
    %3205 = vmatpush1.msra.mxu0 0.0
    %3206 = vmatprep.subr.mxu0 0.0
    %3207 = vmatpush1.msra.mxu0 0.0
    %3208 = vmatprep.subr.mxu0 0.0
    %3209 = vmatpush1.msra.mxu0 0.0
    %3210 = vmatprep.subr.mxu0 0.0
    %3211 = vmatpush1.msra.mxu0 0.0
    %3212 = vmatprep.subr.mxu0 0.0
    %3213 = vmatpush1.msra.mxu0 0.0
    %3214 = vmatprep.subr.mxu0 0.0
    %3215 = vmatpush1.msra.mxu0 0.0
    %3216 = vmatprep.subr.mxu0 0.0
    %3217 = vmatpush1.msra.mxu0 0.0
    %3218 = vmatprep.subr.mxu0 0.0
    %3219 = vmatpush1.msra.mxu0 0.0
    %3220 = vmatprep.subr.mxu0 0.0
    %3221 = vmatpush1.msra.mxu0 0.0
    %3222 = vmatprep.subr.mxu0 0.0
    %3223 = vmatpush1.msra.mxu0 0.0
    %3224 = vmatprep.subr.mxu0 0.0
    %3225 = vmatpush1.msra.mxu0 0.0
    %3226 = vmatprep.subr.mxu0 0.0
    %3227 = vmatpush1.msra.mxu0 0.0
    %3228 = vmatprep.subr.mxu0 0.0
    %3229 = vmatpush1.msra.mxu0 0.0
    %3230 = vmatprep.subr.mxu0 0.0
    %3231 = vmatpush1.msra.mxu0 0.0
    %3232 = vmatprep.mubr.f32.mxu0 0.0
    %3233 = vmatmul.mubr.f32.gmra.mrb[0].mxu0 %v3163
    %v3234 = vpop.f32.mrb[0].mxu0
    %v3235 = vadd.f32 0.0, %v3234
    %v3236 = vpop.f32.mrb[0].mxu0
    %3237 = vmatprep.mubr.f32.mxu0 0.0
    %3238 = vmatmul.mubr.f32.gmra.mrb[0].mxu0 %v3166
    %v3239 = vpop.f32.mrb[0].mxu0
    %v3240 = vadd.f32 0.0, %v3239
    %v3241 = vpop.f32.mrb[0].mxu0
    %3242 = vdwg.mxu0
    %v3243 = vadd.f32 %v2465, %v2802
    %v3244 = vadd.f32 %v2466, %v3058
    %v3245 = vadd.f32 %v3243, %v3235
    %v3246 = vadd.f32 %v3244, %v3240
    %v3247 = vld [vmem:[#allocation13] sm:$0xff]
    %v3248 = vld [vmem:[#allocation13 + $0x8] sm:$0xff]
    %v3249 = vld [vmem:[#allocation13 + $0x10] sm:$0xff]
    %v3250 = vld [vmem:[#allocation13 + $0x18] sm:$0xff]
    %v3252 = vsel %vm126, %v3245, 0
    %v3255 = vsel %vm126, %v3246, 0
    %3257 = vmatprep.subr.mxu0 0.0
    %3258 = vmatpush1.msra.mxu0 %v3247
    %3259 = vmatprep.subr.mxu0 0.0
    %3260 = vmatpush1.msra.mxu0 %v3248
    %3261 = vmatprep.subr.mxu0 0.0
    %3262 = vmatpush1.msra.mxu0 %v3249
    %3263 = vmatprep.subr.mxu0 0.0
    %3264 = vmatpush1.msra.mxu0 %v3250
    %3265 = vmatprep.subr.mxu0 0.0
    %3266 = vmatpush1.msra.mxu0 0.0
    %3267 = vmatprep.subr.mxu0 0.0
    %3268 = vmatpush1.msra.mxu0 0.0
    %3269 = vmatprep.subr.mxu0 0.0
    %3270 = vmatpush1.msra.mxu0 0.0
    %3271 = vmatprep.subr.mxu0 0.0
    %3272 = vmatpush1.msra.mxu0 0.0
    %3273 = vmatprep.subr.mxu0 0.0
    %3274 = vmatpush1.msra.mxu0 0.0
    %3275 = vmatprep.subr.mxu0 0.0
    %3276 = vmatpush1.msra.mxu0 0.0
    %3277 = vmatprep.subr.mxu0 0.0
    %3278 = vmatpush1.msra.mxu0 0.0
    %3279 = vmatprep.subr.mxu0 0.0
    %3280 = vmatpush1.msra.mxu0 0.0
    %3281 = vmatprep.subr.mxu0 0.0
    %3282 = vmatpush1.msra.mxu0 0.0
    %3283 = vmatprep.subr.mxu0 0.0
    %3284 = vmatpush1.msra.mxu0 0.0
    %3285 = vmatprep.subr.mxu0 0.0
    %3286 = vmatpush1.msra.mxu0 0.0
    %3287 = vmatprep.subr.mxu0 0.0
    %3288 = vmatpush1.msra.mxu0 0.0
    %3289 = vmatprep.subr.mxu0 0.0
    %3290 = vmatpush1.msra.mxu0 0.0
    %3291 = vmatprep.subr.mxu0 0.0
    %3292 = vmatpush1.msra.mxu0 0.0
    %3293 = vmatprep.subr.mxu0 0.0
    %3294 = vmatpush1.msra.mxu0 0.0
    %3295 = vmatprep.subr.mxu0 0.0
    %3296 = vmatpush1.msra.mxu0 0.0
    %3297 = vmatprep.subr.mxu0 0.0
    %3298 = vmatpush1.msra.mxu0 0.0
    %3299 = vmatprep.subr.mxu0 0.0
    %3300 = vmatpush1.msra.mxu0 0.0
    %3301 = vmatprep.subr.mxu0 0.0
    %3302 = vmatpush1.msra.mxu0 0.0
    %3303 = vmatprep.subr.mxu0 0.0
    %3304 = vmatpush1.msra.mxu0 0.0
    %3305 = vmatprep.subr.mxu0 0.0
    %3306 = vmatpush1.msra.mxu0 0.0
    %3307 = vmatprep.subr.mxu0 0.0
    %3308 = vmatpush1.msra.mxu0 0.0
    %3309 = vmatprep.subr.mxu0 0.0
    %3310 = vmatpush1.msra.mxu0 0.0
    %3311 = vmatprep.subr.mxu0 0.0
    %3312 = vmatpush1.msra.mxu0 0.0
    %3313 = vmatprep.subr.mxu0 0.0
    %3314 = vmatpush1.msra.mxu0 0.0
    %3315 = vmatprep.subr.mxu0 0.0
    %3316 = vmatpush1.msra.mxu0 0.0
    %3317 = vmatprep.subr.mxu0 0.0
    %3318 = vmatpush1.msra.mxu0 0.0
    %3319 = vmatprep.subr.mxu0 0.0
    %3320 = vmatpush1.msra.mxu0 0.0
    %3321 = vmatprep.mubr.f32.mxu0 0.0
    %3322 = vmatmul.mubr.f32.gmra.mrb[0].mxu0 %v3252
    %v3323 = vpop.f32.mrb[0].mxu0
    %v3324 = vadd.f32 0.0, %v3323
    %v3325 = vpop.f32.mrb[0].mxu0
    %3326 = vmatprep.mubr.f32.mxu0 0.0
    %3327 = vmatmul.mubr.f32.gmra.mrb[0].mxu0 %v3255
    %v3328 = vpop.f32.mrb[0].mxu0
    %v3329 = vadd.f32 0.0, %v3328
    %v3330 = vpop.f32.mrb[0].mxu0
    %3331 = vdwg.mxu0
    %3332 = vst [vmem:[#allocation14] sm:$0xff] %v3324
    %s3333 = scalar_lea.vmem [#allocation14], 8
    %3334 = vst [vmem:[%s3333] sm:$0xff] %v3329
    // Predicated region
    $region62: #{tpu_custom_call.1} parent=1 // pred_check
      _
    $region63: #{tpu_custom_call.1} parent=1 // pred_check_branch
      %3336 = sbr.rel (0) target = $region65
    $region64: #{tpu_custom_call.1} parent=1 // pred_region
      %s3338 = ssub.s32 256, 256
      %3339 = vsyncadd [#allocation4], %s3338
      %s3340 = sshll.u32 [#allocation14], 4
      %s3341 = int_to_ptr.vmem [resolvable:$true] %s3340
      %3346 = dma.vmem_to_hbm [thread:$0]  %s3341, 256, %s8, [#allocation4], 128, 128, 8
    $region65: #{tpu_custom_call.1} parent=1 // pred_fallthru
      _
    // Predicated region
    $region66: #{tpu_custom_call.1} parent=1 // pred_check
      _
    $region67: #{tpu_custom_call.1} parent=1 // pred_check_branch
      %3348 = sbr.rel (0) target = $region69
    $region68: #{tpu_custom_call.1} parent=1 // pred_region
      %3349 = dma.done [#allocation4], 256
    $region69: #{tpu_custom_call.1} parent=1 // pred_fallthru
      _
    %3350 = vsyncpa [#allocation3], 1
    %3351 = vsyncpa [#allocation6], 1
    %3352 = vsyncpa [#allocation9], 1
    %3353 = vsyncpa [#allocation12], 1
    %3354 = vsyncpa [#allocation4], 1

</llo_original>
